<compile_context>
chip_gen: v7x
topology: tpu7x:2x2x1
jax: 0.10.0
libtpu: 0.0.40
codegen_flags: <defaults>
</compile_context>

<pallas_src>
import functools
import math

import jax
import jax.numpy as jnp
import numpy as np
from jax import lax
from jax.experimental import pallas as pl
from jax.experimental.pallas import tpu as pltpu

HIGHEST = jax.lax.Precision.HIGHEST


# -----------------------------------------------------------------------------
# Fused attention kernel: QKV projection + rotary + masked softmax attn + Wo.
# Single grid step; all rows (B*S) processed together.
# -----------------------------------------------------------------------------
def attn_kernel(x_ref, wqkv_ref, wo_ref, cos_ref, sin_ref, o_ref, *,
                n_heads, head_dim, seq_len):
    N, D = x_ref.shape
    H = n_heads
    hd2 = head_dim // 2
    D2 = D // 2
    B = N // seq_len

    x = x_ref[...].astype(jnp.bfloat16)

    # Fused QKV projection: one (N, D) @ (D, 3D) MXU pass, lane-dense output.
    qkv = jnp.dot(x, wqkv_ref[...], preferred_element_type=jnp.float32)  # f32
    q = qkv[:, :D]              # already scaled by 1/sqrt(head_dim) (in Wq)
    k = qkv[:, D:2 * D]
    v = qkv[:, 2 * D:]

    # RoPE in the permuted [all-real | all-imag] layout: full-lane roll by D/2
    # (XLU) + two VPU multiply-adds. cos/sin are pre-tiled to (N, D); the sign
    # of the rotation is folded into sin.
    cos = cos_ref[...]
    sin = sin_ref[...]

    def rope(t):
        return t * cos + pltpu.roll(t, shift=D2, axis=1) * sin

    qr = rope(q)
    kr = rope(k)

    # View as 2H pseudo-heads of size head_dim/2 (real head h <-> pseudo heads
    # h and H+h); go head-major exactly once, then plain batched matmuls.
    def head_major(t):
        return jnp.swapaxes(t.reshape(N, 2 * H, hd2), 0, 1)     # (2H, N, hd2)

    q8 = head_major(qr).astype(jnp.bfloat16)
    k8 = head_major(kr).astype(jnp.bfloat16)
    v8 = head_major(v).astype(jnp.bfloat16)

    s8 = jnp.einsum('pqd,pkd->pqk', q8, k8,
                    preferred_element_type=jnp.float32)         # (2H, N, N)
    scores = s8[:H] + s8[H:]                                    # (H, N, N)

    # Block-diagonal causal mask generated in-kernel (batch folded into rows).
    row = lax.broadcasted_iota(jnp.int32, (N, N), 0)
    col = lax.broadcasted_iota(jnp.int32, (N, N), 1)
    bq = lax.broadcasted_iota(jnp.int32, (B, seq_len, N), 0).reshape(N, N)
    bk = lax.broadcasted_iota(jnp.int32, (N, B, seq_len), 1).reshape(N, N)
    valid = jnp.logical_and(bq == bk, col <= row)
    scores = jnp.where(valid[None, :, :], scores, jnp.float32(-1e30))

    # Explicit softmax; reciprocal goes to the EUP slot.
    m = jnp.max(scores, axis=-1, keepdims=True)
    p = jnp.exp(scores - m)
    denom = jnp.sum(p, axis=-1, keepdims=True)
    probs = p * pl.reciprocal(denom, approx=True)               # (H, N, N)

    probs2 = jnp.concatenate([probs, probs], axis=0).astype(jnp.bfloat16)
    ctx8 = jnp.einsum('pqk,pkd->pqd', probs2, v8,
                      preferred_element_type=jnp.float32)       # (2H, N, hd2)
    ctx = jnp.swapaxes(ctx8, 0, 1).reshape(N, D)                # permuted layout

    out = jnp.dot(ctx.astype(jnp.bfloat16), wo_ref[...],
                  preferred_element_type=jnp.float32)           # (N, D)
    o_ref[...] = out.astype(o_ref.dtype)


def attention_forward(x, wqT, wkT, wvT, woT, cos, sin, *, n_heads):
    """x: (B, S, D) f32. wqT/wkT/wvT/woT: (D, D) transposed weights (y = x@W^T).
    cos/sin: (S, head_dim//2) rotary tables (as in precompute_freqs_cis).
    Matches Attention.forward with use_cache=False, start_pos=0, dropout=0."""
    B, S, D = x.shape
    H = n_heads
    hd = D // H
    hd2 = hd // 2
    N = B * S

    # Global column permutation: interleaved (re, im) pairs of every head are
    # split into [all-real | all-imag] halves of the full D-wide feature
    # vector, so RoPE becomes a single lane roll by D//2 inside the kernel.
    # The same permutation is applied to Wv columns and Wo rows, so it cancels
    # exactly in the final output.
    perm = np.empty((D,), dtype=np.int32)
    for h in range(H):
        for j in range(hd2):
            perm[h * hd2 + j] = h * hd + 2 * j              # real parts
            perm[D // 2 + h * hd2 + j] = h * hd + 2 * j + 1  # imag parts
    perm = jnp.asarray(perm)

    scale = 1.0 / math.sqrt(hd)   # folded into Wq (saves a full scores pass)
    wqkv = jnp.concatenate(
        [wqT[:, perm] * scale, wkT[:, perm], wvT[:, perm]],
        axis=1).astype(jnp.bfloat16)                          # (D, 3D) bf16
    wo_p = woT[perm, :].astype(jnp.bfloat16)                  # (D, D)  bf16

    # cos / sin tiled to the permuted (row, feature) layout; rotation sign
    # folded into sin (negative on the real half, positive on the imag half).
    cos_row = jnp.tile(cos, (1, 2 * H))                       # (S, D)
    sin_row = jnp.tile(sin, (1, 2 * H))                       # (S, D)
    sign = jnp.concatenate([-jnp.ones((1, D // 2), jnp.float32),
                            jnp.ones((1, D // 2), jnp.float32)], axis=1)
    cos_full = jnp.tile(cos_row, (B, 1))                      # (B*S, D)
    sin_full = jnp.tile(sin_row * sign, (B, 1))               # (B*S, D)

    x2 = x.reshape(N, D)

    kernel = functools.partial(attn_kernel, n_heads=H, head_dim=hd, seq_len=S)
    out = pl.pallas_call(
        kernel,
        out_shape=jax.ShapeDtypeStruct((N, D), x.dtype),
        grid_spec=pltpu.PrefetchScalarGridSpec(
            num_scalar_prefetch=0,
            grid=(1,),
            in_specs=[
                pl.BlockSpec((N, D), lambda i: (0, 0)),        # x (B*S rows)
                pl.BlockSpec((D, 3 * D), lambda i: (0, 0)),    # fused Wqkv^T
                pl.BlockSpec((D, D), lambda i: (0, 0)),        # Wo^T (perm rows)
                pl.BlockSpec((N, D), lambda i: (0, 0)),        # cos (tiled)
                pl.BlockSpec((N, D), lambda i: (0, 0)),        # signed sin
            ],
            out_specs=pl.BlockSpec((N, D), lambda i: (0, 0)),
        ),
        compiler_params=pltpu.CompilerParams(
            dimension_semantics=("arbitrary",)),
    )(x2, wqkv, wo_p, cos_full, sin_full)
    return out.reshape(B, S, D)


# -----------------------------------------------------------------------------
# Pure-JAX reference mirroring the PyTorch module exactly (interleaved RoPE,
# f32 HIGHEST precision).
# -----------------------------------------------------------------------------
def reference_forward(x, wqT, wkT, wvT, woT, cos, sin, mask, *, n_heads):
    B, S, D = x.shape
    hd = D // n_heads
    xq = (x @ wqT).reshape(B, S, n_heads, hd)
    xk = (x @ wkT).reshape(B, S, n_heads, hd)
    xv = (x @ wvT).reshape(B, S, n_heads, hd)

    def rot(t):  # interleaved pairs, like torch.view_as_complex
        tr = t.reshape(B, S, n_heads, hd // 2, 2)
        te, to = tr[..., 0], tr[..., 1]
        c = cos[None, :, None, :]
        s = sin[None, :, None, :]
        oe = te * c - to * s
        oo = te * s + to * c
        return jnp.stack([oe, oo], axis=-1).reshape(B, S, n_heads, hd)

    xq, xk = rot(xq), rot(xk)
    xq = jnp.transpose(xq, (0, 2, 1, 3))
    xk = jnp.transpose(xk, (0, 2, 1, 3))
    xv = jnp.transpose(xv, (0, 2, 1, 3))
    scores = jnp.einsum('bhqd,bhkd->bhqk', xq, xk,
                        precision=HIGHEST) / math.sqrt(hd)
    scores = scores + mask[None, None, :, :]
    scores = jax.nn.softmax(scores, axis=-1)
    out = jnp.einsum('bhqk,bhkd->bhqd', scores, xv, precision=HIGHEST)
    out = jnp.transpose(out, (0, 2, 1, 3)).reshape(B, S, D)
    return out @ woT


if __name__ == "__main__":
    # ModelArgs-consistent small shapes: dim=128, n_heads=4 -> head_dim=32.
    B, S, D, H = 2, 8, 128, 4
    Hd = D // H

    key = jax.random.PRNGKey(0)
    kx, kq, kk, kv, ko = jax.random.split(key, 5)
    x = jax.random.normal(kx, (B, S, D), jnp.float32)
    # nn.Linear weights (bias=False), stored transposed as (in, out).
    wqT = jax.random.normal(kq, (D, D), jnp.float32) * 0.02
    wkT = jax.random.normal(kk, (D, D), jnp.float32) * 0.02
    wvT = jax.random.normal(kv, (D, D), jnp.float32) * 0.02
    woT = jax.random.normal(ko, (D, D), jnp.float32) * 0.02

    # Rotary tables (same as precompute_freqs_cis, theta=10000).
    freqs = 1.0 / (10000.0 ** (jnp.arange(0, Hd, 2, dtype=jnp.float32) / Hd))
    t = jnp.arange(S, dtype=jnp.float32)
    angles = jnp.outer(t, freqs)                 # (S, Hd//2)
    cos, sin = jnp.cos(angles), jnp.sin(angles)

    out = attention_forward(x, wqT, wkT, wvT, woT, cos, sin, n_heads=H)
    out = jax.block_until_ready(out)

    # Reference path (causal mask, start_pos=0, no cache).
    mask = jnp.where(jnp.arange(S)[None, :] > jnp.arange(S)[:, None],
                     jnp.float32(-1e9), jnp.float32(0.0))
    ref = reference_forward(x, wqT, wkT, wvT, woT, cos, sin, mask, n_heads=H)
    ref = jax.block_until_ready(ref)

    assert out.shape == (B, S, D) and out.dtype == jnp.float32
    # Kernel uses bf16 MXU operands (f32 accumulation); tolerance accounts for
    # that vs. the f32 HIGHEST reference.
    if not np.allclose(np.asarray(out), np.asarray(ref), rtol=1e-2, atol=1e-3):
        err = np.max(np.abs(np.asarray(out) - np.asarray(ref)))
        raise AssertionError(
            f"Pallas attention does not match reference (max abs err {err:.2e})")
    print("KERNEL_OK")
</pallas_src>

<mosaic_0001>
module attributes {stable_mosaic.version = 11 : i64} {
  func.func @attn_kernel(%arg0: i32, %arg1: memref<16x128xf32, #tpu.memory_space<vmem>>, %arg2: memref<128x384xbf16, #tpu.memory_space<vmem>>, %arg3: memref<128x128xbf16, #tpu.memory_space<vmem>>, %arg4: memref<16x128xf32, #tpu.memory_space<vmem>>, %arg5: memref<16x128xf32, #tpu.memory_space<vmem>>, %arg6: memref<16x128xf32, #tpu.memory_space<vmem>>) attributes {dimension_semantics = [#tpu.dimension_semantics<arbitrary>], iteration_bounds = array<i64: 1>, scalar_prefetch = 0 : i64, scratch_operands = 0 : i64, tpu.core_type = #tpu.core_type<tc>, window_params = [{pipeline_mode = #tpu.pipeline_mode<synchronous>, transform_indices = @transform_0, window_bounds = array<i64: 16, 128>}, {pipeline_mode = #tpu.pipeline_mode<synchronous>, transform_indices = @transform_1, window_bounds = array<i64: 128, 384>}, {pipeline_mode = #tpu.pipeline_mode<synchronous>, transform_indices = @transform_2, window_bounds = array<i64: 128, 128>}, {pipeline_mode = #tpu.pipeline_mode<synchronous>, transform_indices = @transform_3, window_bounds = array<i64: 16, 128>}, {pipeline_mode = #tpu.pipeline_mode<synchronous>, transform_indices = @transform_4, window_bounds = array<i64: 16, 128>}, {pipeline_mode = #tpu.pipeline_mode<synchronous>, transform_indices = @transform_5, window_bounds = array<i64: 16, 128>}]} {
    %c0 = arith.constant 0 : index
    %c0_0 = arith.constant 0 : index
    %0 = vector.load %arg1[%c0, %c0_0] : memref<16x128xf32, #tpu.memory_space<vmem>>, vector<16x128xf32>
    %1 = arith.truncf %0 : vector<16x128xf32> to vector<16x128xbf16>
    %c0_1 = arith.constant 0 : index
    %c0_2 = arith.constant 0 : index
    %2 = vector.load %arg2[%c0_1, %c0_2] : memref<128x384xbf16, #tpu.memory_space<vmem>>, vector<128x384xbf16>
    %cst = arith.constant dense<0.000000e+00> : vector<16x384xf32>
    %3 = tpu.matmul %1, %2, %cst {dimension_numbers = #tpu.dot_dimension_numbers<[1], [0], [0], [1], [0, 0, 1, 1], [], []>} : vector<16x128xbf16>, vector<128x384xbf16>, vector<16x384xf32> -> vector<16x384xf32>
    %4 = vector.extract_strided_slice %3 {offsets = [0, 0], sizes = [16, 128], strides = [1, 1]} : vector<16x384xf32> to vector<16x128xf32>
    %5 = vector.extract_strided_slice %3 {offsets = [0, 128], sizes = [16, 128], strides = [1, 1]} : vector<16x384xf32> to vector<16x128xf32>
    %6 = vector.extract_strided_slice %3 {offsets = [0, 256], sizes = [16, 128], strides = [1, 1]} : vector<16x384xf32> to vector<16x128xf32>
    %c0_3 = arith.constant 0 : index
    %c0_4 = arith.constant 0 : index
    %7 = vector.load %arg4[%c0_3, %c0_4] : memref<16x128xf32, #tpu.memory_space<vmem>>, vector<16x128xf32>
    %c0_5 = arith.constant 0 : index
    %c0_6 = arith.constant 0 : index
    %8 = vector.load %arg5[%c0_5, %c0_6] : memref<16x128xf32, #tpu.memory_space<vmem>>, vector<16x128xf32>
    %9 = arith.mulf %4, %7 : vector<16x128xf32>
    %c64_i32 = arith.constant 64 : i32
    %10 = tpu.dynamic_rotate %4 by %c64_i32 dim 1 : vector<16x128xf32>, i32 -> vector<16x128xf32>
    %11 = arith.mulf %10, %8 : vector<16x128xf32>
    %12 = arith.addf %9, %11 : vector<16x128xf32>
    %13 = arith.mulf %5, %7 : vector<16x128xf32>
    %c64_i32_7 = arith.constant 64 : i32
    %14 = tpu.dynamic_rotate %5 by %c64_i32_7 dim 1 : vector<16x128xf32>, i32 -> vector<16x128xf32>
    %15 = arith.mulf %14, %8 : vector<16x128xf32>
    %16 = arith.addf %13, %15 : vector<16x128xf32>
    %17 = vector.shape_cast %12 : vector<16x128xf32> to vector<16x8x16xf32>
    %18 = tpu.transpose %17, [1, 0, 2] : vector<16x8x16xf32> -> vector<8x16x16xf32>
    %19 = arith.truncf %18 : vector<8x16x16xf32> to vector<8x16x16xbf16>
    %20 = vector.shape_cast %16 : vector<16x128xf32> to vector<16x8x16xf32>
    %21 = tpu.transpose %20, [1, 0, 2] : vector<16x8x16xf32> -> vector<8x16x16xf32>
    %22 = arith.truncf %21 : vector<8x16x16xf32> to vector<8x16x16xbf16>
    %23 = vector.shape_cast %6 : vector<16x128xf32> to vector<16x8x16xf32>
    %24 = tpu.transpose %23, [1, 0, 2] : vector<16x8x16xf32> -> vector<8x16x16xf32>
    %25 = arith.truncf %24 : vector<8x16x16xf32> to vector<8x16x16xbf16>
    "tpu.trace_start"() <{level = 10 : i32, message = "pqd,pkd->pqk"}> : () -> ()
    %cst_8 = arith.constant dense<0.000000e+00> : vector<8x16x16xf32>
    %26 = tpu.matmul %19, %22, %cst_8 {dimension_numbers = #tpu.dot_dimension_numbers<[2], [2], [1], [1], [0, 0, 0, 1, 1, 1], [0], [0]>} : vector<8x16x16xbf16>, vector<8x16x16xbf16>, vector<8x16x16xf32> -> vector<8x16x16xf32>
    "tpu.trace_stop"() : () -> ()
    %27 = vector.extract_strided_slice %26 {offsets = [0, 0, 0], sizes = [4, 16, 16], strides = [1, 1, 1]} : vector<8x16x16xf32> to vector<4x16x16xf32>
    %28 = vector.extract_strided_slice %26 {offsets = [4, 0, 0], sizes = [4, 16, 16], strides = [1, 1, 1]} : vector<8x16x16xf32> to vector<4x16x16xf32>
    %29 = arith.addf %27, %28 : vector<4x16x16xf32>
    %30 = tpu.iota {dimensions = array<i32: 0>} : vector<16x16xi32>
    %31 = tpu.iota {dimensions = array<i32: 1>} : vector<16x16xi32>
    %32 = tpu.iota {dimensions = array<i32: 0>} : vector<2x8x16xi32>
    %33 = vector.shape_cast %32 : vector<2x8x16xi32> to vector<16x16xi32>
    %34 = tpu.iota {dimensions = array<i32: 1>} : vector<16x2x8xi32>
    %35 = vector.shape_cast %34 : vector<16x2x8xi32> to vector<16x16xi32>
    %36 = arith.cmpi eq, %33, %35 : vector<16x16xi32>
    %37 = arith.cmpi sle, %31, %30 : vector<16x16xi32>
    %38 = arith.andi %36, %37 : vector<16x16xi1>
    %39 = vector.shape_cast %38 : vector<16x16xi1> to vector<1x16x16xi1>
    %cst_9 = arith.constant -1.000000e+30 : f32
    %40 = vector.shape_cast %39 : vector<1x16x16xi1> to vector<1x16x16xi1>
    %41 = vector.broadcast %40 : vector<1x16x16xi1> to vector<4x16x16xi1>
    %42 = vector.broadcast %cst_9 : f32 to vector<4x16x16xf32>
    %43 = arith.select %41, %29, %42 : vector<4x16x16xi1>, vector<4x16x16xf32>
    %cst_10 = arith.constant dense<0xFF800000> : vector<4x16xf32>
    %44 = vector.multi_reduction <maximumf>, %43, %cst_10 [2] : vector<4x16x16xf32> to vector<4x16xf32>
    %45 = vector.shape_cast %44 : vector<4x16xf32> to vector<4x16x1xf32>
    %46 = vector.broadcast %45 : vector<4x16x1xf32> to vector<4x16x16xf32>
    %47 = arith.subf %43, %46 : vector<4x16x16xf32>
    %48 = math.exp %47 : vector<4x16x16xf32>
    %cst_11 = arith.constant dense<0.000000e+00> : vector<4x16xf32>
    %49 = vector.multi_reduction <add>, %48, %cst_11 [2] : vector<4x16x16xf32> to vector<4x16xf32>
    %50 = vector.shape_cast %49 : vector<4x16xf32> to vector<4x16x1xf32>
    %51 = tpu.reciprocal %50 {approx = true} : vector<4x16x1xf32> -> vector<4x16x1xf32>
    %52 = vector.broadcast %51 : vector<4x16x1xf32> to vector<4x16x16xf32>
    %53 = arith.mulf %48, %52 : vector<4x16x16xf32>
    %54 = tpu.concatenate %53, %53 in 0 : vector<4x16x16xf32>, vector<4x16x16xf32> -> vector<8x16x16xf32>
    %55 = arith.truncf %54 : vector<8x16x16xf32> to vector<8x16x16xbf16>
    "tpu.trace_start"() <{level = 10 : i32, message = "pqk,pkd->pqd"}> : () -> ()
    %cst_12 = arith.constant dense<0.000000e+00> : vector<8x16x16xf32>
    %56 = tpu.matmul %55, %25, %cst_12 {dimension_numbers = #tpu.dot_dimension_numbers<[2], [1], [1], [2], [0, 0, 0, 1, 1, 2], [0], [0]>} : vector<8x16x16xbf16>, vector<8x16x16xbf16>, vector<8x16x16xf32> -> vector<8x16x16xf32>
    "tpu.trace_stop"() : () -> ()
    %57 = tpu.transpose %56, [1, 0, 2] : vector<8x16x16xf32> -> vector<16x8x16xf32>
    %58 = vector.shape_cast %57 : vector<16x8x16xf32> to vector<16x128xf32>
    %59 = arith.truncf %58 : vector<16x128xf32> to vector<16x128xbf16>
    %c0_13 = arith.constant 0 : index
    %c0_14 = arith.constant 0 : index
    %60 = vector.load %arg3[%c0_13, %c0_14] : memref<128x128xbf16, #tpu.memory_space<vmem>>, vector<128x128xbf16>
    %cst_15 = arith.constant dense<0.000000e+00> : vector<16x128xf32>
    %61 = tpu.matmul %59, %60, %cst_15 {dimension_numbers = #tpu.dot_dimension_numbers<[1], [0], [0], [1], [0, 0, 1, 1], [], []>} : vector<16x128xbf16>, vector<128x128xbf16>, vector<16x128xf32> -> vector<16x128xf32>
    %c0_16 = arith.constant 0 : index
    %c0_17 = arith.constant 0 : index
    %62 = vector.load %arg6[%c0_16, %c0_17] : memref<16x128xf32, #tpu.memory_space<vmem>>, vector<16x128xf32>
    tpu.vector_store %arg6[%c0_16, %c0_17], %61 {strides = array<i32>} : memref<16x128xf32, #tpu.memory_space<vmem>>, vector<16x128xf32>,
    return
  }
  func.func @transform_0(%arg0: i32) -> (i32, i32) {
    %c0_i32 = arith.constant 0 : i32
    %c0_i32_0 = arith.constant 0 : i32
    %c0_i32_1 = arith.constant 0 : i32
    return %c0_i32, %c0_i32_0 : i32, i32
  }
  func.func @transform_1(%arg0: i32) -> (i32, i32) {
    %c0_i32 = arith.constant 0 : i32
    %c0_i32_0 = arith.constant 0 : i32
    %c0_i32_1 = arith.constant 0 : i32
    return %c0_i32, %c0_i32_0 : i32, i32
  }
  func.func @transform_2(%arg0: i32) -> (i32, i32) {
    %c0_i32 = arith.constant 0 : i32
    %c0_i32_0 = arith.constant 0 : i32
    %c0_i32_1 = arith.constant 0 : i32
    return %c0_i32, %c0_i32_0 : i32, i32
  }
  func.func @transform_3(%arg0: i32) -> (i32, i32) {
    %c0_i32 = arith.constant 0 : i32
    %c0_i32_0 = arith.constant 0 : i32
    %c0_i32_1 = arith.constant 0 : i32
    return %c0_i32, %c0_i32_0 : i32, i32
  }
  func.func @transform_4(%arg0: i32) -> (i32, i32) {
    %c0_i32 = arith.constant 0 : i32
    %c0_i32_0 = arith.constant 0 : i32
    %c0_i32_1 = arith.constant 0 : i32
    return %c0_i32, %c0_i32_0 : i32, i32
  }
  func.func @transform_5(%arg0: i32) -> (i32, i32) {
    %c0_i32 = arith.constant 0 : i32
    %c0_i32_0 = arith.constant 0 : i32
    %c0_i32_1 = arith.constant 0 : i32
    return %c0_i32, %c0_i32_0 : i32, i32
  }
}

</mosaic_0001>

<llo_original>
// kernel: tpu_custom_call.1
$region0: #{tpu_custom_call.1}
  #allocation0 [shape = 'u32[]', space=smem, size = 0x4, offset = 0x4, fixed_abs, tag = 'smem constant byte address 0x4 - core index']
  #allocation1 [shape = 'u32[144,128]{1,0:T(1,128)}', space=vmem, size = 0x12000, scoped, tag = 'internal scratch']
  %s0 = inlined_call_operand.hbm [shape: f32[16,128], index: 0, kind: input, shape index: {}]
  %s1 = inlined_call_operand.hbm [shape: bf16[128,384], index: 1, kind: input, shape index: {}]
  %s2 = inlined_call_operand.hbm [shape: bf16[128,128], index: 2, kind: input, shape index: {}]
  %s3 = inlined_call_operand.hbm [shape: f32[16,128], index: 3, kind: input, shape index: {}]
  %s4 = inlined_call_operand.hbm [shape: f32[16,128], index: 4, kind: input, shape index: {}]
  %s5 = inlined_call_operand.hbm [shape: f32[16,128], index: 5, kind: output, shape index: {}]
  %s6 = sld [smem:[#allocation0]]
  $region50: #{tpu_custom_call.1} parent=0
    _
  %s8 = ssub.s32 1, %s6
  %s9 = scalar_select 0, %s8, %s6
  $region1: #{tpu_custom_call.1} parent=0
    #allocation2 [shape = 'u8[8192]{0}', space=vmem, size = 0x2000, scoped, tag = 'input window, operand 0, single buffered']
    #allocation3 [shape = 's32[1]{0}', space=sflag, size = 0x4, scoped, tag = 'scoped memory for tpu_custom_call.1']
    #allocation4 [shape = 's32[1]{0}', space=sflag, size = 0x4, scoped, tag = 'scoped memory for tpu_custom_call.1']
    #allocation5 [shape = 'u8[98304]{0}', space=vmem, size = 0x18000, scoped, tag = 'input window, operand 1, single buffered']
    #allocation6 [shape = 's32[1]{0}', space=sflag, size = 0x4, scoped, tag = 'scoped memory for tpu_custom_call.1']
    #allocation7 [shape = 'u8[32768]{0}', space=vmem, size = 0x8000, scoped, tag = 'input window, operand 2, single buffered']
    #allocation8 [shape = 'u8[8192]{0}', space=vmem, size = 0x2000, scoped, tag = 'input window, operand 3, single buffered']
    #allocation9 [shape = 's32[1]{0}', space=sflag, size = 0x4, scoped, tag = 'scoped memory for tpu_custom_call.1']
    #allocation10 [shape = 'u8[8192]{0}', space=vmem, size = 0x2000, scoped, tag = 'input window, operand 4, single buffered']
    #allocation11 [shape = 'u8[8192]{0}', space=vmem, size = 0x2000, scoped, tag = 'output window, operand 0, single buffered']
    %10 = vsyncpa [#allocation3], 0
    %11 = vsyncpa [#allocation6], 0
    %12 = vsyncpa [#allocation9], 0
    %13 = vsyncpa [#allocation4], 0
    // Predicated region
    $region2: #{tpu_custom_call.1} parent=1 // pred_check
      _
    $region3: #{tpu_custom_call.1} parent=1 // pred_check_branch
      %15 = sbr.rel (0) target = $region5
    $region4: #{tpu_custom_call.1} parent=1 // pred_region
      %s17 = ssub.s32 256, 256
      %18 = vsyncadd [#allocation3], %s17
      %s19 = sshll.u32 [#allocation2], 4
      %s20 = int_to_ptr.vmem [resolvable:$true] %s19
      %25 = dma.hbm_to_vmem [thread:$0]  %s0, 256, %s20, [#allocation3], 128, 128, 8
    $region5: #{tpu_custom_call.1} parent=1 // pred_fallthru
      _
    // Predicated region
    $region6: #{tpu_custom_call.1} parent=1 // pred_check
      _
    $region7: #{tpu_custom_call.1} parent=1 // pred_check_branch
      %27 = sbr.rel (0) target = $region9
    $region8: #{tpu_custom_call.1} parent=1 // pred_region
      %s29 = ssub.s32 3072, 3072
      %30 = vsyncadd [#allocation6], %s29
      %s31 = sshll.u32 [#allocation5], 4
      %s32 = int_to_ptr.vmem [resolvable:$true] %s31
      %37 = dma.hbm_to_vmem [thread:$0]  %s1, 3072, %s32, [#allocation6], 192, 192, 12
    $region9: #{tpu_custom_call.1} parent=1 // pred_fallthru
      _
    // Predicated region
    $region10: #{tpu_custom_call.1} parent=1 // pred_check
      _
    $region11: #{tpu_custom_call.1} parent=1 // pred_check_branch
      %39 = sbr.rel (0) target = $region13
    $region12: #{tpu_custom_call.1} parent=1 // pred_region
      %s41 = ssub.s32 1024, 1024
      %42 = vsyncadd [#allocation6], %s41
      %s43 = sshll.u32 [#allocation7], 4
      %s44 = int_to_ptr.vmem [resolvable:$true] %s43
      %49 = dma.hbm_to_vmem [thread:$0]  %s2, 1024, %s44, [#allocation6], 64, 64, 4
    $region13: #{tpu_custom_call.1} parent=1 // pred_fallthru
      _
    // Predicated region
    $region14: #{tpu_custom_call.1} parent=1 // pred_check
      _
    $region15: #{tpu_custom_call.1} parent=1 // pred_check_branch
      %51 = sbr.rel (0) target = $region17
    $region16: #{tpu_custom_call.1} parent=1 // pred_region
      %s53 = ssub.s32 256, 256
      %54 = vsyncadd [#allocation9], %s53
      %s55 = sshll.u32 [#allocation8], 4
      %s56 = int_to_ptr.vmem [resolvable:$true] %s55
      %61 = dma.hbm_to_vmem [thread:$0]  %s3, 256, %s56, [#allocation9], 128, 128, 8
    $region17: #{tpu_custom_call.1} parent=1 // pred_fallthru
      _
    // Predicated region
    $region18: #{tpu_custom_call.1} parent=1 // pred_check
      _
    $region19: #{tpu_custom_call.1} parent=1 // pred_check_branch
      %63 = sbr.rel (0) target = $region21
    $region20: #{tpu_custom_call.1} parent=1 // pred_region
      %s65 = ssub.s32 256, 256
      %66 = vsyncadd [#allocation9], %s65
      %s67 = sshll.u32 [#allocation10], 4
      %s68 = int_to_ptr.vmem [resolvable:$true] %s67
      %73 = dma.hbm_to_vmem [thread:$0]  %s4, 256, %s68, [#allocation9], 128, 128, 8
    $region21: #{tpu_custom_call.1} parent=1 // pred_fallthru
      _
    // Predicated region
    $region22: #{tpu_custom_call.1} parent=1 // pred_check
      _
    $region23: #{tpu_custom_call.1} parent=1 // pred_check_branch
      %75 = sbr.rel (0) target = $region25
    $region24: #{tpu_custom_call.1} parent=1 // pred_region
      %76 = dma.done [#allocation3], 256
    $region25: #{tpu_custom_call.1} parent=1 // pred_fallthru
      _
    // Predicated region
    $region26: #{tpu_custom_call.1} parent=1 // pred_check
      _
    $region27: #{tpu_custom_call.1} parent=1 // pred_check_branch
      %78 = sbr.rel (0) target = $region29
    $region28: #{tpu_custom_call.1} parent=1 // pred_region
      %79 = dma.done [#allocation6], 3072
    $region29: #{tpu_custom_call.1} parent=1 // pred_fallthru
      _
    // Predicated region
    $region30: #{tpu_custom_call.1} parent=1 // pred_check
      _
    $region31: #{tpu_custom_call.1} parent=1 // pred_check_branch
      %81 = sbr.rel (0) target = $region33
    $region32: #{tpu_custom_call.1} parent=1 // pred_region
      %82 = dma.done [#allocation6], 1024
    $region33: #{tpu_custom_call.1} parent=1 // pred_fallthru
      _
    // Predicated region
    $region34: #{tpu_custom_call.1} parent=1 // pred_check
      _
    $region35: #{tpu_custom_call.1} parent=1 // pred_check_branch
      %84 = sbr.rel (0) target = $region37
    $region36: #{tpu_custom_call.1} parent=1 // pred_region
      %85 = dma.done [#allocation9], 256
    $region37: #{tpu_custom_call.1} parent=1 // pred_fallthru
      _
    // Predicated region
    $region38: #{tpu_custom_call.1} parent=1 // pred_check
      _
    $region39: #{tpu_custom_call.1} parent=1 // pred_check_branch
      %87 = sbr.rel (0) target = $region41
    $region40: #{tpu_custom_call.1} parent=1 // pred_region
      %88 = dma.done [#allocation9], 256
    $region41: #{tpu_custom_call.1} parent=1 // pred_fallthru
      _
    %v90 = vld [vmem:[#allocation2] sm:$0xff]
    %v91 = vld [vmem:[#allocation2 + $0x8] sm:$0xff]
    %v92 = vpack.c.bf16 %v91, %v90
    %v93 = vld [vmem:[#allocation5] sm:$0xff]
    %v94 = vld [vmem:[#allocation5 + $0x8] sm:$0xf]
    %v95 = vld [vmem:[#allocation5 + $0xc] sm:$0xff]
    %v96 = vld [vmem:[#allocation5 + $0x14] sm:$0xf]
    %v97 = vld [vmem:[#allocation5 + $0x18] sm:$0xff]
    %v98 = vld [vmem:[#allocation5 + $0x20] sm:$0xf]
    %v99 = vld [vmem:[#allocation5 + $0x24] sm:$0xff]
    %v100 = vld [vmem:[#allocation5 + $0x2c] sm:$0xf]
    %v101 = vld [vmem:[#allocation5 + $0x30] sm:$0xff]
    %v102 = vld [vmem:[#allocation5 + $0x38] sm:$0xf]
    %v103 = vld [vmem:[#allocation5 + $0x3c] sm:$0xff]
    %v104 = vld [vmem:[#allocation5 + $0x44] sm:$0xf]
    %v105 = vld [vmem:[#allocation5 + $0x48] sm:$0xff]
    %v106 = vld [vmem:[#allocation5 + $0x50] sm:$0xf]
    %v107 = vld [vmem:[#allocation5 + $0x54] sm:$0xff]
    %v108 = vld [vmem:[#allocation5 + $0x5c] sm:$0xf]
    %v109 = vld [vmem:[#allocation5 + $0x60] sm:$0xff]
    %v110 = vld [vmem:[#allocation5 + $0x68] sm:$0xf]
    %v111 = vld [vmem:[#allocation5 + $0x6c] sm:$0xff]
    %v112 = vld [vmem:[#allocation5 + $0x74] sm:$0xf]
    %v113 = vld [vmem:[#allocation5 + $0x78] sm:$0xff]
    %v114 = vld [vmem:[#allocation5 + $0x80] sm:$0xf]
    %v115 = vld [vmem:[#allocation5 + $0x84] sm:$0xff]
    %v116 = vld [vmem:[#allocation5 + $0x8c] sm:$0xf]
    %v117 = vld [vmem:[#allocation5 + $0x90] sm:$0xff]
    %v118 = vld [vmem:[#allocation5 + $0x98] sm:$0xf]
    %v119 = vld [vmem:[#allocation5 + $0x9c] sm:$0xff]
    %v120 = vld [vmem:[#allocation5 + $0xa4] sm:$0xf]
    %v121 = vld [vmem:[#allocation5 + $0xa8] sm:$0xff]
    %v122 = vld [vmem:[#allocation5 + $0xb0] sm:$0xf]
    %v123 = vld [vmem:[#allocation5 + $0xb4] sm:$0xff]
    %v124 = vld [vmem:[#allocation5 + $0xbc] sm:$0xf]
    %v157 = vunpack.c.l.b16 %v93
    %v158 = vunpack.c.h.b16 %v93
    %v159 = vunpack.c.l.b16 %v94
    %v160 = vunpack.c.l.b16 %v95
    %v161 = vunpack.c.h.b16 %v95
    %v162 = vunpack.c.l.b16 %v96
    %v163 = vunpack.c.l.b16 %v97
    %v164 = vunpack.c.h.b16 %v97
    %v165 = vunpack.c.l.b16 %v98
    %v166 = vunpack.c.l.b16 %v99
    %v167 = vunpack.c.h.b16 %v99
    %v168 = vunpack.c.l.b16 %v100
    %v169 = vunpack.c.l.b16 %v101
    %v170 = vunpack.c.h.b16 %v101
    %v171 = vunpack.c.l.b16 %v102
    %v172 = vunpack.c.l.b16 %v103
    %v173 = vunpack.c.h.b16 %v103
    %v174 = vunpack.c.l.b16 %v104
    %v175 = vunpack.c.l.b16 %v105
    %v176 = vunpack.c.h.b16 %v105
    %v177 = vunpack.c.l.b16 %v106
    %v178 = vunpack.c.l.b16 %v107
    %v179 = vunpack.c.h.b16 %v107
    %v180 = vunpack.c.l.b16 %v108
    %v181 = vunpack.c.l.b16 %v109
    %v182 = vunpack.c.h.b16 %v109
    %v183 = vunpack.c.l.b16 %v110
    %v184 = vunpack.c.l.b16 %v111
    %v185 = vunpack.c.h.b16 %v111
    %v186 = vunpack.c.l.b16 %v112
    %v187 = vunpack.c.l.b16 %v113
    %v188 = vunpack.c.h.b16 %v113
    %v189 = vunpack.c.l.b16 %v114
    %v190 = vunpack.c.l.b16 %v115
    %v191 = vunpack.c.h.b16 %v115
    %v192 = vunpack.c.l.b16 %v116
    %v193 = vunpack.c.l.b16 %v117
    %v194 = vunpack.c.h.b16 %v117
    %v195 = vunpack.c.l.b16 %v118
    %v196 = vunpack.c.l.b16 %v119
    %v197 = vunpack.c.h.b16 %v119
    %v198 = vunpack.c.l.b16 %v120
    %v199 = vunpack.c.l.b16 %v121
    %v200 = vunpack.c.h.b16 %v121
    %v201 = vunpack.c.l.b16 %v122
    %v202 = vunpack.c.l.b16 %v123
    %v203 = vunpack.c.h.b16 %v123
    %v204 = vunpack.c.l.b16 %v124
    %v205 = vpack.c.b16 %v160, %v157
    %v206 = vpack.c.b16 %v161, %v158
    %v207 = vpack.c.b16 %v162, %v159
    %v208 = vpack.c.b16 %v166, %v163
    %v209 = vpack.c.b16 %v167, %v164
    %v210 = vpack.c.b16 %v168, %v165
    %v211 = vpack.c.b16 %v172, %v169
    %v212 = vpack.c.b16 %v173, %v170
    %v213 = vpack.c.b16 %v174, %v171
    %v214 = vpack.c.b16 %v178, %v175
    %v215 = vpack.c.b16 %v179, %v176
    %v216 = vpack.c.b16 %v180, %v177
    %v217 = vpack.c.b16 %v184, %v181
    %v218 = vpack.c.b16 %v185, %v182
    %v219 = vpack.c.b16 %v186, %v183
    %v220 = vpack.c.b16 %v190, %v187
    %v221 = vpack.c.b16 %v191, %v188
    %v222 = vpack.c.b16 %v192, %v189
    %v223 = vpack.c.b16 %v196, %v193
    %v224 = vpack.c.b16 %v197, %v194
    %v225 = vpack.c.b16 %v198, %v195
    %v226 = vpack.c.b16 %v202, %v199
    %v227 = vpack.c.b16 %v203, %v200
    %v228 = vpack.c.b16 %v204, %v201
    %253 = vmatprep.subr.bf16.mxu0 %v206
    %254 = vmatpush1.bf16.msra.mxu0 %v205
    %255 = vmatprep.subr.bf16.mxu0 %v209
    %256 = vmatpush1.bf16.msra.mxu0 %v208
    %257 = vmatprep.subr.bf16.mxu0 %v212
    %258 = vmatpush1.bf16.msra.mxu0 %v211
    %259 = vmatprep.subr.bf16.mxu0 %v215
    %260 = vmatpush1.bf16.msra.mxu0 %v214
    %261 = vmatprep.subr.bf16.mxu0 %v218
    %262 = vmatpush1.bf16.msra.mxu0 %v217
    %263 = vmatprep.subr.bf16.mxu0 %v221
    %264 = vmatpush1.bf16.msra.mxu0 %v220
    %265 = vmatprep.subr.bf16.mxu0 %v224
    %266 = vmatpush1.bf16.msra.mxu0 %v223
    %267 = vmatprep.subr.bf16.mxu0 %v227
    %268 = vmatpush1.bf16.msra.mxu0 %v226
    %269 = vmatprep.subr.bf16.mxu0 0
    %270 = vmatpush1.bf16.msra.mxu0 0
    %271 = vmatprep.subr.bf16.mxu0 0
    %272 = vmatpush1.bf16.msra.mxu0 0
    %273 = vmatprep.subr.bf16.mxu0 0
    %274 = vmatpush1.bf16.msra.mxu0 0
    %275 = vmatprep.subr.bf16.mxu0 0
    %276 = vmatpush1.bf16.msra.mxu0 0
    %277 = vmatprep.subr.bf16.mxu0 0
    %278 = vmatpush1.bf16.msra.mxu0 0
    %279 = vmatprep.subr.bf16.mxu0 0
    %280 = vmatpush1.bf16.msra.mxu0 0
    %281 = vmatprep.subr.bf16.mxu0 0
    %282 = vmatpush1.bf16.msra.mxu0 0
    %283 = vmatprep.subr.bf16.mxu0 0
    %284 = vmatpush1.bf16.msra.mxu0 0
    %285 = vmatprep.mubr.bf16.mxu0 0
    %286 = vmatmul.mubr.bf16.gmra.mrb[0].mxu0 %v92
    %v287 = vpop.f32.mrb[0].mxu0
    %v288 = vadd.f32 0.0, %v287
    %v289 = vpop.f32.mrb[0].mxu0
    %v290 = vadd.f32 0.0, %v289
    %v291 = vpop.f32.mrb[0].mxu0
    %v292 = vadd.f32 0.0, %v291
    %v293 = vpop.f32.mrb[0].mxu0
    %v294 = vadd.f32 0.0, %v293
    %295 = vdwg.mxu0
    %296 = vmatprep.subr.bf16.mxu0 0
    %297 = vmatpush1.bf16.msra.mxu0 %v207
    %298 = vmatprep.subr.bf16.mxu0 0
    %299 = vmatpush1.bf16.msra.mxu0 %v210
    %300 = vmatprep.subr.bf16.mxu0 0
    %301 = vmatpush1.bf16.msra.mxu0 %v213
    %302 = vmatprep.subr.bf16.mxu0 0
    %303 = vmatpush1.bf16.msra.mxu0 %v216
    %304 = vmatprep.subr.bf16.mxu0 0
    %305 = vmatpush1.bf16.msra.mxu0 %v219
    %306 = vmatprep.subr.bf16.mxu0 0
    %307 = vmatpush1.bf16.msra.mxu0 %v222
    %308 = vmatprep.subr.bf16.mxu0 0
    %309 = vmatpush1.bf16.msra.mxu0 %v225
    %310 = vmatprep.subr.bf16.mxu0 0
    %311 = vmatpush1.bf16.msra.mxu0 %v228
    %312 = vmatprep.subr.bf16.mxu0 0
    %313 = vmatpush1.bf16.msra.mxu0 0
    %314 = vmatprep.subr.bf16.mxu0 0
    %315 = vmatpush1.bf16.msra.mxu0 0
    %316 = vmatprep.subr.bf16.mxu0 0
    %317 = vmatpush1.bf16.msra.mxu0 0
    %318 = vmatprep.subr.bf16.mxu0 0
    %319 = vmatpush1.bf16.msra.mxu0 0
    %320 = vmatprep.subr.bf16.mxu0 0
    %321 = vmatpush1.bf16.msra.mxu0 0
    %322 = vmatprep.subr.bf16.mxu0 0
    %323 = vmatpush1.bf16.msra.mxu0 0
    %324 = vmatprep.subr.bf16.mxu0 0
    %325 = vmatpush1.bf16.msra.mxu0 0
    %326 = vmatprep.subr.bf16.mxu0 0
    %327 = vmatpush1.bf16.msra.mxu0 0
    %328 = vmatprep.mubr.bf16.mxu0 0
    %329 = vmatmul.mubr.bf16.gmra.mrb[0].mxu0 %v92
    %v330 = vpop.f32.mrb[0].mxu0
    %v331 = vadd.f32 0.0, %v330
    %v332 = vpop.f32.mrb[0].mxu0
    %v333 = vpop.f32.mrb[0].mxu0
    %v334 = vadd.f32 0.0, %v333
    %v335 = vpop.f32.mrb[0].mxu0
    %336 = vdwg.mxu0
    %v337 = vld [vmem:[#allocation8] sm:$0xff]
    %v338 = vld [vmem:[#allocation8 + $0x8] sm:$0xff]
    %v339 = vld [vmem:[#allocation10] sm:$0xff]
    %v340 = vld [vmem:[#allocation10 + $0x8] sm:$0xff]
    %v341 = vmul.f32 %v288, %v337
    %v342 = vmul.f32 %v292, %v338
    %343 = vrot.lane.b32.xlu0 %v288, 64
    %v344 = vpop.permute.xlu0 %343
    %345 = vrot.lane.b32.xlu0 %v292, 64
    %v346 = vpop.permute.xlu0 %345
    %v347 = vmul.f32 %v344, %v339
    %v348 = vmul.f32 %v346, %v340
    %v349 = vadd.f32 %v341, %v347
    %v350 = vadd.f32 %v342, %v348
    %v351 = vmul.f32 %v290, %v337
    %v352 = vmul.f32 %v294, %v338
    %353 = vrot.lane.b32.xlu0 %v290, 64
    %v354 = vpop.permute.xlu0 %353
    %355 = vrot.lane.b32.xlu0 %v294, 64
    %v356 = vpop.permute.xlu0 %355
    %v357 = vmul.f32 %v354, %v339
    %v358 = vmul.f32 %v356, %v340
    %v359 = vadd.f32 %v351, %v357
    %v360 = vadd.f32 %v352, %v358
    %363 = vrot.lane.b32.xlu0 %v349, 112
    %v364 = vpop.permute.xlu0 %363
    %365 = vrot.lane.b32.xlu0 %v350, 112
    %v366 = vpop.permute.xlu0 %365
    %369 = vrot.lane.b32.xlu0 %v349, 96
    %v370 = vpop.permute.xlu0 %369
    %371 = vrot.lane.b32.xlu0 %v350, 96
    %v372 = vpop.permute.xlu0 %371
    %375 = vrot.lane.b32.xlu0 %v349, 80
    %v376 = vpop.permute.xlu0 %375
    %377 = vrot.lane.b32.xlu0 %v350, 80
    %v378 = vpop.permute.xlu0 %377
    %381 = vrot.lane.b32.xlu0 %v349, 64
    %v382 = vpop.permute.xlu0 %381
    %383 = vrot.lane.b32.xlu0 %v350, 64
    %v384 = vpop.permute.xlu0 %383
    %387 = vrot.lane.b32.xlu0 %v349, 48
    %v388 = vpop.permute.xlu0 %387
    %389 = vrot.lane.b32.xlu0 %v350, 48
    %v390 = vpop.permute.xlu0 %389
    %393 = vrot.lane.b32.xlu0 %v349, 32
    %v394 = vpop.permute.xlu0 %393
    %395 = vrot.lane.b32.xlu0 %v350, 32
    %v396 = vpop.permute.xlu0 %395
    %399 = vrot.lane.b32.xlu0 %v349, 16
    %v400 = vpop.permute.xlu0 %399
    %401 = vrot.lane.b32.xlu0 %v350, 16
    %v402 = vpop.permute.xlu0 %401
    %v405 = vcombine.low %v349, %v370
    %v406 = vcombine.high %v349, %v370
    %v408 = vunpack.c.l.s4 1983009808
    %v409 = vunpack.c.0.s8 %v408
    %v410 = vlaneseq
    %v411 = vshrl.u32 %v410, 7
    %v412 = vsub.s32 %v409, %v411
    %v413 = vrot.slane %v405, %v412
    %v415 = vunpack.c.l.s4 1983009808
    %v416 = vunpack.c.0.s8 %v415
    %v417 = vlaneseq
    %v418 = vshrl.u32 %v417, 7
    %v419 = vsub.s32 %v416, %v418
    %v420 = vrot.slane %v406, %v419
    %v421 = vcombine.low %v364, %v376
    %v422 = vcombine.high %v364, %v376
    %v424 = vunpack.c.l.s4 1983009808
    %v425 = vunpack.c.0.s8 %v424
    %v426 = vlaneseq
    %v427 = vshrl.u32 %v426, 7
    %v428 = vsub.s32 %v425, %v427
    %v429 = vrot.slane %v421, %v428
    %v431 = vunpack.c.l.s4 1983009808
    %v432 = vunpack.c.0.s8 %v431
    %v433 = vlaneseq
    %v434 = vshrl.u32 %v433, 7
    %v435 = vsub.s32 %v432, %v434
    %v436 = vrot.slane %v422, %v435
    %v437 = vcombine.low %v382, %v394
    %v438 = vcombine.high %v382, %v394
    %v440 = vunpack.c.l.s4 1983009808
    %v441 = vunpack.c.0.s8 %v440
    %v442 = vlaneseq
    %v443 = vshrl.u32 %v442, 7
    %v444 = vsub.s32 %v441, %v443
    %v445 = vrot.slane %v437, %v444
    %v447 = vunpack.c.l.s4 1983009808
    %v448 = vunpack.c.0.s8 %v447
    %v449 = vlaneseq
    %v450 = vshrl.u32 %v449, 7
    %v451 = vsub.s32 %v448, %v450
    %v452 = vrot.slane %v438, %v451
    %v453 = vcombine.low %v388, %v400
    %v454 = vcombine.high %v388, %v400
    %v456 = vunpack.c.l.s4 1983009808
    %v457 = vunpack.c.0.s8 %v456
    %v458 = vlaneseq
    %v459 = vshrl.u32 %v458, 7
    %v460 = vsub.s32 %v457, %v459
    %v461 = vrot.slane %v453, %v460
    %v463 = vunpack.c.l.s4 1983009808
    %v464 = vunpack.c.0.s8 %v463
    %v465 = vlaneseq
    %v466 = vshrl.u32 %v465, 7
    %v467 = vsub.s32 %v464, %v466
    %v468 = vrot.slane %v454, %v467
    %v469 = vcombine.low %v413, %v429
    %v470 = vcombine.high %v413, %v429
    %v472 = vunpack.c.l.s4 1934713408
    %v473 = vunpack.c.0.s8 %v472
    %v474 = vlaneseq
    %v475 = vshrl.u32 %v474, 7
    %v476 = vsub.s32 %v473, %v475
    %v477 = vrot.slane %v469, %v476
    %v479 = vunpack.c.l.s4 1934713408
    %v480 = vunpack.c.0.s8 %v479
    %v481 = vlaneseq
    %v482 = vshrl.u32 %v481, 7
    %v483 = vsub.s32 %v480, %v482
    %v484 = vrot.slane %v470, %v483
    %v485 = vcombine.low %v420, %v436
    %v486 = vcombine.high %v420, %v436
    %v488 = vunpack.c.l.s4 1934713408
    %v489 = vunpack.c.0.s8 %v488
    %v490 = vlaneseq
    %v491 = vshrl.u32 %v490, 7
    %v492 = vsub.s32 %v489, %v491
    %v493 = vrot.slane %v485, %v492
    %v495 = vunpack.c.l.s4 1934713408
    %v496 = vunpack.c.0.s8 %v495
    %v497 = vlaneseq
    %v498 = vshrl.u32 %v497, 7
    %v499 = vsub.s32 %v496, %v498
    %v500 = vrot.slane %v486, %v499
    %v501 = vcombine.low %v445, %v461
    %v502 = vcombine.high %v445, %v461
    %v504 = vunpack.c.l.s4 1934713408
    %v505 = vunpack.c.0.s8 %v504
    %v506 = vlaneseq
    %v507 = vshrl.u32 %v506, 7
    %v508 = vsub.s32 %v505, %v507
    %v509 = vrot.slane %v501, %v508
    %v511 = vunpack.c.l.s4 1934713408
    %v512 = vunpack.c.0.s8 %v511
    %v513 = vlaneseq
    %v514 = vshrl.u32 %v513, 7
    %v515 = vsub.s32 %v512, %v514
    %v516 = vrot.slane %v502, %v515
    %v517 = vcombine.low %v452, %v468
    %v518 = vcombine.high %v452, %v468
    %v520 = vunpack.c.l.s4 1934713408
    %v521 = vunpack.c.0.s8 %v520
    %v522 = vlaneseq
    %v523 = vshrl.u32 %v522, 7
    %v524 = vsub.s32 %v521, %v523
    %v525 = vrot.slane %v517, %v524
    %v527 = vunpack.c.l.s4 1934713408
    %v528 = vunpack.c.0.s8 %v527
    %v529 = vlaneseq
    %v530 = vshrl.u32 %v529, 7
    %v531 = vsub.s32 %v528, %v530
    %v532 = vrot.slane %v518, %v531
    %v533 = vcombine.low %v477, %v509
    %v534 = vcombine.high %v477, %v509
    %v535 = vcombine.low %v484, %v516
    %v536 = vcombine.high %v484, %v516
    %v537 = vcombine.low %v493, %v525
    %v538 = vcombine.high %v493, %v525
    %v539 = vcombine.low %v500, %v532
    %v540 = vcombine.high %v500, %v532
    %v541 = vcombine.low %v350, %v372
    %v542 = vcombine.high %v350, %v372
    %v544 = vunpack.c.l.s4 1983009808
    %v545 = vunpack.c.0.s8 %v544
    %v546 = vlaneseq
    %v547 = vshrl.u32 %v546, 7
    %v548 = vsub.s32 %v545, %v547
    %v549 = vrot.slane %v541, %v548
    %v551 = vunpack.c.l.s4 1983009808
    %v552 = vunpack.c.0.s8 %v551
    %v553 = vlaneseq
    %v554 = vshrl.u32 %v553, 7
    %v555 = vsub.s32 %v552, %v554
    %v556 = vrot.slane %v542, %v555
    %v557 = vcombine.low %v366, %v378
    %v558 = vcombine.high %v366, %v378
    %v560 = vunpack.c.l.s4 1983009808
    %v561 = vunpack.c.0.s8 %v560
    %v562 = vlaneseq
    %v563 = vshrl.u32 %v562, 7
    %v564 = vsub.s32 %v561, %v563
    %v565 = vrot.slane %v557, %v564
    %v567 = vunpack.c.l.s4 1983009808
    %v568 = vunpack.c.0.s8 %v567
    %v569 = vlaneseq
    %v570 = vshrl.u32 %v569, 7
    %v571 = vsub.s32 %v568, %v570
    %v572 = vrot.slane %v558, %v571
    %v573 = vcombine.low %v384, %v396
    %v574 = vcombine.high %v384, %v396
    %v576 = vunpack.c.l.s4 1983009808
    %v577 = vunpack.c.0.s8 %v576
    %v578 = vlaneseq
    %v579 = vshrl.u32 %v578, 7
    %v580 = vsub.s32 %v577, %v579
    %v581 = vrot.slane %v573, %v580
    %v583 = vunpack.c.l.s4 1983009808
    %v584 = vunpack.c.0.s8 %v583
    %v585 = vlaneseq
    %v586 = vshrl.u32 %v585, 7
    %v587 = vsub.s32 %v584, %v586
    %v588 = vrot.slane %v574, %v587
    %v589 = vcombine.low %v390, %v402
    %v590 = vcombine.high %v390, %v402
    %v592 = vunpack.c.l.s4 1983009808
    %v593 = vunpack.c.0.s8 %v592
    %v594 = vlaneseq
    %v595 = vshrl.u32 %v594, 7
    %v596 = vsub.s32 %v593, %v595
    %v597 = vrot.slane %v589, %v596
    %v599 = vunpack.c.l.s4 1983009808
    %v600 = vunpack.c.0.s8 %v599
    %v601 = vlaneseq
    %v602 = vshrl.u32 %v601, 7
    %v603 = vsub.s32 %v600, %v602
    %v604 = vrot.slane %v590, %v603
    %v605 = vcombine.low %v549, %v565
    %v606 = vcombine.high %v549, %v565
    %v608 = vunpack.c.l.s4 1934713408
    %v609 = vunpack.c.0.s8 %v608
    %v610 = vlaneseq
    %v611 = vshrl.u32 %v610, 7
    %v612 = vsub.s32 %v609, %v611
    %v613 = vrot.slane %v605, %v612
    %v615 = vunpack.c.l.s4 1934713408
    %v616 = vunpack.c.0.s8 %v615
    %v617 = vlaneseq
    %v618 = vshrl.u32 %v617, 7
    %v619 = vsub.s32 %v616, %v618
    %v620 = vrot.slane %v606, %v619
    %v621 = vcombine.low %v556, %v572
    %v622 = vcombine.high %v556, %v572
    %v624 = vunpack.c.l.s4 1934713408
    %v625 = vunpack.c.0.s8 %v624
    %v626 = vlaneseq
    %v627 = vshrl.u32 %v626, 7
    %v628 = vsub.s32 %v625, %v627
    %v629 = vrot.slane %v621, %v628
    %v631 = vunpack.c.l.s4 1934713408
    %v632 = vunpack.c.0.s8 %v631
    %v633 = vlaneseq
    %v634 = vshrl.u32 %v633, 7
    %v635 = vsub.s32 %v632, %v634
    %v636 = vrot.slane %v622, %v635
    %v637 = vcombine.low %v581, %v597
    %v638 = vcombine.high %v581, %v597
    %v640 = vunpack.c.l.s4 1934713408
    %v641 = vunpack.c.0.s8 %v640
    %v642 = vlaneseq
    %v643 = vshrl.u32 %v642, 7
    %v644 = vsub.s32 %v641, %v643
    %v645 = vrot.slane %v637, %v644
    %v647 = vunpack.c.l.s4 1934713408
    %v648 = vunpack.c.0.s8 %v647
    %v649 = vlaneseq
    %v650 = vshrl.u32 %v649, 7
    %v651 = vsub.s32 %v648, %v650
    %v652 = vrot.slane %v638, %v651
    %v653 = vcombine.low %v588, %v604
    %v654 = vcombine.high %v588, %v604
    %v656 = vunpack.c.l.s4 1934713408
    %v657 = vunpack.c.0.s8 %v656
    %v658 = vlaneseq
    %v659 = vshrl.u32 %v658, 7
    %v660 = vsub.s32 %v657, %v659
    %v661 = vrot.slane %v653, %v660
    %v663 = vunpack.c.l.s4 1934713408
    %v664 = vunpack.c.0.s8 %v663
    %v665 = vlaneseq
    %v666 = vshrl.u32 %v665, 7
    %v667 = vsub.s32 %v664, %v666
    %v668 = vrot.slane %v654, %v667
    %v669 = vcombine.low %v613, %v645
    %v670 = vcombine.high %v613, %v645
    %v671 = vcombine.low %v620, %v652
    %v672 = vcombine.high %v620, %v652
    %v673 = vcombine.low %v629, %v661
    %v674 = vcombine.high %v629, %v661
    %v675 = vcombine.low %v636, %v668
    %v676 = vcombine.high %v636, %v668
    %v677 = vcombine.low %v533, %v535
    %v678 = vcombine.high %v533, %v535
    %v680 = vunpack.c.l.s4 1983009808
    %v681 = vunpack.c.0.s8 %v680
    %v682 = vlaneseq
    %v683 = vshrl.u32 %v682, 7
    %v684 = vsub.s32 %v681, %v683
    %v685 = vrot.slane %v677, %v684
    %v687 = vunpack.c.l.s4 1983009808
    %v688 = vunpack.c.0.s8 %v687
    %v689 = vlaneseq
    %v690 = vshrl.u32 %v689, 7
    %v691 = vsub.s32 %v688, %v690
    %v692 = vrot.slane %v678, %v691
    %v693 = vcombine.low %v534, %v536
    %v694 = vcombine.high %v534, %v536
    %v696 = vunpack.c.l.s4 1983009808
    %v697 = vunpack.c.0.s8 %v696
    %v698 = vlaneseq
    %v699 = vshrl.u32 %v698, 7
    %v700 = vsub.s32 %v697, %v699
    %v701 = vrot.slane %v693, %v700
    %v703 = vunpack.c.l.s4 1983009808
    %v704 = vunpack.c.0.s8 %v703
    %v705 = vlaneseq
    %v706 = vshrl.u32 %v705, 7
    %v707 = vsub.s32 %v704, %v706
    %v708 = vrot.slane %v694, %v707
    %v709 = vcombine.low %v537, %v539
    %v710 = vcombine.high %v537, %v539
    %v712 = vunpack.c.l.s4 1983009808
    %v713 = vunpack.c.0.s8 %v712
    %v714 = vlaneseq
    %v715 = vshrl.u32 %v714, 7
    %v716 = vsub.s32 %v713, %v715
    %v717 = vrot.slane %v709, %v716
    %v719 = vunpack.c.l.s4 1983009808
    %v720 = vunpack.c.0.s8 %v719
    %v721 = vlaneseq
    %v722 = vshrl.u32 %v721, 7
    %v723 = vsub.s32 %v720, %v722
    %v724 = vrot.slane %v710, %v723
    %v725 = vcombine.low %v538, %v540
    %v726 = vcombine.high %v538, %v540
    %v728 = vunpack.c.l.s4 1983009808
    %v729 = vunpack.c.0.s8 %v728
    %v730 = vlaneseq
    %v731 = vshrl.u32 %v730, 7
    %v732 = vsub.s32 %v729, %v731
    %v733 = vrot.slane %v725, %v732
    %v735 = vunpack.c.l.s4 1983009808
    %v736 = vunpack.c.0.s8 %v735
    %v737 = vlaneseq
    %v738 = vshrl.u32 %v737, 7
    %v739 = vsub.s32 %v736, %v738
    %v740 = vrot.slane %v726, %v739
    %v741 = vcombine.low %v685, %v701
    %v742 = vcombine.high %v685, %v701
    %v744 = vunpack.c.l.s4 1934713408
    %v745 = vunpack.c.0.s8 %v744
    %v746 = vlaneseq
    %v747 = vshrl.u32 %v746, 7
    %v748 = vsub.s32 %v745, %v747
    %v749 = vrot.slane %v741, %v748
    %v751 = vunpack.c.l.s4 1934713408
    %v752 = vunpack.c.0.s8 %v751
    %v753 = vlaneseq
    %v754 = vshrl.u32 %v753, 7
    %v755 = vsub.s32 %v752, %v754
    %v756 = vrot.slane %v742, %v755
    %v757 = vcombine.low %v692, %v708
    %v758 = vcombine.high %v692, %v708
    %v760 = vunpack.c.l.s4 1934713408
    %v761 = vunpack.c.0.s8 %v760
    %v762 = vlaneseq
    %v763 = vshrl.u32 %v762, 7
    %v764 = vsub.s32 %v761, %v763
    %v765 = vrot.slane %v757, %v764
    %v767 = vunpack.c.l.s4 1934713408
    %v768 = vunpack.c.0.s8 %v767
    %v769 = vlaneseq
    %v770 = vshrl.u32 %v769, 7
    %v771 = vsub.s32 %v768, %v770
    %v772 = vrot.slane %v758, %v771
    %v773 = vcombine.low %v717, %v733
    %v774 = vcombine.high %v717, %v733
    %v776 = vunpack.c.l.s4 1934713408
    %v777 = vunpack.c.0.s8 %v776
    %v778 = vlaneseq
    %v779 = vshrl.u32 %v778, 7
    %v780 = vsub.s32 %v777, %v779
    %v781 = vrot.slane %v773, %v780
    %v783 = vunpack.c.l.s4 1934713408
    %v784 = vunpack.c.0.s8 %v783
    %v785 = vlaneseq
    %v786 = vshrl.u32 %v785, 7
    %v787 = vsub.s32 %v784, %v786
    %v788 = vrot.slane %v774, %v787
    %v789 = vcombine.low %v724, %v740
    %v790 = vcombine.high %v724, %v740
    %v792 = vunpack.c.l.s4 1934713408
    %v793 = vunpack.c.0.s8 %v792
    %v794 = vlaneseq
    %v795 = vshrl.u32 %v794, 7
    %v796 = vsub.s32 %v793, %v795
    %v797 = vrot.slane %v789, %v796
    %v799 = vunpack.c.l.s4 1934713408
    %v800 = vunpack.c.0.s8 %v799
    %v801 = vlaneseq
    %v802 = vshrl.u32 %v801, 7
    %v803 = vsub.s32 %v800, %v802
    %v804 = vrot.slane %v790, %v803
    %v805 = vcombine.low %v749, %v781
    %v806 = vcombine.high %v749, %v781
    %v807 = vcombine.low %v756, %v788
    %v808 = vcombine.high %v756, %v788
    %v809 = vcombine.low %v765, %v797
    %v810 = vcombine.high %v765, %v797
    %v811 = vcombine.low %v772, %v804
    %v812 = vcombine.high %v772, %v804
    %v813 = vcombine.low %v669, %v671
    %v814 = vcombine.high %v669, %v671
    %v816 = vunpack.c.l.s4 1983009808
    %v817 = vunpack.c.0.s8 %v816
    %v818 = vlaneseq
    %v819 = vshrl.u32 %v818, 7
    %v820 = vsub.s32 %v817, %v819
    %v821 = vrot.slane %v813, %v820
    %v823 = vunpack.c.l.s4 1983009808
    %v824 = vunpack.c.0.s8 %v823
    %v825 = vlaneseq
    %v826 = vshrl.u32 %v825, 7
    %v827 = vsub.s32 %v824, %v826
    %v828 = vrot.slane %v814, %v827
    %v829 = vcombine.low %v670, %v672
    %v830 = vcombine.high %v670, %v672
    %v832 = vunpack.c.l.s4 1983009808
    %v833 = vunpack.c.0.s8 %v832
    %v834 = vlaneseq
    %v835 = vshrl.u32 %v834, 7
    %v836 = vsub.s32 %v833, %v835
    %v837 = vrot.slane %v829, %v836
    %v839 = vunpack.c.l.s4 1983009808
    %v840 = vunpack.c.0.s8 %v839
    %v841 = vlaneseq
    %v842 = vshrl.u32 %v841, 7
    %v843 = vsub.s32 %v840, %v842
    %v844 = vrot.slane %v830, %v843
    %v845 = vcombine.low %v673, %v675
    %v846 = vcombine.high %v673, %v675
    %v848 = vunpack.c.l.s4 1983009808
    %v849 = vunpack.c.0.s8 %v848
    %v850 = vlaneseq
    %v851 = vshrl.u32 %v850, 7
    %v852 = vsub.s32 %v849, %v851
    %v853 = vrot.slane %v845, %v852
    %v855 = vunpack.c.l.s4 1983009808
    %v856 = vunpack.c.0.s8 %v855
    %v857 = vlaneseq
    %v858 = vshrl.u32 %v857, 7
    %v859 = vsub.s32 %v856, %v858
    %v860 = vrot.slane %v846, %v859
    %v861 = vcombine.low %v674, %v676
    %v862 = vcombine.high %v674, %v676
    %v864 = vunpack.c.l.s4 1983009808
    %v865 = vunpack.c.0.s8 %v864
    %v866 = vlaneseq
    %v867 = vshrl.u32 %v866, 7
    %v868 = vsub.s32 %v865, %v867
    %v869 = vrot.slane %v861, %v868
    %v871 = vunpack.c.l.s4 1983009808
    %v872 = vunpack.c.0.s8 %v871
    %v873 = vlaneseq
    %v874 = vshrl.u32 %v873, 7
    %v875 = vsub.s32 %v872, %v874
    %v876 = vrot.slane %v862, %v875
    %v877 = vcombine.low %v821, %v837
    %v878 = vcombine.high %v821, %v837
    %v880 = vunpack.c.l.s4 1934713408
    %v881 = vunpack.c.0.s8 %v880
    %v882 = vlaneseq
    %v883 = vshrl.u32 %v882, 7
    %v884 = vsub.s32 %v881, %v883
    %v885 = vrot.slane %v877, %v884
    %v887 = vunpack.c.l.s4 1934713408
    %v888 = vunpack.c.0.s8 %v887
    %v889 = vlaneseq
    %v890 = vshrl.u32 %v889, 7
    %v891 = vsub.s32 %v888, %v890
    %v892 = vrot.slane %v878, %v891
    %v893 = vcombine.low %v828, %v844
    %v894 = vcombine.high %v828, %v844
    %v896 = vunpack.c.l.s4 1934713408
    %v897 = vunpack.c.0.s8 %v896
    %v898 = vlaneseq
    %v899 = vshrl.u32 %v898, 7
    %v900 = vsub.s32 %v897, %v899
    %v901 = vrot.slane %v893, %v900
    %v903 = vunpack.c.l.s4 1934713408
    %v904 = vunpack.c.0.s8 %v903
    %v905 = vlaneseq
    %v906 = vshrl.u32 %v905, 7
    %v907 = vsub.s32 %v904, %v906
    %v908 = vrot.slane %v894, %v907
    %v909 = vcombine.low %v853, %v869
    %v910 = vcombine.high %v853, %v869
    %v912 = vunpack.c.l.s4 1934713408
    %v913 = vunpack.c.0.s8 %v912
    %v914 = vlaneseq
    %v915 = vshrl.u32 %v914, 7
    %v916 = vsub.s32 %v913, %v915
    %v917 = vrot.slane %v909, %v916
    %v919 = vunpack.c.l.s4 1934713408
    %v920 = vunpack.c.0.s8 %v919
    %v921 = vlaneseq
    %v922 = vshrl.u32 %v921, 7
    %v923 = vsub.s32 %v920, %v922
    %v924 = vrot.slane %v910, %v923
    %v925 = vcombine.low %v860, %v876
    %v926 = vcombine.high %v860, %v876
    %v928 = vunpack.c.l.s4 1934713408
    %v929 = vunpack.c.0.s8 %v928
    %v930 = vlaneseq
    %v931 = vshrl.u32 %v930, 7
    %v932 = vsub.s32 %v929, %v931
    %v933 = vrot.slane %v925, %v932
    %v935 = vunpack.c.l.s4 1934713408
    %v936 = vunpack.c.0.s8 %v935
    %v937 = vlaneseq
    %v938 = vshrl.u32 %v937, 7
    %v939 = vsub.s32 %v936, %v938
    %v940 = vrot.slane %v926, %v939
    %v941 = vcombine.low %v885, %v917
    %v942 = vcombine.high %v885, %v917
    %v943 = vcombine.low %v892, %v924
    %v944 = vcombine.high %v892, %v924
    %v945 = vcombine.low %v901, %v933
    %v946 = vcombine.high %v901, %v933
    %v947 = vcombine.low %v908, %v940
    %v948 = vcombine.high %v908, %v940
    %v949 = vpack.c.bf16 %v941, %v805
    %v950 = vpack.c.bf16 %v942, %v806
    %v951 = vpack.c.bf16 %v943, %v807
    %v952 = vpack.c.bf16 %v944, %v808
    %v953 = vpack.c.bf16 %v945, %v809
    %v954 = vpack.c.bf16 %v946, %v810
    %v955 = vpack.c.bf16 %v947, %v811
    %v956 = vpack.c.bf16 %v948, %v812
    %959 = vrot.lane.b32.xlu0 %v359, 112
    %v960 = vpop.permute.xlu0 %959
    %961 = vrot.lane.b32.xlu0 %v360, 112
    %v962 = vpop.permute.xlu0 %961
    %965 = vrot.lane.b32.xlu0 %v359, 96
    %v966 = vpop.permute.xlu0 %965
    %967 = vrot.lane.b32.xlu0 %v360, 96
    %v968 = vpop.permute.xlu0 %967
    %971 = vrot.lane.b32.xlu0 %v359, 80
    %v972 = vpop.permute.xlu0 %971
    %973 = vrot.lane.b32.xlu0 %v360, 80
    %v974 = vpop.permute.xlu0 %973
    %977 = vrot.lane.b32.xlu0 %v359, 64
    %v978 = vpop.permute.xlu0 %977
    %979 = vrot.lane.b32.xlu0 %v360, 64
    %v980 = vpop.permute.xlu0 %979
    %983 = vrot.lane.b32.xlu0 %v359, 48
    %v984 = vpop.permute.xlu0 %983
    %985 = vrot.lane.b32.xlu0 %v360, 48
    %v986 = vpop.permute.xlu0 %985
    %989 = vrot.lane.b32.xlu0 %v359, 32
    %v990 = vpop.permute.xlu0 %989
    %991 = vrot.lane.b32.xlu0 %v360, 32
    %v992 = vpop.permute.xlu0 %991
    %995 = vrot.lane.b32.xlu0 %v359, 16
    %v996 = vpop.permute.xlu0 %995
    %997 = vrot.lane.b32.xlu0 %v360, 16
    %v998 = vpop.permute.xlu0 %997
    %v1001 = vcombine.low %v359, %v966
    %v1002 = vcombine.high %v359, %v966
    %v1004 = vunpack.c.l.s4 1983009808
    %v1005 = vunpack.c.0.s8 %v1004
    %v1006 = vlaneseq
    %v1007 = vshrl.u32 %v1006, 7
    %v1008 = vsub.s32 %v1005, %v1007
    %v1009 = vrot.slane %v1001, %v1008
    %v1011 = vunpack.c.l.s4 1983009808
    %v1012 = vunpack.c.0.s8 %v1011
    %v1013 = vlaneseq
    %v1014 = vshrl.u32 %v1013, 7
    %v1015 = vsub.s32 %v1012, %v1014
    %v1016 = vrot.slane %v1002, %v1015
    %v1017 = vcombine.low %v960, %v972
    %v1018 = vcombine.high %v960, %v972
    %v1020 = vunpack.c.l.s4 1983009808
    %v1021 = vunpack.c.0.s8 %v1020
    %v1022 = vlaneseq
    %v1023 = vshrl.u32 %v1022, 7
    %v1024 = vsub.s32 %v1021, %v1023
    %v1025 = vrot.slane %v1017, %v1024
    %v1027 = vunpack.c.l.s4 1983009808
    %v1028 = vunpack.c.0.s8 %v1027
    %v1029 = vlaneseq
    %v1030 = vshrl.u32 %v1029, 7
    %v1031 = vsub.s32 %v1028, %v1030
    %v1032 = vrot.slane %v1018, %v1031
    %v1033 = vcombine.low %v978, %v990
    %v1034 = vcombine.high %v978, %v990
    %v1036 = vunpack.c.l.s4 1983009808
    %v1037 = vunpack.c.0.s8 %v1036
    %v1038 = vlaneseq
    %v1039 = vshrl.u32 %v1038, 7
    %v1040 = vsub.s32 %v1037, %v1039
    %v1041 = vrot.slane %v1033, %v1040
    %v1043 = vunpack.c.l.s4 1983009808
    %v1044 = vunpack.c.0.s8 %v1043
    %v1045 = vlaneseq
    %v1046 = vshrl.u32 %v1045, 7
    %v1047 = vsub.s32 %v1044, %v1046
    %v1048 = vrot.slane %v1034, %v1047
    %v1049 = vcombine.low %v984, %v996
    %v1050 = vcombine.high %v984, %v996
    %v1052 = vunpack.c.l.s4 1983009808
    %v1053 = vunpack.c.0.s8 %v1052
    %v1054 = vlaneseq
    %v1055 = vshrl.u32 %v1054, 7
    %v1056 = vsub.s32 %v1053, %v1055
    %v1057 = vrot.slane %v1049, %v1056
    %v1059 = vunpack.c.l.s4 1983009808
    %v1060 = vunpack.c.0.s8 %v1059
    %v1061 = vlaneseq
    %v1062 = vshrl.u32 %v1061, 7
    %v1063 = vsub.s32 %v1060, %v1062
    %v1064 = vrot.slane %v1050, %v1063
    %v1065 = vcombine.low %v1009, %v1025
    %v1066 = vcombine.high %v1009, %v1025
    %v1068 = vunpack.c.l.s4 1934713408
    %v1069 = vunpack.c.0.s8 %v1068
    %v1070 = vlaneseq
    %v1071 = vshrl.u32 %v1070, 7
    %v1072 = vsub.s32 %v1069, %v1071
    %v1073 = vrot.slane %v1065, %v1072
    %v1075 = vunpack.c.l.s4 1934713408
    %v1076 = vunpack.c.0.s8 %v1075
    %v1077 = vlaneseq
    %v1078 = vshrl.u32 %v1077, 7
    %v1079 = vsub.s32 %v1076, %v1078
    %v1080 = vrot.slane %v1066, %v1079
    %v1081 = vcombine.low %v1016, %v1032
    %v1082 = vcombine.high %v1016, %v1032
    %v1084 = vunpack.c.l.s4 1934713408
    %v1085 = vunpack.c.0.s8 %v1084
    %v1086 = vlaneseq
    %v1087 = vshrl.u32 %v1086, 7
    %v1088 = vsub.s32 %v1085, %v1087
    %v1089 = vrot.slane %v1081, %v1088
    %v1091 = vunpack.c.l.s4 1934713408
    %v1092 = vunpack.c.0.s8 %v1091
    %v1093 = vlaneseq
    %v1094 = vshrl.u32 %v1093, 7
    %v1095 = vsub.s32 %v1092, %v1094
    %v1096 = vrot.slane %v1082, %v1095
    %v1097 = vcombine.low %v1041, %v1057
    %v1098 = vcombine.high %v1041, %v1057
    %v1100 = vunpack.c.l.s4 1934713408
    %v1101 = vunpack.c.0.s8 %v1100
    %v1102 = vlaneseq
    %v1103 = vshrl.u32 %v1102, 7
    %v1104 = vsub.s32 %v1101, %v1103
    %v1105 = vrot.slane %v1097, %v1104
    %v1107 = vunpack.c.l.s4 1934713408
    %v1108 = vunpack.c.0.s8 %v1107
    %v1109 = vlaneseq
    %v1110 = vshrl.u32 %v1109, 7
    %v1111 = vsub.s32 %v1108, %v1110
    %v1112 = vrot.slane %v1098, %v1111
    %v1113 = vcombine.low %v1048, %v1064
    %v1114 = vcombine.high %v1048, %v1064
    %v1116 = vunpack.c.l.s4 1934713408
    %v1117 = vunpack.c.0.s8 %v1116
    %v1118 = vlaneseq
    %v1119 = vshrl.u32 %v1118, 7
    %v1120 = vsub.s32 %v1117, %v1119
    %v1121 = vrot.slane %v1113, %v1120
    %v1123 = vunpack.c.l.s4 1934713408
    %v1124 = vunpack.c.0.s8 %v1123
    %v1125 = vlaneseq
    %v1126 = vshrl.u32 %v1125, 7
    %v1127 = vsub.s32 %v1124, %v1126
    %v1128 = vrot.slane %v1114, %v1127
    %v1129 = vcombine.low %v1073, %v1105
    %v1130 = vcombine.high %v1073, %v1105
    %v1131 = vcombine.low %v1080, %v1112
    %v1132 = vcombine.high %v1080, %v1112
    %v1133 = vcombine.low %v1089, %v1121
    %v1134 = vcombine.high %v1089, %v1121
    %v1135 = vcombine.low %v1096, %v1128
    %v1136 = vcombine.high %v1096, %v1128
    %v1137 = vcombine.low %v360, %v968
    %v1138 = vcombine.high %v360, %v968
    %v1140 = vunpack.c.l.s4 1983009808
    %v1141 = vunpack.c.0.s8 %v1140
    %v1142 = vlaneseq
    %v1143 = vshrl.u32 %v1142, 7
    %v1144 = vsub.s32 %v1141, %v1143
    %v1145 = vrot.slane %v1137, %v1144
    %v1147 = vunpack.c.l.s4 1983009808
    %v1148 = vunpack.c.0.s8 %v1147
    %v1149 = vlaneseq
    %v1150 = vshrl.u32 %v1149, 7
    %v1151 = vsub.s32 %v1148, %v1150
    %v1152 = vrot.slane %v1138, %v1151
    %v1153 = vcombine.low %v962, %v974
    %v1154 = vcombine.high %v962, %v974
    %v1156 = vunpack.c.l.s4 1983009808
    %v1157 = vunpack.c.0.s8 %v1156
    %v1158 = vlaneseq
    %v1159 = vshrl.u32 %v1158, 7
    %v1160 = vsub.s32 %v1157, %v1159
    %v1161 = vrot.slane %v1153, %v1160
    %v1163 = vunpack.c.l.s4 1983009808
    %v1164 = vunpack.c.0.s8 %v1163
    %v1165 = vlaneseq
    %v1166 = vshrl.u32 %v1165, 7
    %v1167 = vsub.s32 %v1164, %v1166
    %v1168 = vrot.slane %v1154, %v1167
    %v1169 = vcombine.low %v980, %v992
    %v1170 = vcombine.high %v980, %v992
    %v1172 = vunpack.c.l.s4 1983009808
    %v1173 = vunpack.c.0.s8 %v1172
    %v1174 = vlaneseq
    %v1175 = vshrl.u32 %v1174, 7
    %v1176 = vsub.s32 %v1173, %v1175
    %v1177 = vrot.slane %v1169, %v1176
    %v1179 = vunpack.c.l.s4 1983009808
    %v1180 = vunpack.c.0.s8 %v1179
    %v1181 = vlaneseq
    %v1182 = vshrl.u32 %v1181, 7
    %v1183 = vsub.s32 %v1180, %v1182
    %v1184 = vrot.slane %v1170, %v1183
    %v1185 = vcombine.low %v986, %v998
    %v1186 = vcombine.high %v986, %v998
    %v1188 = vunpack.c.l.s4 1983009808
    %v1189 = vunpack.c.0.s8 %v1188
    %v1190 = vlaneseq
    %v1191 = vshrl.u32 %v1190, 7
    %v1192 = vsub.s32 %v1189, %v1191
    %v1193 = vrot.slane %v1185, %v1192
    %v1195 = vunpack.c.l.s4 1983009808
    %v1196 = vunpack.c.0.s8 %v1195
    %v1197 = vlaneseq
    %v1198 = vshrl.u32 %v1197, 7
    %v1199 = vsub.s32 %v1196, %v1198
    %v1200 = vrot.slane %v1186, %v1199
    %v1201 = vcombine.low %v1145, %v1161
    %v1202 = vcombine.high %v1145, %v1161
    %v1204 = vunpack.c.l.s4 1934713408
    %v1205 = vunpack.c.0.s8 %v1204
    %v1206 = vlaneseq
    %v1207 = vshrl.u32 %v1206, 7
    %v1208 = vsub.s32 %v1205, %v1207
    %v1209 = vrot.slane %v1201, %v1208
    %v1211 = vunpack.c.l.s4 1934713408
    %v1212 = vunpack.c.0.s8 %v1211
    %v1213 = vlaneseq
    %v1214 = vshrl.u32 %v1213, 7
    %v1215 = vsub.s32 %v1212, %v1214
    %v1216 = vrot.slane %v1202, %v1215
    %v1217 = vcombine.low %v1152, %v1168
    %v1218 = vcombine.high %v1152, %v1168
    %v1220 = vunpack.c.l.s4 1934713408
    %v1221 = vunpack.c.0.s8 %v1220
    %v1222 = vlaneseq
    %v1223 = vshrl.u32 %v1222, 7
    %v1224 = vsub.s32 %v1221, %v1223
    %v1225 = vrot.slane %v1217, %v1224
    %v1227 = vunpack.c.l.s4 1934713408
    %v1228 = vunpack.c.0.s8 %v1227
    %v1229 = vlaneseq
    %v1230 = vshrl.u32 %v1229, 7
    %v1231 = vsub.s32 %v1228, %v1230
    %v1232 = vrot.slane %v1218, %v1231
    %v1233 = vcombine.low %v1177, %v1193
    %v1234 = vcombine.high %v1177, %v1193
    %v1236 = vunpack.c.l.s4 1934713408
    %v1237 = vunpack.c.0.s8 %v1236
    %v1238 = vlaneseq
    %v1239 = vshrl.u32 %v1238, 7
    %v1240 = vsub.s32 %v1237, %v1239
    %v1241 = vrot.slane %v1233, %v1240
    %v1243 = vunpack.c.l.s4 1934713408
    %v1244 = vunpack.c.0.s8 %v1243
    %v1245 = vlaneseq
    %v1246 = vshrl.u32 %v1245, 7
    %v1247 = vsub.s32 %v1244, %v1246
    %v1248 = vrot.slane %v1234, %v1247
    %v1249 = vcombine.low %v1184, %v1200
    %v1250 = vcombine.high %v1184, %v1200
    %v1252 = vunpack.c.l.s4 1934713408
    %v1253 = vunpack.c.0.s8 %v1252
    %v1254 = vlaneseq
    %v1255 = vshrl.u32 %v1254, 7
    %v1256 = vsub.s32 %v1253, %v1255
    %v1257 = vrot.slane %v1249, %v1256
    %v1259 = vunpack.c.l.s4 1934713408
    %v1260 = vunpack.c.0.s8 %v1259
    %v1261 = vlaneseq
    %v1262 = vshrl.u32 %v1261, 7
    %v1263 = vsub.s32 %v1260, %v1262
    %v1264 = vrot.slane %v1250, %v1263
    %v1265 = vcombine.low %v1209, %v1241
    %v1266 = vcombine.high %v1209, %v1241
    %v1267 = vcombine.low %v1216, %v1248
    %v1268 = vcombine.high %v1216, %v1248
    %v1269 = vcombine.low %v1225, %v1257
    %v1270 = vcombine.high %v1225, %v1257
    %v1271 = vcombine.low %v1232, %v1264
    %v1272 = vcombine.high %v1232, %v1264
    %v1273 = vcombine.low %v1129, %v1131
    %v1274 = vcombine.high %v1129, %v1131
    %v1276 = vunpack.c.l.s4 1983009808
    %v1277 = vunpack.c.0.s8 %v1276
    %v1278 = vlaneseq
    %v1279 = vshrl.u32 %v1278, 7
    %v1280 = vsub.s32 %v1277, %v1279
    %v1281 = vrot.slane %v1273, %v1280
    %v1283 = vunpack.c.l.s4 1983009808
    %v1284 = vunpack.c.0.s8 %v1283
    %v1285 = vlaneseq
    %v1286 = vshrl.u32 %v1285, 7
    %v1287 = vsub.s32 %v1284, %v1286
    %v1288 = vrot.slane %v1274, %v1287
    %v1289 = vcombine.low %v1130, %v1132
    %v1290 = vcombine.high %v1130, %v1132
    %v1292 = vunpack.c.l.s4 1983009808
    %v1293 = vunpack.c.0.s8 %v1292
    %v1294 = vlaneseq
    %v1295 = vshrl.u32 %v1294, 7
    %v1296 = vsub.s32 %v1293, %v1295
    %v1297 = vrot.slane %v1289, %v1296
    %v1299 = vunpack.c.l.s4 1983009808
    %v1300 = vunpack.c.0.s8 %v1299
    %v1301 = vlaneseq
    %v1302 = vshrl.u32 %v1301, 7
    %v1303 = vsub.s32 %v1300, %v1302
    %v1304 = vrot.slane %v1290, %v1303
    %v1305 = vcombine.low %v1133, %v1135
    %v1306 = vcombine.high %v1133, %v1135
    %v1308 = vunpack.c.l.s4 1983009808
    %v1309 = vunpack.c.0.s8 %v1308
    %v1310 = vlaneseq
    %v1311 = vshrl.u32 %v1310, 7
    %v1312 = vsub.s32 %v1309, %v1311
    %v1313 = vrot.slane %v1305, %v1312
    %v1315 = vunpack.c.l.s4 1983009808
    %v1316 = vunpack.c.0.s8 %v1315
    %v1317 = vlaneseq
    %v1318 = vshrl.u32 %v1317, 7
    %v1319 = vsub.s32 %v1316, %v1318
    %v1320 = vrot.slane %v1306, %v1319
    %v1321 = vcombine.low %v1134, %v1136
    %v1322 = vcombine.high %v1134, %v1136
    %v1324 = vunpack.c.l.s4 1983009808
    %v1325 = vunpack.c.0.s8 %v1324
    %v1326 = vlaneseq
    %v1327 = vshrl.u32 %v1326, 7
    %v1328 = vsub.s32 %v1325, %v1327
    %v1329 = vrot.slane %v1321, %v1328
    %v1331 = vunpack.c.l.s4 1983009808
    %v1332 = vunpack.c.0.s8 %v1331
    %v1333 = vlaneseq
    %v1334 = vshrl.u32 %v1333, 7
    %v1335 = vsub.s32 %v1332, %v1334
    %v1336 = vrot.slane %v1322, %v1335
    %v1337 = vcombine.low %v1281, %v1297
    %v1338 = vcombine.high %v1281, %v1297
    %v1340 = vunpack.c.l.s4 1934713408
    %v1341 = vunpack.c.0.s8 %v1340
    %v1342 = vlaneseq
    %v1343 = vshrl.u32 %v1342, 7
    %v1344 = vsub.s32 %v1341, %v1343
    %v1345 = vrot.slane %v1337, %v1344
    %v1347 = vunpack.c.l.s4 1934713408
    %v1348 = vunpack.c.0.s8 %v1347
    %v1349 = vlaneseq
    %v1350 = vshrl.u32 %v1349, 7
    %v1351 = vsub.s32 %v1348, %v1350
    %v1352 = vrot.slane %v1338, %v1351
    %v1353 = vcombine.low %v1288, %v1304
    %v1354 = vcombine.high %v1288, %v1304
    %v1356 = vunpack.c.l.s4 1934713408
    %v1357 = vunpack.c.0.s8 %v1356
    %v1358 = vlaneseq
    %v1359 = vshrl.u32 %v1358, 7
    %v1360 = vsub.s32 %v1357, %v1359
    %v1361 = vrot.slane %v1353, %v1360
    %v1363 = vunpack.c.l.s4 1934713408
    %v1364 = vunpack.c.0.s8 %v1363
    %v1365 = vlaneseq
    %v1366 = vshrl.u32 %v1365, 7
    %v1367 = vsub.s32 %v1364, %v1366
    %v1368 = vrot.slane %v1354, %v1367
    %v1369 = vcombine.low %v1313, %v1329
    %v1370 = vcombine.high %v1313, %v1329
    %v1372 = vunpack.c.l.s4 1934713408
    %v1373 = vunpack.c.0.s8 %v1372
    %v1374 = vlaneseq
    %v1375 = vshrl.u32 %v1374, 7
    %v1376 = vsub.s32 %v1373, %v1375
    %v1377 = vrot.slane %v1369, %v1376
    %v1379 = vunpack.c.l.s4 1934713408
    %v1380 = vunpack.c.0.s8 %v1379
    %v1381 = vlaneseq
    %v1382 = vshrl.u32 %v1381, 7
    %v1383 = vsub.s32 %v1380, %v1382
    %v1384 = vrot.slane %v1370, %v1383
    %v1385 = vcombine.low %v1320, %v1336
    %v1386 = vcombine.high %v1320, %v1336
    %v1388 = vunpack.c.l.s4 1934713408
    %v1389 = vunpack.c.0.s8 %v1388
    %v1390 = vlaneseq
    %v1391 = vshrl.u32 %v1390, 7
    %v1392 = vsub.s32 %v1389, %v1391
    %v1393 = vrot.slane %v1385, %v1392
    %v1395 = vunpack.c.l.s4 1934713408
    %v1396 = vunpack.c.0.s8 %v1395
    %v1397 = vlaneseq
    %v1398 = vshrl.u32 %v1397, 7
    %v1399 = vsub.s32 %v1396, %v1398
    %v1400 = vrot.slane %v1386, %v1399
    %v1401 = vcombine.low %v1345, %v1377
    %v1402 = vcombine.high %v1345, %v1377
    %v1403 = vcombine.low %v1352, %v1384
    %v1404 = vcombine.high %v1352, %v1384
    %v1405 = vcombine.low %v1361, %v1393
    %v1406 = vcombine.high %v1361, %v1393
    %v1407 = vcombine.low %v1368, %v1400
    %v1408 = vcombine.high %v1368, %v1400
    %v1409 = vcombine.low %v1265, %v1267
    %v1410 = vcombine.high %v1265, %v1267
    %v1412 = vunpack.c.l.s4 1983009808
    %v1413 = vunpack.c.0.s8 %v1412
    %v1414 = vlaneseq
    %v1415 = vshrl.u32 %v1414, 7
    %v1416 = vsub.s32 %v1413, %v1415
    %v1417 = vrot.slane %v1409, %v1416
    %v1419 = vunpack.c.l.s4 1983009808
    %v1420 = vunpack.c.0.s8 %v1419
    %v1421 = vlaneseq
    %v1422 = vshrl.u32 %v1421, 7
    %v1423 = vsub.s32 %v1420, %v1422
    %v1424 = vrot.slane %v1410, %v1423
    %v1425 = vcombine.low %v1266, %v1268
    %v1426 = vcombine.high %v1266, %v1268
    %v1428 = vunpack.c.l.s4 1983009808
    %v1429 = vunpack.c.0.s8 %v1428
    %v1430 = vlaneseq
    %v1431 = vshrl.u32 %v1430, 7
    %v1432 = vsub.s32 %v1429, %v1431
    %v1433 = vrot.slane %v1425, %v1432
    %v1435 = vunpack.c.l.s4 1983009808
    %v1436 = vunpack.c.0.s8 %v1435
    %v1437 = vlaneseq
    %v1438 = vshrl.u32 %v1437, 7
    %v1439 = vsub.s32 %v1436, %v1438
    %v1440 = vrot.slane %v1426, %v1439
    %v1441 = vcombine.low %v1269, %v1271
    %v1442 = vcombine.high %v1269, %v1271
    %v1444 = vunpack.c.l.s4 1983009808
    %v1445 = vunpack.c.0.s8 %v1444
    %v1446 = vlaneseq
    %v1447 = vshrl.u32 %v1446, 7
    %v1448 = vsub.s32 %v1445, %v1447
    %v1449 = vrot.slane %v1441, %v1448
    %v1451 = vunpack.c.l.s4 1983009808
    %v1452 = vunpack.c.0.s8 %v1451
    %v1453 = vlaneseq
    %v1454 = vshrl.u32 %v1453, 7
    %v1455 = vsub.s32 %v1452, %v1454
    %v1456 = vrot.slane %v1442, %v1455
    %v1457 = vcombine.low %v1270, %v1272
    %v1458 = vcombine.high %v1270, %v1272
    %v1460 = vunpack.c.l.s4 1983009808
    %v1461 = vunpack.c.0.s8 %v1460
    %v1462 = vlaneseq
    %v1463 = vshrl.u32 %v1462, 7
    %v1464 = vsub.s32 %v1461, %v1463
    %v1465 = vrot.slane %v1457, %v1464
    %v1467 = vunpack.c.l.s4 1983009808
    %v1468 = vunpack.c.0.s8 %v1467
    %v1469 = vlaneseq
    %v1470 = vshrl.u32 %v1469, 7
    %v1471 = vsub.s32 %v1468, %v1470
    %v1472 = vrot.slane %v1458, %v1471
    %v1473 = vcombine.low %v1417, %v1433
    %v1474 = vcombine.high %v1417, %v1433
    %v1476 = vunpack.c.l.s4 1934713408
    %v1477 = vunpack.c.0.s8 %v1476
    %v1478 = vlaneseq
    %v1479 = vshrl.u32 %v1478, 7
    %v1480 = vsub.s32 %v1477, %v1479
    %v1481 = vrot.slane %v1473, %v1480
    %v1483 = vunpack.c.l.s4 1934713408
    %v1484 = vunpack.c.0.s8 %v1483
    %v1485 = vlaneseq
    %v1486 = vshrl.u32 %v1485, 7
    %v1487 = vsub.s32 %v1484, %v1486
    %v1488 = vrot.slane %v1474, %v1487
    %v1489 = vcombine.low %v1424, %v1440
    %v1490 = vcombine.high %v1424, %v1440
    %v1492 = vunpack.c.l.s4 1934713408
    %v1493 = vunpack.c.0.s8 %v1492
    %v1494 = vlaneseq
    %v1495 = vshrl.u32 %v1494, 7
    %v1496 = vsub.s32 %v1493, %v1495
    %v1497 = vrot.slane %v1489, %v1496
    %v1499 = vunpack.c.l.s4 1934713408
    %v1500 = vunpack.c.0.s8 %v1499
    %v1501 = vlaneseq
    %v1502 = vshrl.u32 %v1501, 7
    %v1503 = vsub.s32 %v1500, %v1502
    %v1504 = vrot.slane %v1490, %v1503
    %v1505 = vcombine.low %v1449, %v1465
    %v1506 = vcombine.high %v1449, %v1465
    %v1508 = vunpack.c.l.s4 1934713408
    %v1509 = vunpack.c.0.s8 %v1508
    %v1510 = vlaneseq
    %v1511 = vshrl.u32 %v1510, 7
    %v1512 = vsub.s32 %v1509, %v1511
    %v1513 = vrot.slane %v1505, %v1512
    %v1515 = vunpack.c.l.s4 1934713408
    %v1516 = vunpack.c.0.s8 %v1515
    %v1517 = vlaneseq
    %v1518 = vshrl.u32 %v1517, 7
    %v1519 = vsub.s32 %v1516, %v1518
    %v1520 = vrot.slane %v1506, %v1519
    %v1521 = vcombine.low %v1456, %v1472
    %v1522 = vcombine.high %v1456, %v1472
    %v1524 = vunpack.c.l.s4 1934713408
    %v1525 = vunpack.c.0.s8 %v1524
    %v1526 = vlaneseq
    %v1527 = vshrl.u32 %v1526, 7
    %v1528 = vsub.s32 %v1525, %v1527
    %v1529 = vrot.slane %v1521, %v1528
    %v1531 = vunpack.c.l.s4 1934713408
    %v1532 = vunpack.c.0.s8 %v1531
    %v1533 = vlaneseq
    %v1534 = vshrl.u32 %v1533, 7
    %v1535 = vsub.s32 %v1532, %v1534
    %v1536 = vrot.slane %v1522, %v1535
    %v1537 = vcombine.low %v1481, %v1513
    %v1538 = vcombine.high %v1481, %v1513
    %v1539 = vcombine.low %v1488, %v1520
    %v1540 = vcombine.high %v1488, %v1520
    %v1541 = vcombine.low %v1497, %v1529
    %v1542 = vcombine.high %v1497, %v1529
    %v1543 = vcombine.low %v1504, %v1536
    %v1544 = vcombine.high %v1504, %v1536
    %v1545 = vpack.c.bf16 %v1537, %v1401
    %v1546 = vpack.c.bf16 %v1538, %v1402
    %v1547 = vpack.c.bf16 %v1539, %v1403
    %v1548 = vpack.c.bf16 %v1540, %v1404
    %v1549 = vpack.c.bf16 %v1541, %v1405
    %v1550 = vpack.c.bf16 %v1542, %v1406
    %v1551 = vpack.c.bf16 %v1543, %v1407
    %v1552 = vpack.c.bf16 %v1544, %v1408
    %1555 = vrot.lane.b32.xlu0 %v331, 112
    %v1556 = vpop.permute.xlu0 %1555
    %1557 = vrot.lane.b32.xlu0 %v334, 112
    %v1558 = vpop.permute.xlu0 %1557
    %1561 = vrot.lane.b32.xlu0 %v331, 96
    %v1562 = vpop.permute.xlu0 %1561
    %1563 = vrot.lane.b32.xlu0 %v334, 96
    %v1564 = vpop.permute.xlu0 %1563
    %1567 = vrot.lane.b32.xlu0 %v331, 80
    %v1568 = vpop.permute.xlu0 %1567
    %1569 = vrot.lane.b32.xlu0 %v334, 80
    %v1570 = vpop.permute.xlu0 %1569
    %1573 = vrot.lane.b32.xlu0 %v331, 64
    %v1574 = vpop.permute.xlu0 %1573
    %1575 = vrot.lane.b32.xlu0 %v334, 64
    %v1576 = vpop.permute.xlu0 %1575
    %1579 = vrot.lane.b32.xlu0 %v331, 48
    %v1580 = vpop.permute.xlu0 %1579
    %1581 = vrot.lane.b32.xlu0 %v334, 48
    %v1582 = vpop.permute.xlu0 %1581
    %1585 = vrot.lane.b32.xlu0 %v331, 32
    %v1586 = vpop.permute.xlu0 %1585
    %1587 = vrot.lane.b32.xlu0 %v334, 32
    %v1588 = vpop.permute.xlu0 %1587
    %1591 = vrot.lane.b32.xlu0 %v331, 16
    %v1592 = vpop.permute.xlu0 %1591
    %1593 = vrot.lane.b32.xlu0 %v334, 16
    %v1594 = vpop.permute.xlu0 %1593
    %v1597 = vcombine.low %v331, %v1562
    %v1598 = vcombine.high %v331, %v1562
    %v1600 = vunpack.c.l.s4 1983009808
    %v1601 = vunpack.c.0.s8 %v1600
    %v1602 = vlaneseq
    %v1603 = vshrl.u32 %v1602, 7
    %v1604 = vsub.s32 %v1601, %v1603
    %v1605 = vrot.slane %v1597, %v1604
    %v1607 = vunpack.c.l.s4 1983009808
    %v1608 = vunpack.c.0.s8 %v1607
    %v1609 = vlaneseq
    %v1610 = vshrl.u32 %v1609, 7
    %v1611 = vsub.s32 %v1608, %v1610
    %v1612 = vrot.slane %v1598, %v1611
    %v1613 = vcombine.low %v1556, %v1568
    %v1614 = vcombine.high %v1556, %v1568
    %v1616 = vunpack.c.l.s4 1983009808
    %v1617 = vunpack.c.0.s8 %v1616
    %v1618 = vlaneseq
    %v1619 = vshrl.u32 %v1618, 7
    %v1620 = vsub.s32 %v1617, %v1619
    %v1621 = vrot.slane %v1613, %v1620
    %v1623 = vunpack.c.l.s4 1983009808
    %v1624 = vunpack.c.0.s8 %v1623
    %v1625 = vlaneseq
    %v1626 = vshrl.u32 %v1625, 7
    %v1627 = vsub.s32 %v1624, %v1626
    %v1628 = vrot.slane %v1614, %v1627
    %v1629 = vcombine.low %v1574, %v1586
    %v1630 = vcombine.high %v1574, %v1586
    %v1632 = vunpack.c.l.s4 1983009808
    %v1633 = vunpack.c.0.s8 %v1632
    %v1634 = vlaneseq
    %v1635 = vshrl.u32 %v1634, 7
    %v1636 = vsub.s32 %v1633, %v1635
    %v1637 = vrot.slane %v1629, %v1636
    %v1639 = vunpack.c.l.s4 1983009808
    %v1640 = vunpack.c.0.s8 %v1639
    %v1641 = vlaneseq
    %v1642 = vshrl.u32 %v1641, 7
    %v1643 = vsub.s32 %v1640, %v1642
    %v1644 = vrot.slane %v1630, %v1643
    %v1645 = vcombine.low %v1580, %v1592
    %v1646 = vcombine.high %v1580, %v1592
    %v1648 = vunpack.c.l.s4 1983009808
    %v1649 = vunpack.c.0.s8 %v1648
    %v1650 = vlaneseq
    %v1651 = vshrl.u32 %v1650, 7
    %v1652 = vsub.s32 %v1649, %v1651
    %v1653 = vrot.slane %v1645, %v1652
    %v1655 = vunpack.c.l.s4 1983009808
    %v1656 = vunpack.c.0.s8 %v1655
    %v1657 = vlaneseq
    %v1658 = vshrl.u32 %v1657, 7
    %v1659 = vsub.s32 %v1656, %v1658
    %v1660 = vrot.slane %v1646, %v1659
    %v1661 = vcombine.low %v1605, %v1621
    %v1662 = vcombine.high %v1605, %v1621
    %v1664 = vunpack.c.l.s4 1934713408
    %v1665 = vunpack.c.0.s8 %v1664
    %v1666 = vlaneseq
    %v1667 = vshrl.u32 %v1666, 7
    %v1668 = vsub.s32 %v1665, %v1667
    %v1669 = vrot.slane %v1661, %v1668
    %v1671 = vunpack.c.l.s4 1934713408
    %v1672 = vunpack.c.0.s8 %v1671
    %v1673 = vlaneseq
    %v1674 = vshrl.u32 %v1673, 7
    %v1675 = vsub.s32 %v1672, %v1674
    %v1676 = vrot.slane %v1662, %v1675
    %v1677 = vcombine.low %v1612, %v1628
    %v1678 = vcombine.high %v1612, %v1628
    %v1680 = vunpack.c.l.s4 1934713408
    %v1681 = vunpack.c.0.s8 %v1680
    %v1682 = vlaneseq
    %v1683 = vshrl.u32 %v1682, 7
    %v1684 = vsub.s32 %v1681, %v1683
    %v1685 = vrot.slane %v1677, %v1684
    %v1687 = vunpack.c.l.s4 1934713408
    %v1688 = vunpack.c.0.s8 %v1687
    %v1689 = vlaneseq
    %v1690 = vshrl.u32 %v1689, 7
    %v1691 = vsub.s32 %v1688, %v1690
    %v1692 = vrot.slane %v1678, %v1691
    %v1693 = vcombine.low %v1637, %v1653
    %v1694 = vcombine.high %v1637, %v1653
    %v1696 = vunpack.c.l.s4 1934713408
    %v1697 = vunpack.c.0.s8 %v1696
    %v1698 = vlaneseq
    %v1699 = vshrl.u32 %v1698, 7
    %v1700 = vsub.s32 %v1697, %v1699
    %v1701 = vrot.slane %v1693, %v1700
    %v1703 = vunpack.c.l.s4 1934713408
    %v1704 = vunpack.c.0.s8 %v1703
    %v1705 = vlaneseq
    %v1706 = vshrl.u32 %v1705, 7
    %v1707 = vsub.s32 %v1704, %v1706
    %v1708 = vrot.slane %v1694, %v1707
    %v1709 = vcombine.low %v1644, %v1660
    %v1710 = vcombine.high %v1644, %v1660
    %v1712 = vunpack.c.l.s4 1934713408
    %v1713 = vunpack.c.0.s8 %v1712
    %v1714 = vlaneseq
    %v1715 = vshrl.u32 %v1714, 7
    %v1716 = vsub.s32 %v1713, %v1715
    %v1717 = vrot.slane %v1709, %v1716
    %v1719 = vunpack.c.l.s4 1934713408
    %v1720 = vunpack.c.0.s8 %v1719
    %v1721 = vlaneseq
    %v1722 = vshrl.u32 %v1721, 7
    %v1723 = vsub.s32 %v1720, %v1722
    %v1724 = vrot.slane %v1710, %v1723
    %v1725 = vcombine.low %v1669, %v1701
    %v1726 = vcombine.high %v1669, %v1701
    %v1727 = vcombine.low %v1676, %v1708
    %v1728 = vcombine.high %v1676, %v1708
    %v1729 = vcombine.low %v1685, %v1717
    %v1730 = vcombine.high %v1685, %v1717
    %v1731 = vcombine.low %v1692, %v1724
    %v1732 = vcombine.high %v1692, %v1724
    %v1733 = vcombine.low %v334, %v1564
    %v1734 = vcombine.high %v334, %v1564
    %v1736 = vunpack.c.l.s4 1983009808
    %v1737 = vunpack.c.0.s8 %v1736
    %v1738 = vlaneseq
    %v1739 = vshrl.u32 %v1738, 7
    %v1740 = vsub.s32 %v1737, %v1739
    %v1741 = vrot.slane %v1733, %v1740
    %v1743 = vunpack.c.l.s4 1983009808
    %v1744 = vunpack.c.0.s8 %v1743
    %v1745 = vlaneseq
    %v1746 = vshrl.u32 %v1745, 7
    %v1747 = vsub.s32 %v1744, %v1746
    %v1748 = vrot.slane %v1734, %v1747
    %v1749 = vcombine.low %v1558, %v1570
    %v1750 = vcombine.high %v1558, %v1570
    %v1752 = vunpack.c.l.s4 1983009808
    %v1753 = vunpack.c.0.s8 %v1752
    %v1754 = vlaneseq
    %v1755 = vshrl.u32 %v1754, 7
    %v1756 = vsub.s32 %v1753, %v1755
    %v1757 = vrot.slane %v1749, %v1756
    %v1759 = vunpack.c.l.s4 1983009808
    %v1760 = vunpack.c.0.s8 %v1759
    %v1761 = vlaneseq
    %v1762 = vshrl.u32 %v1761, 7
    %v1763 = vsub.s32 %v1760, %v1762
    %v1764 = vrot.slane %v1750, %v1763
    %v1765 = vcombine.low %v1576, %v1588
    %v1766 = vcombine.high %v1576, %v1588
    %v1768 = vunpack.c.l.s4 1983009808
    %v1769 = vunpack.c.0.s8 %v1768
    %v1770 = vlaneseq
    %v1771 = vshrl.u32 %v1770, 7
    %v1772 = vsub.s32 %v1769, %v1771
    %v1773 = vrot.slane %v1765, %v1772
    %v1775 = vunpack.c.l.s4 1983009808
    %v1776 = vunpack.c.0.s8 %v1775
    %v1777 = vlaneseq
    %v1778 = vshrl.u32 %v1777, 7
    %v1779 = vsub.s32 %v1776, %v1778
    %v1780 = vrot.slane %v1766, %v1779
    %v1781 = vcombine.low %v1582, %v1594
    %v1782 = vcombine.high %v1582, %v1594
    %v1784 = vunpack.c.l.s4 1983009808
    %v1785 = vunpack.c.0.s8 %v1784
    %v1786 = vlaneseq
    %v1787 = vshrl.u32 %v1786, 7
    %v1788 = vsub.s32 %v1785, %v1787
    %v1789 = vrot.slane %v1781, %v1788
    %v1791 = vunpack.c.l.s4 1983009808
    %v1792 = vunpack.c.0.s8 %v1791
    %v1793 = vlaneseq
    %v1794 = vshrl.u32 %v1793, 7
    %v1795 = vsub.s32 %v1792, %v1794
    %v1796 = vrot.slane %v1782, %v1795
    %v1797 = vcombine.low %v1741, %v1757
    %v1798 = vcombine.high %v1741, %v1757
    %v1800 = vunpack.c.l.s4 1934713408
    %v1801 = vunpack.c.0.s8 %v1800
    %v1802 = vlaneseq
    %v1803 = vshrl.u32 %v1802, 7
    %v1804 = vsub.s32 %v1801, %v1803
    %v1805 = vrot.slane %v1797, %v1804
    %v1807 = vunpack.c.l.s4 1934713408
    %v1808 = vunpack.c.0.s8 %v1807
    %v1809 = vlaneseq
    %v1810 = vshrl.u32 %v1809, 7
    %v1811 = vsub.s32 %v1808, %v1810
    %v1812 = vrot.slane %v1798, %v1811
    %v1813 = vcombine.low %v1748, %v1764
    %v1814 = vcombine.high %v1748, %v1764
    %v1816 = vunpack.c.l.s4 1934713408
    %v1817 = vunpack.c.0.s8 %v1816
    %v1818 = vlaneseq
    %v1819 = vshrl.u32 %v1818, 7
    %v1820 = vsub.s32 %v1817, %v1819
    %v1821 = vrot.slane %v1813, %v1820
    %v1823 = vunpack.c.l.s4 1934713408
    %v1824 = vunpack.c.0.s8 %v1823
    %v1825 = vlaneseq
    %v1826 = vshrl.u32 %v1825, 7
    %v1827 = vsub.s32 %v1824, %v1826
    %v1828 = vrot.slane %v1814, %v1827
    %v1829 = vcombine.low %v1773, %v1789
    %v1830 = vcombine.high %v1773, %v1789
    %v1832 = vunpack.c.l.s4 1934713408
    %v1833 = vunpack.c.0.s8 %v1832
    %v1834 = vlaneseq
    %v1835 = vshrl.u32 %v1834, 7
    %v1836 = vsub.s32 %v1833, %v1835
    %v1837 = vrot.slane %v1829, %v1836
    %v1839 = vunpack.c.l.s4 1934713408
    %v1840 = vunpack.c.0.s8 %v1839
    %v1841 = vlaneseq
    %v1842 = vshrl.u32 %v1841, 7
    %v1843 = vsub.s32 %v1840, %v1842
    %v1844 = vrot.slane %v1830, %v1843
    %v1845 = vcombine.low %v1780, %v1796
    %v1846 = vcombine.high %v1780, %v1796
    %v1848 = vunpack.c.l.s4 1934713408
    %v1849 = vunpack.c.0.s8 %v1848
    %v1850 = vlaneseq
    %v1851 = vshrl.u32 %v1850, 7
    %v1852 = vsub.s32 %v1849, %v1851
    %v1853 = vrot.slane %v1845, %v1852
    %v1855 = vunpack.c.l.s4 1934713408
    %v1856 = vunpack.c.0.s8 %v1855
    %v1857 = vlaneseq
    %v1858 = vshrl.u32 %v1857, 7
    %v1859 = vsub.s32 %v1856, %v1858
    %v1860 = vrot.slane %v1846, %v1859
    %v1861 = vcombine.low %v1805, %v1837
    %v1862 = vcombine.high %v1805, %v1837
    %v1863 = vcombine.low %v1812, %v1844
    %v1864 = vcombine.high %v1812, %v1844
    %v1865 = vcombine.low %v1821, %v1853
    %v1866 = vcombine.high %v1821, %v1853
    %v1867 = vcombine.low %v1828, %v1860
    %v1868 = vcombine.high %v1828, %v1860
    %v1869 = vcombine.low %v1725, %v1727
    %v1870 = vcombine.high %v1725, %v1727
    %v1872 = vunpack.c.l.s4 1983009808
    %v1873 = vunpack.c.0.s8 %v1872
    %v1874 = vlaneseq
    %v1875 = vshrl.u32 %v1874, 7
    %v1876 = vsub.s32 %v1873, %v1875
    %v1877 = vrot.slane %v1869, %v1876
    %v1879 = vunpack.c.l.s4 1983009808
    %v1880 = vunpack.c.0.s8 %v1879
    %v1881 = vlaneseq
    %v1882 = vshrl.u32 %v1881, 7
    %v1883 = vsub.s32 %v1880, %v1882
    %v1884 = vrot.slane %v1870, %v1883
    %v1885 = vcombine.low %v1726, %v1728
    %v1886 = vcombine.high %v1726, %v1728
    %v1888 = vunpack.c.l.s4 1983009808
    %v1889 = vunpack.c.0.s8 %v1888
    %v1890 = vlaneseq
    %v1891 = vshrl.u32 %v1890, 7
    %v1892 = vsub.s32 %v1889, %v1891
    %v1893 = vrot.slane %v1885, %v1892
    %v1895 = vunpack.c.l.s4 1983009808
    %v1896 = vunpack.c.0.s8 %v1895
    %v1897 = vlaneseq
    %v1898 = vshrl.u32 %v1897, 7
    %v1899 = vsub.s32 %v1896, %v1898
    %v1900 = vrot.slane %v1886, %v1899
    %v1901 = vcombine.low %v1729, %v1731
    %v1902 = vcombine.high %v1729, %v1731
    %v1904 = vunpack.c.l.s4 1983009808
    %v1905 = vunpack.c.0.s8 %v1904
    %v1906 = vlaneseq
    %v1907 = vshrl.u32 %v1906, 7
    %v1908 = vsub.s32 %v1905, %v1907
    %v1909 = vrot.slane %v1901, %v1908
    %v1911 = vunpack.c.l.s4 1983009808
    %v1912 = vunpack.c.0.s8 %v1911
    %v1913 = vlaneseq
    %v1914 = vshrl.u32 %v1913, 7
    %v1915 = vsub.s32 %v1912, %v1914
    %v1916 = vrot.slane %v1902, %v1915
    %v1917 = vcombine.low %v1730, %v1732
    %v1918 = vcombine.high %v1730, %v1732
    %v1920 = vunpack.c.l.s4 1983009808
    %v1921 = vunpack.c.0.s8 %v1920
    %v1922 = vlaneseq
    %v1923 = vshrl.u32 %v1922, 7
    %v1924 = vsub.s32 %v1921, %v1923
    %v1925 = vrot.slane %v1917, %v1924
    %v1927 = vunpack.c.l.s4 1983009808
    %v1928 = vunpack.c.0.s8 %v1927
    %v1929 = vlaneseq
    %v1930 = vshrl.u32 %v1929, 7
    %v1931 = vsub.s32 %v1928, %v1930
    %v1932 = vrot.slane %v1918, %v1931
    %v1933 = vcombine.low %v1877, %v1893
    %v1934 = vcombine.high %v1877, %v1893
    %v1936 = vunpack.c.l.s4 1934713408
    %v1937 = vunpack.c.0.s8 %v1936
    %v1938 = vlaneseq
    %v1939 = vshrl.u32 %v1938, 7
    %v1940 = vsub.s32 %v1937, %v1939
    %v1941 = vrot.slane %v1933, %v1940
    %v1943 = vunpack.c.l.s4 1934713408
    %v1944 = vunpack.c.0.s8 %v1943
    %v1945 = vlaneseq
    %v1946 = vshrl.u32 %v1945, 7
    %v1947 = vsub.s32 %v1944, %v1946
    %v1948 = vrot.slane %v1934, %v1947
    %v1949 = vcombine.low %v1884, %v1900
    %v1950 = vcombine.high %v1884, %v1900
    %v1952 = vunpack.c.l.s4 1934713408
    %v1953 = vunpack.c.0.s8 %v1952
    %v1954 = vlaneseq
    %v1955 = vshrl.u32 %v1954, 7
    %v1956 = vsub.s32 %v1953, %v1955
    %v1957 = vrot.slane %v1949, %v1956
    %v1959 = vunpack.c.l.s4 1934713408
    %v1960 = vunpack.c.0.s8 %v1959
    %v1961 = vlaneseq
    %v1962 = vshrl.u32 %v1961, 7
    %v1963 = vsub.s32 %v1960, %v1962
    %v1964 = vrot.slane %v1950, %v1963
    %v1965 = vcombine.low %v1909, %v1925
    %v1966 = vcombine.high %v1909, %v1925
    %v1968 = vunpack.c.l.s4 1934713408
    %v1969 = vunpack.c.0.s8 %v1968
    %v1970 = vlaneseq
    %v1971 = vshrl.u32 %v1970, 7
    %v1972 = vsub.s32 %v1969, %v1971
    %v1973 = vrot.slane %v1965, %v1972
    %v1975 = vunpack.c.l.s4 1934713408
    %v1976 = vunpack.c.0.s8 %v1975
    %v1977 = vlaneseq
    %v1978 = vshrl.u32 %v1977, 7
    %v1979 = vsub.s32 %v1976, %v1978
    %v1980 = vrot.slane %v1966, %v1979
    %v1981 = vcombine.low %v1916, %v1932
    %v1982 = vcombine.high %v1916, %v1932
    %v1984 = vunpack.c.l.s4 1934713408
    %v1985 = vunpack.c.0.s8 %v1984
    %v1986 = vlaneseq
    %v1987 = vshrl.u32 %v1986, 7
    %v1988 = vsub.s32 %v1985, %v1987
    %v1989 = vrot.slane %v1981, %v1988
    %v1991 = vunpack.c.l.s4 1934713408
    %v1992 = vunpack.c.0.s8 %v1991
    %v1993 = vlaneseq
    %v1994 = vshrl.u32 %v1993, 7
    %v1995 = vsub.s32 %v1992, %v1994
    %v1996 = vrot.slane %v1982, %v1995
    %v1997 = vcombine.low %v1941, %v1973
    %v1998 = vcombine.high %v1941, %v1973
    %v1999 = vcombine.low %v1948, %v1980
    %v2000 = vcombine.high %v1948, %v1980
    %v2001 = vcombine.low %v1957, %v1989
    %v2002 = vcombine.high %v1957, %v1989
    %v2003 = vcombine.low %v1964, %v1996
    %v2004 = vcombine.high %v1964, %v1996
    %v2005 = vcombine.low %v1861, %v1863
    %v2006 = vcombine.high %v1861, %v1863
    %v2008 = vunpack.c.l.s4 1983009808
    %v2009 = vunpack.c.0.s8 %v2008
    %v2010 = vlaneseq
    %v2011 = vshrl.u32 %v2010, 7
    %v2012 = vsub.s32 %v2009, %v2011
    %v2013 = vrot.slane %v2005, %v2012
    %v2015 = vunpack.c.l.s4 1983009808
    %v2016 = vunpack.c.0.s8 %v2015
    %v2017 = vlaneseq
    %v2018 = vshrl.u32 %v2017, 7
    %v2019 = vsub.s32 %v2016, %v2018
    %v2020 = vrot.slane %v2006, %v2019
    %v2021 = vcombine.low %v1862, %v1864
    %v2022 = vcombine.high %v1862, %v1864
    %v2024 = vunpack.c.l.s4 1983009808
    %v2025 = vunpack.c.0.s8 %v2024
    %v2026 = vlaneseq
    %v2027 = vshrl.u32 %v2026, 7
    %v2028 = vsub.s32 %v2025, %v2027
    %v2029 = vrot.slane %v2021, %v2028
    %v2031 = vunpack.c.l.s4 1983009808
    %v2032 = vunpack.c.0.s8 %v2031
    %v2033 = vlaneseq
    %v2034 = vshrl.u32 %v2033, 7
    %v2035 = vsub.s32 %v2032, %v2034
    %v2036 = vrot.slane %v2022, %v2035
    %v2037 = vcombine.low %v1865, %v1867
    %v2038 = vcombine.high %v1865, %v1867
    %v2040 = vunpack.c.l.s4 1983009808
    %v2041 = vunpack.c.0.s8 %v2040
    %v2042 = vlaneseq
    %v2043 = vshrl.u32 %v2042, 7
    %v2044 = vsub.s32 %v2041, %v2043
    %v2045 = vrot.slane %v2037, %v2044
    %v2047 = vunpack.c.l.s4 1983009808
    %v2048 = vunpack.c.0.s8 %v2047
    %v2049 = vlaneseq
    %v2050 = vshrl.u32 %v2049, 7
    %v2051 = vsub.s32 %v2048, %v2050
    %v2052 = vrot.slane %v2038, %v2051
    %v2053 = vcombine.low %v1866, %v1868
    %v2054 = vcombine.high %v1866, %v1868
    %v2056 = vunpack.c.l.s4 1983009808
    %v2057 = vunpack.c.0.s8 %v2056
    %v2058 = vlaneseq
    %v2059 = vshrl.u32 %v2058, 7
    %v2060 = vsub.s32 %v2057, %v2059
    %v2061 = vrot.slane %v2053, %v2060
    %v2063 = vunpack.c.l.s4 1983009808
    %v2064 = vunpack.c.0.s8 %v2063
    %v2065 = vlaneseq
    %v2066 = vshrl.u32 %v2065, 7
    %v2067 = vsub.s32 %v2064, %v2066
    %v2068 = vrot.slane %v2054, %v2067
    %v2069 = vcombine.low %v2013, %v2029
    %v2070 = vcombine.high %v2013, %v2029
    %v2072 = vunpack.c.l.s4 1934713408
    %v2073 = vunpack.c.0.s8 %v2072
    %v2074 = vlaneseq
    %v2075 = vshrl.u32 %v2074, 7
    %v2076 = vsub.s32 %v2073, %v2075
    %v2077 = vrot.slane %v2069, %v2076
    %v2079 = vunpack.c.l.s4 1934713408
    %v2080 = vunpack.c.0.s8 %v2079
    %v2081 = vlaneseq
    %v2082 = vshrl.u32 %v2081, 7
    %v2083 = vsub.s32 %v2080, %v2082
    %v2084 = vrot.slane %v2070, %v2083
    %v2085 = vcombine.low %v2020, %v2036
    %v2086 = vcombine.high %v2020, %v2036
    %v2088 = vunpack.c.l.s4 1934713408
    %v2089 = vunpack.c.0.s8 %v2088
    %v2090 = vlaneseq
    %v2091 = vshrl.u32 %v2090, 7
    %v2092 = vsub.s32 %v2089, %v2091
    %v2093 = vrot.slane %v2085, %v2092
    %v2095 = vunpack.c.l.s4 1934713408
    %v2096 = vunpack.c.0.s8 %v2095
    %v2097 = vlaneseq
    %v2098 = vshrl.u32 %v2097, 7
    %v2099 = vsub.s32 %v2096, %v2098
    %v2100 = vrot.slane %v2086, %v2099
    %v2101 = vcombine.low %v2045, %v2061
    %v2102 = vcombine.high %v2045, %v2061
    %v2104 = vunpack.c.l.s4 1934713408
    %v2105 = vunpack.c.0.s8 %v2104
    %v2106 = vlaneseq
    %v2107 = vshrl.u32 %v2106, 7
    %v2108 = vsub.s32 %v2105, %v2107
    %v2109 = vrot.slane %v2101, %v2108
    %v2111 = vunpack.c.l.s4 1934713408
    %v2112 = vunpack.c.0.s8 %v2111
    %v2113 = vlaneseq
    %v2114 = vshrl.u32 %v2113, 7
    %v2115 = vsub.s32 %v2112, %v2114
    %v2116 = vrot.slane %v2102, %v2115
    %v2117 = vcombine.low %v2052, %v2068
    %v2118 = vcombine.high %v2052, %v2068
    %v2120 = vunpack.c.l.s4 1934713408
    %v2121 = vunpack.c.0.s8 %v2120
    %v2122 = vlaneseq
    %v2123 = vshrl.u32 %v2122, 7
    %v2124 = vsub.s32 %v2121, %v2123
    %v2125 = vrot.slane %v2117, %v2124
    %v2127 = vunpack.c.l.s4 1934713408
    %v2128 = vunpack.c.0.s8 %v2127
    %v2129 = vlaneseq
    %v2130 = vshrl.u32 %v2129, 7
    %v2131 = vsub.s32 %v2128, %v2130
    %v2132 = vrot.slane %v2118, %v2131
    %v2133 = vcombine.low %v2077, %v2109
    %v2134 = vcombine.high %v2077, %v2109
    %v2135 = vcombine.low %v2084, %v2116
    %v2136 = vcombine.high %v2084, %v2116
    %v2137 = vcombine.low %v2093, %v2125
    %v2138 = vcombine.high %v2093, %v2125
    %v2139 = vcombine.low %v2100, %v2132
    %v2140 = vcombine.high %v2100, %v2132
    %v2141 = vpack.c.bf16 %v2133, %v1997
    %v2142 = vpack.c.bf16 %v2134, %v1998
    %v2143 = vpack.c.bf16 %v2135, %v1999
    %v2144 = vpack.c.bf16 %v2136, %v2000
    %v2145 = vpack.c.bf16 %v2137, %v2001
    %v2146 = vpack.c.bf16 %v2138, %v2002
    %v2147 = vpack.c.bf16 %v2139, %v2003
    %v2148 = vpack.c.bf16 %v2140, %v2004
    %vm2149 = vcmask 130048
    %v2151 = vsel %vm2149, %v949, 0
    %v2154 = vsel %vm2149, %v1545, 0
    %2156 = vmatprep.subr.bf16.mxu0 0
    %2157 = vmatpush1.bf16.xpose.msra.mxu0 %v2154
    %2158 = vmatprep.subr.bf16.mxu0 0
    %2159 = vmatpush1.bf16.xpose.msra.mxu0 0
    %2160 = vmatprep.subr.bf16.mxu0 0
    %2161 = vmatpush1.bf16.xpose.msra.mxu0 0
    %2162 = vmatprep.subr.bf16.mxu0 0
    %2163 = vmatpush1.bf16.xpose.msra.mxu0 0
    %2164 = vmatprep.subr.bf16.mxu0 0
    %2165 = vmatpush1.bf16.xpose.msra.mxu0 0
    %2166 = vmatprep.subr.bf16.mxu0 0
    %2167 = vmatpush1.bf16.xpose.msra.mxu0 0
    %2168 = vmatprep.subr.bf16.mxu0 0
    %2169 = vmatpush1.bf16.xpose.msra.mxu0 0
    %2170 = vmatprep.subr.bf16.mxu0 0
    %2171 = vmatpush1.bf16.xpose.msra.mxu0 0
    %2172 = vmatprep.subr.bf16.mxu0 0
    %2173 = vmatpush1.bf16.xpose.msra.mxu0 0
    %2174 = vmatprep.subr.bf16.mxu0 0
    %2175 = vmatpush1.bf16.xpose.msra.mxu0 0
    %2176 = vmatprep.subr.bf16.mxu0 0
    %2177 = vmatpush1.bf16.xpose.msra.mxu0 0
    %2178 = vmatprep.subr.bf16.mxu0 0
    %2179 = vmatpush1.bf16.xpose.msra.mxu0 0
    %2180 = vmatprep.subr.bf16.mxu0 0
    %2181 = vmatpush1.bf16.xpose.msra.mxu0 0
    %2182 = vmatprep.subr.bf16.mxu0 0
    %2183 = vmatpush1.bf16.xpose.msra.mxu0 0
    %2184 = vmatprep.subr.bf16.mxu0 0
    %2185 = vmatpush1.bf16.xpose.msra.mxu0 0
    %2186 = vmatprep.subr.bf16.mxu0 0
    %2187 = vmatpush1.bf16.xpose.msra.mxu0 0
    %2188 = vmatprep.mubr.bf16.mxu0 0
    %2189 = vmatmul.mubr.bf16.gmra.mrb[0].mxu0 %v2151
    %v2190 = vpop.f32.mrb[0].mxu0
    %v2191 = vadd.f32 0.0, %v2190
    %v2192 = vpop.f32.mrb[0].mxu0
    %v2193 = vpop.f32.mrb[0].mxu0
    %v2194 = vadd.f32 0.0, %v2193
    %v2195 = vpop.f32.mrb[0].mxu0
    %2196 = vdwg.mxu0
    %v2198 = vsel %vm2149, %v950, 0
    %v2201 = vsel %vm2149, %v1546, 0
    %2203 = vmatprep.subr.bf16.mxu0 0
    %2204 = vmatpush1.bf16.xpose.msra.mxu0 %v2201
    %2205 = vmatprep.subr.bf16.mxu0 0
    %2206 = vmatpush1.bf16.xpose.msra.mxu0 0
    %2207 = vmatprep.subr.bf16.mxu0 0
    %2208 = vmatpush1.bf16.xpose.msra.mxu0 0
    %2209 = vmatprep.subr.bf16.mxu0 0
    %2210 = vmatpush1.bf16.xpose.msra.mxu0 0
    %2211 = vmatprep.subr.bf16.mxu0 0
    %2212 = vmatpush1.bf16.xpose.msra.mxu0 0
    %2213 = vmatprep.subr.bf16.mxu0 0
    %2214 = vmatpush1.bf16.xpose.msra.mxu0 0
    %2215 = vmatprep.subr.bf16.mxu0 0
    %2216 = vmatpush1.bf16.xpose.msra.mxu0 0
    %2217 = vmatprep.subr.bf16.mxu0 0
    %2218 = vmatpush1.bf16.xpose.msra.mxu0 0
    %2219 = vmatprep.subr.bf16.mxu0 0
    %2220 = vmatpush1.bf16.xpose.msra.mxu0 0
    %2221 = vmatprep.subr.bf16.mxu0 0
    %2222 = vmatpush1.bf16.xpose.msra.mxu0 0
    %2223 = vmatprep.subr.bf16.mxu0 0
    %2224 = vmatpush1.bf16.xpose.msra.mxu0 0
    %2225 = vmatprep.subr.bf16.mxu0 0
    %2226 = vmatpush1.bf16.xpose.msra.mxu0 0
    %2227 = vmatprep.subr.bf16.mxu0 0
    %2228 = vmatpush1.bf16.xpose.msra.mxu0 0
    %2229 = vmatprep.subr.bf16.mxu0 0
    %2230 = vmatpush1.bf16.xpose.msra.mxu0 0
    %2231 = vmatprep.subr.bf16.mxu0 0
    %2232 = vmatpush1.bf16.xpose.msra.mxu0 0
    %2233 = vmatprep.subr.bf16.mxu0 0
    %2234 = vmatpush1.bf16.xpose.msra.mxu0 0
    %2235 = vmatprep.mubr.bf16.mxu0 0
    %2236 = vmatmul.mubr.bf16.gmra.mrb[0].mxu0 %v2198
    %v2237 = vpop.f32.mrb[0].mxu0
    %v2238 = vadd.f32 0.0, %v2237
    %v2239 = vpop.f32.mrb[0].mxu0
    %v2240 = vpop.f32.mrb[0].mxu0
    %v2241 = vadd.f32 0.0, %v2240
    %v2242 = vpop.f32.mrb[0].mxu0
    %2243 = vdwg.mxu0
    %v2245 = vsel %vm2149, %v951, 0
    %v2248 = vsel %vm2149, %v1547, 0
    %2250 = vmatprep.subr.bf16.mxu0 0
    %2251 = vmatpush1.bf16.xpose.msra.mxu0 %v2248
    %2252 = vmatprep.subr.bf16.mxu0 0
    %2253 = vmatpush1.bf16.xpose.msra.mxu0 0
    %2254 = vmatprep.subr.bf16.mxu0 0
    %2255 = vmatpush1.bf16.xpose.msra.mxu0 0
    %2256 = vmatprep.subr.bf16.mxu0 0
    %2257 = vmatpush1.bf16.xpose.msra.mxu0 0
    %2258 = vmatprep.subr.bf16.mxu0 0
    %2259 = vmatpush1.bf16.xpose.msra.mxu0 0
    %2260 = vmatprep.subr.bf16.mxu0 0
    %2261 = vmatpush1.bf16.xpose.msra.mxu0 0
    %2262 = vmatprep.subr.bf16.mxu0 0
    %2263 = vmatpush1.bf16.xpose.msra.mxu0 0
    %2264 = vmatprep.subr.bf16.mxu0 0
    %2265 = vmatpush1.bf16.xpose.msra.mxu0 0
    %2266 = vmatprep.subr.bf16.mxu0 0
    %2267 = vmatpush1.bf16.xpose.msra.mxu0 0
    %2268 = vmatprep.subr.bf16.mxu0 0
    %2269 = vmatpush1.bf16.xpose.msra.mxu0 0
    %2270 = vmatprep.subr.bf16.mxu0 0
    %2271 = vmatpush1.bf16.xpose.msra.mxu0 0
    %2272 = vmatprep.subr.bf16.mxu0 0
    %2273 = vmatpush1.bf16.xpose.msra.mxu0 0
    %2274 = vmatprep.subr.bf16.mxu0 0
    %2275 = vmatpush1.bf16.xpose.msra.mxu0 0
    %2276 = vmatprep.subr.bf16.mxu0 0
    %2277 = vmatpush1.bf16.xpose.msra.mxu0 0
    %2278 = vmatprep.subr.bf16.mxu0 0
    %2279 = vmatpush1.bf16.xpose.msra.mxu0 0
    %2280 = vmatprep.subr.bf16.mxu0 0
    %2281 = vmatpush1.bf16.xpose.msra.mxu0 0
    %2282 = vmatprep.mubr.bf16.mxu0 0
    %2283 = vmatmul.mubr.bf16.gmra.mrb[0].mxu0 %v2245
    %v2284 = vpop.f32.mrb[0].mxu0
    %v2285 = vadd.f32 0.0, %v2284
    %v2286 = vpop.f32.mrb[0].mxu0
    %v2287 = vpop.f32.mrb[0].mxu0
    %v2288 = vadd.f32 0.0, %v2287
    %v2289 = vpop.f32.mrb[0].mxu0
    %2290 = vdwg.mxu0
    %v2292 = vsel %vm2149, %v952, 0
    %v2295 = vsel %vm2149, %v1548, 0
    %2297 = vmatprep.subr.bf16.mxu0 0
    %2298 = vmatpush1.bf16.xpose.msra.mxu0 %v2295
    %2299 = vmatprep.subr.bf16.mxu0 0
    %2300 = vmatpush1.bf16.xpose.msra.mxu0 0
    %2301 = vmatprep.subr.bf16.mxu0 0
    %2302 = vmatpush1.bf16.xpose.msra.mxu0 0
    %2303 = vmatprep.subr.bf16.mxu0 0
    %2304 = vmatpush1.bf16.xpose.msra.mxu0 0
    %2305 = vmatprep.subr.bf16.mxu0 0
    %2306 = vmatpush1.bf16.xpose.msra.mxu0 0
    %2307 = vmatprep.subr.bf16.mxu0 0
    %2308 = vmatpush1.bf16.xpose.msra.mxu0 0
    %2309 = vmatprep.subr.bf16.mxu0 0
    %2310 = vmatpush1.bf16.xpose.msra.mxu0 0
    %2311 = vmatprep.subr.bf16.mxu0 0
    %2312 = vmatpush1.bf16.xpose.msra.mxu0 0
    %2313 = vmatprep.subr.bf16.mxu0 0
    %2314 = vmatpush1.bf16.xpose.msra.mxu0 0
    %2315 = vmatprep.subr.bf16.mxu0 0
    %2316 = vmatpush1.bf16.xpose.msra.mxu0 0
    %2317 = vmatprep.subr.bf16.mxu0 0
    %2318 = vmatpush1.bf16.xpose.msra.mxu0 0
    %2319 = vmatprep.subr.bf16.mxu0 0
    %2320 = vmatpush1.bf16.xpose.msra.mxu0 0
    %2321 = vmatprep.subr.bf16.mxu0 0
    %2322 = vmatpush1.bf16.xpose.msra.mxu0 0
    %2323 = vmatprep.subr.bf16.mxu0 0
    %2324 = vmatpush1.bf16.xpose.msra.mxu0 0
    %2325 = vmatprep.subr.bf16.mxu0 0
    %2326 = vmatpush1.bf16.xpose.msra.mxu0 0
    %2327 = vmatprep.subr.bf16.mxu0 0
    %2328 = vmatpush1.bf16.xpose.msra.mxu0 0
    %2329 = vmatprep.mubr.bf16.mxu0 0
    %2330 = vmatmul.mubr.bf16.gmra.mrb[0].mxu0 %v2292
    %v2331 = vpop.f32.mrb[0].mxu0
    %v2332 = vadd.f32 0.0, %v2331
    %v2333 = vpop.f32.mrb[0].mxu0
    %v2334 = vpop.f32.mrb[0].mxu0
    %v2335 = vadd.f32 0.0, %v2334
    %v2336 = vpop.f32.mrb[0].mxu0
    %2337 = vdwg.mxu0
    %v2339 = vsel %vm2149, %v953, 0
    %v2342 = vsel %vm2149, %v1549, 0
    %2344 = vmatprep.subr.bf16.mxu0 0
    %2345 = vmatpush1.bf16.xpose.msra.mxu0 %v2342
    %2346 = vmatprep.subr.bf16.mxu0 0
    %2347 = vmatpush1.bf16.xpose.msra.mxu0 0
    %2348 = vmatprep.subr.bf16.mxu0 0
    %2349 = vmatpush1.bf16.xpose.msra.mxu0 0
    %2350 = vmatprep.subr.bf16.mxu0 0
    %2351 = vmatpush1.bf16.xpose.msra.mxu0 0
    %2352 = vmatprep.subr.bf16.mxu0 0
    %2353 = vmatpush1.bf16.xpose.msra.mxu0 0
    %2354 = vmatprep.subr.bf16.mxu0 0
    %2355 = vmatpush1.bf16.xpose.msra.mxu0 0
    %2356 = vmatprep.subr.bf16.mxu0 0
    %2357 = vmatpush1.bf16.xpose.msra.mxu0 0
    %2358 = vmatprep.subr.bf16.mxu0 0
    %2359 = vmatpush1.bf16.xpose.msra.mxu0 0
    %2360 = vmatprep.subr.bf16.mxu0 0
    %2361 = vmatpush1.bf16.xpose.msra.mxu0 0
    %2362 = vmatprep.subr.bf16.mxu0 0
    %2363 = vmatpush1.bf16.xpose.msra.mxu0 0
    %2364 = vmatprep.subr.bf16.mxu0 0
    %2365 = vmatpush1.bf16.xpose.msra.mxu0 0
    %2366 = vmatprep.subr.bf16.mxu0 0
    %2367 = vmatpush1.bf16.xpose.msra.mxu0 0
    %2368 = vmatprep.subr.bf16.mxu0 0
    %2369 = vmatpush1.bf16.xpose.msra.mxu0 0
    %2370 = vmatprep.subr.bf16.mxu0 0
    %2371 = vmatpush1.bf16.xpose.msra.mxu0 0
    %2372 = vmatprep.subr.bf16.mxu0 0
    %2373 = vmatpush1.bf16.xpose.msra.mxu0 0
    %2374 = vmatprep.subr.bf16.mxu0 0
    %2375 = vmatpush1.bf16.xpose.msra.mxu0 0
    %2376 = vmatprep.mubr.bf16.mxu0 0
    %2377 = vmatmul.mubr.bf16.gmra.mrb[0].mxu0 %v2339
    %v2378 = vpop.f32.mrb[0].mxu0
    %v2379 = vadd.f32 0.0, %v2378
    %v2380 = vpop.f32.mrb[0].mxu0
    %v2381 = vpop.f32.mrb[0].mxu0
    %v2382 = vadd.f32 0.0, %v2381
    %v2383 = vpop.f32.mrb[0].mxu0
    %2384 = vdwg.mxu0
    %v2386 = vsel %vm2149, %v954, 0
    %v2389 = vsel %vm2149, %v1550, 0
    %2391 = vmatprep.subr.bf16.mxu0 0
    %2392 = vmatpush1.bf16.xpose.msra.mxu0 %v2389
    %2393 = vmatprep.subr.bf16.mxu0 0
    %2394 = vmatpush1.bf16.xpose.msra.mxu0 0
    %2395 = vmatprep.subr.bf16.mxu0 0
    %2396 = vmatpush1.bf16.xpose.msra.mxu0 0
    %2397 = vmatprep.subr.bf16.mxu0 0
    %2398 = vmatpush1.bf16.xpose.msra.mxu0 0
    %2399 = vmatprep.subr.bf16.mxu0 0
    %2400 = vmatpush1.bf16.xpose.msra.mxu0 0
    %2401 = vmatprep.subr.bf16.mxu0 0
    %2402 = vmatpush1.bf16.xpose.msra.mxu0 0
    %2403 = vmatprep.subr.bf16.mxu0 0
    %2404 = vmatpush1.bf16.xpose.msra.mxu0 0
    %2405 = vmatprep.subr.bf16.mxu0 0
    %2406 = vmatpush1.bf16.xpose.msra.mxu0 0
    %2407 = vmatprep.subr.bf16.mxu0 0
    %2408 = vmatpush1.bf16.xpose.msra.mxu0 0
    %2409 = vmatprep.subr.bf16.mxu0 0
    %2410 = vmatpush1.bf16.xpose.msra.mxu0 0
    %2411 = vmatprep.subr.bf16.mxu0 0
    %2412 = vmatpush1.bf16.xpose.msra.mxu0 0
    %2413 = vmatprep.subr.bf16.mxu0 0
    %2414 = vmatpush1.bf16.xpose.msra.mxu0 0
    %2415 = vmatprep.subr.bf16.mxu0 0
    %2416 = vmatpush1.bf16.xpose.msra.mxu0 0
    %2417 = vmatprep.subr.bf16.mxu0 0
    %2418 = vmatpush1.bf16.xpose.msra.mxu0 0
    %2419 = vmatprep.subr.bf16.mxu0 0
    %2420 = vmatpush1.bf16.xpose.msra.mxu0 0
    %2421 = vmatprep.subr.bf16.mxu0 0
    %2422 = vmatpush1.bf16.xpose.msra.mxu0 0
    %2423 = vmatprep.mubr.bf16.mxu0 0
    %2424 = vmatmul.mubr.bf16.gmra.mrb[0].mxu0 %v2386
    %v2425 = vpop.f32.mrb[0].mxu0
    %v2426 = vadd.f32 0.0, %v2425
    %v2427 = vpop.f32.mrb[0].mxu0
    %v2428 = vpop.f32.mrb[0].mxu0
    %v2429 = vadd.f32 0.0, %v2428
    %v2430 = vpop.f32.mrb[0].mxu0
    %2431 = vdwg.mxu0
    %v2433 = vsel %vm2149, %v955, 0
    %v2436 = vsel %vm2149, %v1551, 0
    %2438 = vmatprep.subr.bf16.mxu0 0
    %2439 = vmatpush1.bf16.xpose.msra.mxu0 %v2436
    %2440 = vmatprep.subr.bf16.mxu0 0
    %2441 = vmatpush1.bf16.xpose.msra.mxu0 0
    %2442 = vmatprep.subr.bf16.mxu0 0
    %2443 = vmatpush1.bf16.xpose.msra.mxu0 0
    %2444 = vmatprep.subr.bf16.mxu0 0
    %2445 = vmatpush1.bf16.xpose.msra.mxu0 0
    %2446 = vmatprep.subr.bf16.mxu0 0
    %2447 = vmatpush1.bf16.xpose.msra.mxu0 0
    %2448 = vmatprep.subr.bf16.mxu0 0
    %2449 = vmatpush1.bf16.xpose.msra.mxu0 0
    %2450 = vmatprep.subr.bf16.mxu0 0
    %2451 = vmatpush1.bf16.xpose.msra.mxu0 0
    %2452 = vmatprep.subr.bf16.mxu0 0
    %2453 = vmatpush1.bf16.xpose.msra.mxu0 0
    %2454 = vmatprep.subr.bf16.mxu0 0
    %2455 = vmatpush1.bf16.xpose.msra.mxu0 0
    %2456 = vmatprep.subr.bf16.mxu0 0
    %2457 = vmatpush1.bf16.xpose.msra.mxu0 0
    %2458 = vmatprep.subr.bf16.mxu0 0
    %2459 = vmatpush1.bf16.xpose.msra.mxu0 0
    %2460 = vmatprep.subr.bf16.mxu0 0
    %2461 = vmatpush1.bf16.xpose.msra.mxu0 0
    %2462 = vmatprep.subr.bf16.mxu0 0
    %2463 = vmatpush1.bf16.xpose.msra.mxu0 0
    %2464 = vmatprep.subr.bf16.mxu0 0
    %2465 = vmatpush1.bf16.xpose.msra.mxu0 0
    %2466 = vmatprep.subr.bf16.mxu0 0
    %2467 = vmatpush1.bf16.xpose.msra.mxu0 0
    %2468 = vmatprep.subr.bf16.mxu0 0
    %2469 = vmatpush1.bf16.xpose.msra.mxu0 0
    %2470 = vmatprep.mubr.bf16.mxu0 0
    %2471 = vmatmul.mubr.bf16.gmra.mrb[0].mxu0 %v2433
    %v2472 = vpop.f32.mrb[0].mxu0
    %v2473 = vadd.f32 0.0, %v2472
    %v2474 = vpop.f32.mrb[0].mxu0
    %v2475 = vpop.f32.mrb[0].mxu0
    %v2476 = vadd.f32 0.0, %v2475
    %v2477 = vpop.f32.mrb[0].mxu0
    %2478 = vdwg.mxu0
    %v2480 = vsel %vm2149, %v956, 0
    %v2483 = vsel %vm2149, %v1552, 0
    %2485 = vmatprep.subr.bf16.mxu0 0
    %2486 = vmatpush1.bf16.xpose.msra.mxu0 %v2483
    %2487 = vmatprep.subr.bf16.mxu0 0
    %2488 = vmatpush1.bf16.xpose.msra.mxu0 0
    %2489 = vmatprep.subr.bf16.mxu0 0
    %2490 = vmatpush1.bf16.xpose.msra.mxu0 0
    %2491 = vmatprep.subr.bf16.mxu0 0
    %2492 = vmatpush1.bf16.xpose.msra.mxu0 0
    %2493 = vmatprep.subr.bf16.mxu0 0
    %2494 = vmatpush1.bf16.xpose.msra.mxu0 0
    %2495 = vmatprep.subr.bf16.mxu0 0
    %2496 = vmatpush1.bf16.xpose.msra.mxu0 0
    %2497 = vmatprep.subr.bf16.mxu0 0
    %2498 = vmatpush1.bf16.xpose.msra.mxu0 0
    %2499 = vmatprep.subr.bf16.mxu0 0
    %2500 = vmatpush1.bf16.xpose.msra.mxu0 0
    %2501 = vmatprep.subr.bf16.mxu0 0
    %2502 = vmatpush1.bf16.xpose.msra.mxu0 0
    %2503 = vmatprep.subr.bf16.mxu0 0
    %2504 = vmatpush1.bf16.xpose.msra.mxu0 0
    %2505 = vmatprep.subr.bf16.mxu0 0
    %2506 = vmatpush1.bf16.xpose.msra.mxu0 0
    %2507 = vmatprep.subr.bf16.mxu0 0
    %2508 = vmatpush1.bf16.xpose.msra.mxu0 0
    %2509 = vmatprep.subr.bf16.mxu0 0
    %2510 = vmatpush1.bf16.xpose.msra.mxu0 0
    %2511 = vmatprep.subr.bf16.mxu0 0
    %2512 = vmatpush1.bf16.xpose.msra.mxu0 0
    %2513 = vmatprep.subr.bf16.mxu0 0
    %2514 = vmatpush1.bf16.xpose.msra.mxu0 0
    %2515 = vmatprep.subr.bf16.mxu0 0
    %2516 = vmatpush1.bf16.xpose.msra.mxu0 0
    %2517 = vmatprep.mubr.bf16.mxu0 0
    %2518 = vmatmul.mubr.bf16.gmra.mrb[0].mxu0 %v2480
    %v2519 = vpop.f32.mrb[0].mxu0
    %v2520 = vadd.f32 0.0, %v2519
    %v2521 = vpop.f32.mrb[0].mxu0
    %v2522 = vpop.f32.mrb[0].mxu0
    %v2523 = vadd.f32 0.0, %v2522
    %v2524 = vpop.f32.mrb[0].mxu0
    %2525 = vdwg.mxu0
    %v2526 = vadd.f32 %v2191, %v2379
    %v2527 = vadd.f32 %v2194, %v2382
    %v2528 = vadd.f32 %v2238, %v2426
    %v2529 = vadd.f32 %v2241, %v2429
    %v2530 = vadd.f32 %v2285, %v2473
    %v2531 = vadd.f32 %v2288, %v2476
    %v2532 = vadd.f32 %v2332, %v2520
    %v2533 = vadd.f32 %v2335, %v2523
    %v2534 = vlaneseq
    %v2535 = vshrl.u32 %v2534, 7
    %v2536 = vadd.s32 %v2535, 8
    %v2537 = vlaneseq
    %v2538 = vand.u32 %v2537, 127
    %v2539 = vcombine.low %v2535, %v2535
    %v2541 = vunpack.c.l.s4 1983009808
    %v2542 = vunpack.c.0.s8 %v2541
    %v2543 = vlaneseq
    %v2544 = vshrl.u32 %v2543, 7
    %v2545 = vsub.s32 %v2542, %v2544
    %v2546 = vrot.slane %v2539, %v2545
    %v2547 = vcombine.low %v2546, %v2546
    %v2549 = vunpack.c.l.s4 1934713408
    %v2550 = vunpack.c.0.s8 %v2549
    %v2551 = vlaneseq
    %v2552 = vshrl.u32 %v2551, 7
    %v2553 = vsub.s32 %v2550, %v2552
    %v2554 = vrot.slane %v2547, %v2553
    %v2555 = vcombine.low %v2554, %v2554
    %v2556 = vcombine.high %v2554, %v2554
    %2557 = vrot.lane.b32.xlu0 %v2556, 8
    %v2558 = vpop.permute.xlu0 %2557
    %vm2559 = vcmask 64512
    %v2560 = vsel %vm2559, %v2555, %v2558
    %vm2561 = vcmp.eq.s32.totalorder %v2560, 0
    %vm2562 = vcmp.eq.s32.totalorder %v2560, 1
    %vm2563 = vcmp.le.s32.totalorder %v2538, %v2535
    %vm2564 = vcmp.le.s32.totalorder %v2538, %v2536
    %vm2565 = vmand %vm2561, %vm2563
    %vm2566 = vmand %vm2562, %vm2564
    %v2567 = vsel %vm2565, 1, 0
    %v2568 = vsel %vm2566, 1, 0
    %vm2569 = vcmp.eq.s32.totalorder %v2567, 1
    %vm2570 = vcmp.eq.s32.totalorder %v2568, 1
    %v2571 = vsel %vm2569, %v2526, -1e+30
    %v2572 = vsel %vm2570, %v2527, -1e+30
    %v2573 = vsel %vm2569, %v2528, -1e+30
    %v2574 = vsel %vm2570, %v2529, -1e+30
    %v2575 = vsel %vm2569, %v2530, -1e+30
    %v2576 = vsel %vm2570, %v2531, -1e+30
    %v2577 = vsel %vm2569, %v2532, -1e+30
    %v2578 = vsel %vm2570, %v2533, -1e+30
    %v2579 = vsel %vm2149, %v2571, -inf
    %2580 = vmax.xlane.f32.xlu0 %v2579
    %v2581 = vpop.xlane.xlu0 %2580
    %v2582 = vsel %vm2149, %v2572, -inf
    %2583 = vmax.xlane.f32.xlu0 %v2582
    %v2584 = vpop.xlane.xlu0 %2583
    %v2585 = vsel %vm2149, %v2573, -inf
    %2586 = vmax.xlane.f32.xlu0 %v2585
    %v2587 = vpop.xlane.xlu0 %2586
    %v2588 = vsel %vm2149, %v2574, -inf
    %2589 = vmax.xlane.f32.xlu0 %v2588
    %v2590 = vpop.xlane.xlu0 %2589
    %v2591 = vsel %vm2149, %v2575, -inf
    %2592 = vmax.xlane.f32.xlu0 %v2591
    %v2593 = vpop.xlane.xlu0 %2592
    %v2594 = vsel %vm2149, %v2576, -inf
    %2595 = vmax.xlane.f32.xlu0 %v2594
    %v2596 = vpop.xlane.xlu0 %2595
    %v2597 = vsel %vm2149, %v2577, -inf
    %2598 = vmax.xlane.f32.xlu0 %v2597
    %v2599 = vpop.xlane.xlu0 %2598
    %v2600 = vsel %vm2149, %v2578, -inf
    %2601 = vmax.xlane.f32.xlu0 %v2600
    %v2602 = vpop.xlane.xlu0 %2601
    %v2603 = vsub.f32 %v2571, %v2581
    %v2604 = vsub.f32 %v2572, %v2584
    %v2605 = vsub.f32 %v2573, %v2587
    %v2606 = vsub.f32 %v2574, %v2590
    %v2607 = vsub.f32 %v2575, %v2593
    %v2608 = vsub.f32 %v2576, %v2596
    %v2609 = vsub.f32 %v2577, %v2599
    %v2610 = vsub.f32 %v2578, %v2602
    %v2611 = vmul.f32 %v2603, 1.442695
    %v2612 = vpow.pop %v2611
    %v2613 = vmul.f32 %v2604, 1.442695
    %v2614 = vpow.pop %v2613
    %v2615 = vmul.f32 %v2605, 1.442695
    %v2616 = vpow.pop %v2615
    %v2617 = vmul.f32 %v2606, 1.442695
    %v2618 = vpow.pop %v2617
    %v2619 = vmul.f32 %v2607, 1.442695
    %v2620 = vpow.pop %v2619
    %v2621 = vmul.f32 %v2608, 1.442695
    %v2622 = vpow.pop %v2621
    %v2623 = vmul.f32 %v2609, 1.442695
    %v2624 = vpow.pop %v2623
    %v2625 = vmul.f32 %v2610, 1.442695
    %v2626 = vpow.pop %v2625
    %v2627 = vsel %vm2149, %v2612, 0.0
    %2628 = vadd.xlane.f32.xlu0 %v2627
    %v2629 = vpop.xlane.xlu0 %2628
    %v2630 = vsel %vm2149, %v2614, 0.0
    %2631 = vadd.xlane.f32.xlu0 %v2630
    %v2632 = vpop.xlane.xlu0 %2631
    %v2633 = vsel %vm2149, %v2616, 0.0
    %2634 = vadd.xlane.f32.xlu0 %v2633
    %v2635 = vpop.xlane.xlu0 %2634
    %v2636 = vsel %vm2149, %v2618, 0.0
    %2637 = vadd.xlane.f32.xlu0 %v2636
    %v2638 = vpop.xlane.xlu0 %2637
    %v2639 = vsel %vm2149, %v2620, 0.0
    %2640 = vadd.xlane.f32.xlu0 %v2639
    %v2641 = vpop.xlane.xlu0 %2640
    %v2642 = vsel %vm2149, %v2622, 0.0
    %2643 = vadd.xlane.f32.xlu0 %v2642
    %v2644 = vpop.xlane.xlu0 %2643
    %v2645 = vsel %vm2149, %v2624, 0.0
    %2646 = vadd.xlane.f32.xlu0 %v2645
    %v2647 = vpop.xlane.xlu0 %2646
    %v2648 = vsel %vm2149, %v2626, 0.0
    %2649 = vadd.xlane.f32.xlu0 %v2648
    %v2650 = vpop.xlane.xlu0 %2649
    %v2651 = vrcp.pop %v2629
    %v2652 = vrcp.pop %v2632
    %v2653 = vrcp.pop %v2635
    %v2654 = vrcp.pop %v2638
    %v2655 = vrcp.pop %v2641
    %v2656 = vrcp.pop %v2644
    %v2657 = vrcp.pop %v2647
    %v2658 = vrcp.pop %v2650
    %v2659 = vmul.f32 %v2612, %v2651
    %v2660 = vmul.f32 %v2614, %v2652
    %v2661 = vmul.f32 %v2616, %v2653
    %v2662 = vmul.f32 %v2618, %v2654
    %v2663 = vmul.f32 %v2620, %v2655
    %v2664 = vmul.f32 %v2622, %v2656
    %v2665 = vmul.f32 %v2624, %v2657
    %v2666 = vmul.f32 %v2626, %v2658
    %v2667 = vpack.c.bf16 %v2660, %v2659
    %v2668 = vpack.c.bf16 %v2662, %v2661
    %v2669 = vpack.c.bf16 %v2664, %v2663
    %v2670 = vpack.c.bf16 %v2666, %v2665
    %v2672 = vsel %vm2149, %v2667, 0
    %2674 = vmatprep.subr.bf16.mxu0 0
    %2675 = vmatpush1.bf16.msra.mxu0 %v2141
    %2676 = vmatprep.subr.bf16.mxu0 0
    %2677 = vmatpush1.bf16.msra.mxu0 0
    %2678 = vmatprep.subr.bf16.mxu0 0
    %2679 = vmatpush1.bf16.msra.mxu0 0
    %2680 = vmatprep.subr.bf16.mxu0 0
    %2681 = vmatpush1.bf16.msra.mxu0 0
    %2682 = vmatprep.subr.bf16.mxu0 0
    %2683 = vmatpush1.bf16.msra.mxu0 0
    %2684 = vmatprep.subr.bf16.mxu0 0
    %2685 = vmatpush1.bf16.msra.mxu0 0
    %2686 = vmatprep.subr.bf16.mxu0 0
    %2687 = vmatpush1.bf16.msra.mxu0 0
    %2688 = vmatprep.subr.bf16.mxu0 0
    %2689 = vmatpush1.bf16.msra.mxu0 0
    %2690 = vmatprep.subr.bf16.mxu0 0
    %2691 = vmatpush1.bf16.msra.mxu0 0
    %2692 = vmatprep.subr.bf16.mxu0 0
    %2693 = vmatpush1.bf16.msra.mxu0 0
    %2694 = vmatprep.subr.bf16.mxu0 0
    %2695 = vmatpush1.bf16.msra.mxu0 0
    %2696 = vmatprep.subr.bf16.mxu0 0
    %2697 = vmatpush1.bf16.msra.mxu0 0
    %2698 = vmatprep.subr.bf16.mxu0 0
    %2699 = vmatpush1.bf16.msra.mxu0 0
    %2700 = vmatprep.subr.bf16.mxu0 0
    %2701 = vmatpush1.bf16.msra.mxu0 0
    %2702 = vmatprep.subr.bf16.mxu0 0
    %2703 = vmatpush1.bf16.msra.mxu0 0
    %2704 = vmatprep.subr.bf16.mxu0 0
    %2705 = vmatpush1.bf16.msra.mxu0 0
    %2706 = vmatprep.mubr.bf16.mxu0 0
    %2707 = vmatmul.mubr.bf16.gmra.mrb[0].mxu0 %v2672
    %v2708 = vpop.f32.mrb[0].mxu0
    %v2709 = vadd.f32 0.0, %v2708
    %v2710 = vpop.f32.mrb[0].mxu0
    %v2711 = vpop.f32.mrb[0].mxu0
    %v2712 = vadd.f32 0.0, %v2711
    %v2713 = vpop.f32.mrb[0].mxu0
    %2714 = vdwg.mxu0
    %v2716 = vsel %vm2149, %v2668, 0
    %2718 = vmatprep.subr.bf16.mxu0 0
    %2719 = vmatpush1.bf16.msra.mxu0 %v2142
    %2720 = vmatprep.subr.bf16.mxu0 0
    %2721 = vmatpush1.bf16.msra.mxu0 0
    %2722 = vmatprep.subr.bf16.mxu0 0
    %2723 = vmatpush1.bf16.msra.mxu0 0
    %2724 = vmatprep.subr.bf16.mxu0 0
    %2725 = vmatpush1.bf16.msra.mxu0 0
    %2726 = vmatprep.subr.bf16.mxu0 0
    %2727 = vmatpush1.bf16.msra.mxu0 0
    %2728 = vmatprep.subr.bf16.mxu0 0
    %2729 = vmatpush1.bf16.msra.mxu0 0
    %2730 = vmatprep.subr.bf16.mxu0 0
    %2731 = vmatpush1.bf16.msra.mxu0 0
    %2732 = vmatprep.subr.bf16.mxu0 0
    %2733 = vmatpush1.bf16.msra.mxu0 0
    %2734 = vmatprep.subr.bf16.mxu0 0
    %2735 = vmatpush1.bf16.msra.mxu0 0
    %2736 = vmatprep.subr.bf16.mxu0 0
    %2737 = vmatpush1.bf16.msra.mxu0 0
    %2738 = vmatprep.subr.bf16.mxu0 0
    %2739 = vmatpush1.bf16.msra.mxu0 0
    %2740 = vmatprep.subr.bf16.mxu0 0
    %2741 = vmatpush1.bf16.msra.mxu0 0
    %2742 = vmatprep.subr.bf16.mxu0 0
    %2743 = vmatpush1.bf16.msra.mxu0 0
    %2744 = vmatprep.subr.bf16.mxu0 0
    %2745 = vmatpush1.bf16.msra.mxu0 0
    %2746 = vmatprep.subr.bf16.mxu0 0
    %2747 = vmatpush1.bf16.msra.mxu0 0
    %2748 = vmatprep.subr.bf16.mxu0 0
    %2749 = vmatpush1.bf16.msra.mxu0 0
    %2750 = vmatprep.mubr.bf16.mxu0 0
    %2751 = vmatmul.mubr.bf16.gmra.mrb[0].mxu0 %v2716
    %v2752 = vpop.f32.mrb[0].mxu0
    %v2753 = vadd.f32 0.0, %v2752
    %v2754 = vpop.f32.mrb[0].mxu0
    %v2755 = vpop.f32.mrb[0].mxu0
    %v2756 = vadd.f32 0.0, %v2755
    %v2757 = vpop.f32.mrb[0].mxu0
    %2758 = vdwg.mxu0
    %v2760 = vsel %vm2149, %v2669, 0
    %2762 = vmatprep.subr.bf16.mxu0 0
    %2763 = vmatpush1.bf16.msra.mxu0 %v2143
    %2764 = vmatprep.subr.bf16.mxu0 0
    %2765 = vmatpush1.bf16.msra.mxu0 0
    %2766 = vmatprep.subr.bf16.mxu0 0
    %2767 = vmatpush1.bf16.msra.mxu0 0
    %2768 = vmatprep.subr.bf16.mxu0 0
    %2769 = vmatpush1.bf16.msra.mxu0 0
    %2770 = vmatprep.subr.bf16.mxu0 0
    %2771 = vmatpush1.bf16.msra.mxu0 0
    %2772 = vmatprep.subr.bf16.mxu0 0
    %2773 = vmatpush1.bf16.msra.mxu0 0
    %2774 = vmatprep.subr.bf16.mxu0 0
    %2775 = vmatpush1.bf16.msra.mxu0 0
    %2776 = vmatprep.subr.bf16.mxu0 0
    %2777 = vmatpush1.bf16.msra.mxu0 0
    %2778 = vmatprep.subr.bf16.mxu0 0
    %2779 = vmatpush1.bf16.msra.mxu0 0
    %2780 = vmatprep.subr.bf16.mxu0 0
    %2781 = vmatpush1.bf16.msra.mxu0 0
    %2782 = vmatprep.subr.bf16.mxu0 0
    %2783 = vmatpush1.bf16.msra.mxu0 0
    %2784 = vmatprep.subr.bf16.mxu0 0
    %2785 = vmatpush1.bf16.msra.mxu0 0
    %2786 = vmatprep.subr.bf16.mxu0 0
    %2787 = vmatpush1.bf16.msra.mxu0 0
    %2788 = vmatprep.subr.bf16.mxu0 0
    %2789 = vmatpush1.bf16.msra.mxu0 0
    %2790 = vmatprep.subr.bf16.mxu0 0
    %2791 = vmatpush1.bf16.msra.mxu0 0
    %2792 = vmatprep.subr.bf16.mxu0 0
    %2793 = vmatpush1.bf16.msra.mxu0 0
    %2794 = vmatprep.mubr.bf16.mxu0 0
    %2795 = vmatmul.mubr.bf16.gmra.mrb[0].mxu0 %v2760
    %v2796 = vpop.f32.mrb[0].mxu0
    %v2797 = vadd.f32 0.0, %v2796
    %v2798 = vpop.f32.mrb[0].mxu0
    %v2799 = vpop.f32.mrb[0].mxu0
    %v2800 = vadd.f32 0.0, %v2799
    %v2801 = vpop.f32.mrb[0].mxu0
    %2802 = vdwg.mxu0
    %v2804 = vsel %vm2149, %v2670, 0
    %2806 = vmatprep.subr.bf16.mxu0 0
    %2807 = vmatpush1.bf16.msra.mxu0 %v2144
    %2808 = vmatprep.subr.bf16.mxu0 0
    %2809 = vmatpush1.bf16.msra.mxu0 0
    %2810 = vmatprep.subr.bf16.mxu0 0
    %2811 = vmatpush1.bf16.msra.mxu0 0
    %2812 = vmatprep.subr.bf16.mxu0 0
    %2813 = vmatpush1.bf16.msra.mxu0 0
    %2814 = vmatprep.subr.bf16.mxu0 0
    %2815 = vmatpush1.bf16.msra.mxu0 0
    %2816 = vmatprep.subr.bf16.mxu0 0
    %2817 = vmatpush1.bf16.msra.mxu0 0
    %2818 = vmatprep.subr.bf16.mxu0 0
    %2819 = vmatpush1.bf16.msra.mxu0 0
    %2820 = vmatprep.subr.bf16.mxu0 0
    %2821 = vmatpush1.bf16.msra.mxu0 0
    %2822 = vmatprep.subr.bf16.mxu0 0
    %2823 = vmatpush1.bf16.msra.mxu0 0
    %2824 = vmatprep.subr.bf16.mxu0 0
    %2825 = vmatpush1.bf16.msra.mxu0 0
    %2826 = vmatprep.subr.bf16.mxu0 0
    %2827 = vmatpush1.bf16.msra.mxu0 0
    %2828 = vmatprep.subr.bf16.mxu0 0
    %2829 = vmatpush1.bf16.msra.mxu0 0
    %2830 = vmatprep.subr.bf16.mxu0 0
    %2831 = vmatpush1.bf16.msra.mxu0 0
    %2832 = vmatprep.subr.bf16.mxu0 0
    %2833 = vmatpush1.bf16.msra.mxu0 0
    %2834 = vmatprep.subr.bf16.mxu0 0
    %2835 = vmatpush1.bf16.msra.mxu0 0
    %2836 = vmatprep.subr.bf16.mxu0 0
    %2837 = vmatpush1.bf16.msra.mxu0 0
    %2838 = vmatprep.mubr.bf16.mxu0 0
    %2839 = vmatmul.mubr.bf16.gmra.mrb[0].mxu0 %v2804
    %v2840 = vpop.f32.mrb[0].mxu0
    %v2841 = vadd.f32 0.0, %v2840
    %v2842 = vpop.f32.mrb[0].mxu0
    %v2843 = vpop.f32.mrb[0].mxu0
    %v2844 = vadd.f32 0.0, %v2843
    %v2845 = vpop.f32.mrb[0].mxu0
    %2846 = vdwg.mxu0
    %2847 = vmatprep.subr.bf16.mxu0 0
    %2848 = vmatpush1.bf16.msra.mxu0 %v2145
    %2849 = vmatprep.subr.bf16.mxu0 0
    %2850 = vmatpush1.bf16.msra.mxu0 0
    %2851 = vmatprep.subr.bf16.mxu0 0
    %2852 = vmatpush1.bf16.msra.mxu0 0
    %2853 = vmatprep.subr.bf16.mxu0 0
    %2854 = vmatpush1.bf16.msra.mxu0 0
    %2855 = vmatprep.subr.bf16.mxu0 0
    %2856 = vmatpush1.bf16.msra.mxu0 0
    %2857 = vmatprep.subr.bf16.mxu0 0
    %2858 = vmatpush1.bf16.msra.mxu0 0
    %2859 = vmatprep.subr.bf16.mxu0 0
    %2860 = vmatpush1.bf16.msra.mxu0 0
    %2861 = vmatprep.subr.bf16.mxu0 0
    %2862 = vmatpush1.bf16.msra.mxu0 0
    %2863 = vmatprep.subr.bf16.mxu0 0
    %2864 = vmatpush1.bf16.msra.mxu0 0
    %2865 = vmatprep.subr.bf16.mxu0 0
    %2866 = vmatpush1.bf16.msra.mxu0 0
    %2867 = vmatprep.subr.bf16.mxu0 0
    %2868 = vmatpush1.bf16.msra.mxu0 0
    %2869 = vmatprep.subr.bf16.mxu0 0
    %2870 = vmatpush1.bf16.msra.mxu0 0
    %2871 = vmatprep.subr.bf16.mxu0 0
    %2872 = vmatpush1.bf16.msra.mxu0 0
    %2873 = vmatprep.subr.bf16.mxu0 0
    %2874 = vmatpush1.bf16.msra.mxu0 0
    %2875 = vmatprep.subr.bf16.mxu0 0
    %2876 = vmatpush1.bf16.msra.mxu0 0
    %2877 = vmatprep.subr.bf16.mxu0 0
    %2878 = vmatpush1.bf16.msra.mxu0 0
    %2879 = vmatprep.mubr.bf16.mxu0 0
    %2880 = vmatmul.mubr.bf16.gmra.mrb[0].mxu0 %v2672
    %v2881 = vpop.f32.mrb[0].mxu0
    %v2882 = vadd.f32 0.0, %v2881
    %v2883 = vpop.f32.mrb[0].mxu0
    %v2884 = vpop.f32.mrb[0].mxu0
    %v2885 = vadd.f32 0.0, %v2884
    %v2886 = vpop.f32.mrb[0].mxu0
    %2887 = vdwg.mxu0
    %2888 = vmatprep.subr.bf16.mxu0 0
    %2889 = vmatpush1.bf16.msra.mxu0 %v2146
    %2890 = vmatprep.subr.bf16.mxu0 0
    %2891 = vmatpush1.bf16.msra.mxu0 0
    %2892 = vmatprep.subr.bf16.mxu0 0
    %2893 = vmatpush1.bf16.msra.mxu0 0
    %2894 = vmatprep.subr.bf16.mxu0 0
    %2895 = vmatpush1.bf16.msra.mxu0 0
    %2896 = vmatprep.subr.bf16.mxu0 0
    %2897 = vmatpush1.bf16.msra.mxu0 0
    %2898 = vmatprep.subr.bf16.mxu0 0
    %2899 = vmatpush1.bf16.msra.mxu0 0
    %2900 = vmatprep.subr.bf16.mxu0 0
    %2901 = vmatpush1.bf16.msra.mxu0 0
    %2902 = vmatprep.subr.bf16.mxu0 0
    %2903 = vmatpush1.bf16.msra.mxu0 0
    %2904 = vmatprep.subr.bf16.mxu0 0
    %2905 = vmatpush1.bf16.msra.mxu0 0
    %2906 = vmatprep.subr.bf16.mxu0 0
    %2907 = vmatpush1.bf16.msra.mxu0 0
    %2908 = vmatprep.subr.bf16.mxu0 0
    %2909 = vmatpush1.bf16.msra.mxu0 0
    %2910 = vmatprep.subr.bf16.mxu0 0
    %2911 = vmatpush1.bf16.msra.mxu0 0
    %2912 = vmatprep.subr.bf16.mxu0 0
    %2913 = vmatpush1.bf16.msra.mxu0 0
    %2914 = vmatprep.subr.bf16.mxu0 0
    %2915 = vmatpush1.bf16.msra.mxu0 0
    %2916 = vmatprep.subr.bf16.mxu0 0
    %2917 = vmatpush1.bf16.msra.mxu0 0
    %2918 = vmatprep.subr.bf16.mxu0 0
    %2919 = vmatpush1.bf16.msra.mxu0 0
    %2920 = vmatprep.mubr.bf16.mxu0 0
    %2921 = vmatmul.mubr.bf16.gmra.mrb[0].mxu0 %v2716
    %v2922 = vpop.f32.mrb[0].mxu0
    %v2923 = vadd.f32 0.0, %v2922
    %v2924 = vpop.f32.mrb[0].mxu0
    %v2925 = vpop.f32.mrb[0].mxu0
    %v2926 = vadd.f32 0.0, %v2925
    %v2927 = vpop.f32.mrb[0].mxu0
    %2928 = vdwg.mxu0
    %2929 = vmatprep.subr.bf16.mxu0 0
    %2930 = vmatpush1.bf16.msra.mxu0 %v2147
    %2931 = vmatprep.subr.bf16.mxu0 0
    %2932 = vmatpush1.bf16.msra.mxu0 0
    %2933 = vmatprep.subr.bf16.mxu0 0
    %2934 = vmatpush1.bf16.msra.mxu0 0
    %2935 = vmatprep.subr.bf16.mxu0 0
    %2936 = vmatpush1.bf16.msra.mxu0 0
    %2937 = vmatprep.subr.bf16.mxu0 0
    %2938 = vmatpush1.bf16.msra.mxu0 0
    %2939 = vmatprep.subr.bf16.mxu0 0
    %2940 = vmatpush1.bf16.msra.mxu0 0
    %2941 = vmatprep.subr.bf16.mxu0 0
    %2942 = vmatpush1.bf16.msra.mxu0 0
    %2943 = vmatprep.subr.bf16.mxu0 0
    %2944 = vmatpush1.bf16.msra.mxu0 0
    %2945 = vmatprep.subr.bf16.mxu0 0
    %2946 = vmatpush1.bf16.msra.mxu0 0
    %2947 = vmatprep.subr.bf16.mxu0 0
    %2948 = vmatpush1.bf16.msra.mxu0 0
    %2949 = vmatprep.subr.bf16.mxu0 0
    %2950 = vmatpush1.bf16.msra.mxu0 0
    %2951 = vmatprep.subr.bf16.mxu0 0
    %2952 = vmatpush1.bf16.msra.mxu0 0
    %2953 = vmatprep.subr.bf16.mxu0 0
    %2954 = vmatpush1.bf16.msra.mxu0 0
    %2955 = vmatprep.subr.bf16.mxu0 0
    %2956 = vmatpush1.bf16.msra.mxu0 0
    %2957 = vmatprep.subr.bf16.mxu0 0
    %2958 = vmatpush1.bf16.msra.mxu0 0
    %2959 = vmatprep.subr.bf16.mxu0 0
    %2960 = vmatpush1.bf16.msra.mxu0 0
    %2961 = vmatprep.mubr.bf16.mxu0 0
    %2962 = vmatmul.mubr.bf16.gmra.mrb[0].mxu0 %v2760
    %v2963 = vpop.f32.mrb[0].mxu0
    %v2964 = vadd.f32 0.0, %v2963
    %v2965 = vpop.f32.mrb[0].mxu0
    %v2966 = vpop.f32.mrb[0].mxu0
    %v2967 = vadd.f32 0.0, %v2966
    %v2968 = vpop.f32.mrb[0].mxu0
    %2969 = vdwg.mxu0
    %2970 = vmatprep.subr.bf16.mxu0 0
    %2971 = vmatpush1.bf16.msra.mxu0 %v2148
    %2972 = vmatprep.subr.bf16.mxu0 0
    %2973 = vmatpush1.bf16.msra.mxu0 0
    %2974 = vmatprep.subr.bf16.mxu0 0
    %2975 = vmatpush1.bf16.msra.mxu0 0
    %2976 = vmatprep.subr.bf16.mxu0 0
    %2977 = vmatpush1.bf16.msra.mxu0 0
    %2978 = vmatprep.subr.bf16.mxu0 0
    %2979 = vmatpush1.bf16.msra.mxu0 0
    %2980 = vmatprep.subr.bf16.mxu0 0
    %2981 = vmatpush1.bf16.msra.mxu0 0
    %2982 = vmatprep.subr.bf16.mxu0 0
    %2983 = vmatpush1.bf16.msra.mxu0 0
    %2984 = vmatprep.subr.bf16.mxu0 0
    %2985 = vmatpush1.bf16.msra.mxu0 0
    %2986 = vmatprep.subr.bf16.mxu0 0
    %2987 = vmatpush1.bf16.msra.mxu0 0
    %2988 = vmatprep.subr.bf16.mxu0 0
    %2989 = vmatpush1.bf16.msra.mxu0 0
    %2990 = vmatprep.subr.bf16.mxu0 0
    %2991 = vmatpush1.bf16.msra.mxu0 0
    %2992 = vmatprep.subr.bf16.mxu0 0
    %2993 = vmatpush1.bf16.msra.mxu0 0
    %2994 = vmatprep.subr.bf16.mxu0 0
    %2995 = vmatpush1.bf16.msra.mxu0 0
    %2996 = vmatprep.subr.bf16.mxu0 0
    %2997 = vmatpush1.bf16.msra.mxu0 0
    %2998 = vmatprep.subr.bf16.mxu0 0
    %2999 = vmatpush1.bf16.msra.mxu0 0
    %3000 = vmatprep.subr.bf16.mxu0 0
    %3001 = vmatpush1.bf16.msra.mxu0 0
    %3002 = vmatprep.mubr.bf16.mxu0 0
    %3003 = vmatmul.mubr.bf16.gmra.mrb[0].mxu0 %v2804
    %v3004 = vpop.f32.mrb[0].mxu0
    %v3005 = vadd.f32 0.0, %v3004
    %v3006 = vpop.f32.mrb[0].mxu0
    %v3007 = vpop.f32.mrb[0].mxu0
    %v3008 = vadd.f32 0.0, %v3007
    %v3009 = vpop.f32.mrb[0].mxu0
    %3010 = vdwg.mxu0
    %v3011 = vcombine.low %v2709, %v2797
    %v3012 = vcombine.high %v2709, %v2797
    %v3014 = vunpack.c.l.s4 1983009808
    %v3015 = vunpack.c.0.s8 %v3014
    %v3016 = vlaneseq
    %v3017 = vshrl.u32 %v3016, 7
    %v3018 = vsub.s32 %v3015, %v3017
    %v3019 = vrot.slane %v3011, %v3018
    %v3021 = vunpack.c.l.s4 1983009808
    %v3022 = vunpack.c.0.s8 %v3021
    %v3023 = vlaneseq
    %v3024 = vshrl.u32 %v3023, 7
    %v3025 = vsub.s32 %v3022, %v3024
    %v3026 = vrot.slane %v3012, %v3025
    %v3027 = vcombine.low %v2753, %v2841
    %v3028 = vcombine.high %v2753, %v2841
    %v3030 = vunpack.c.l.s4 1983009808
    %v3031 = vunpack.c.0.s8 %v3030
    %v3032 = vlaneseq
    %v3033 = vshrl.u32 %v3032, 7
    %v3034 = vsub.s32 %v3031, %v3033
    %v3035 = vrot.slane %v3027, %v3034
    %v3037 = vunpack.c.l.s4 1983009808
    %v3038 = vunpack.c.0.s8 %v3037
    %v3039 = vlaneseq
    %v3040 = vshrl.u32 %v3039, 7
    %v3041 = vsub.s32 %v3038, %v3040
    %v3042 = vrot.slane %v3028, %v3041
    %v3043 = vcombine.low %v2882, %v2964
    %v3044 = vcombine.high %v2882, %v2964
    %v3046 = vunpack.c.l.s4 1983009808
    %v3047 = vunpack.c.0.s8 %v3046
    %v3048 = vlaneseq
    %v3049 = vshrl.u32 %v3048, 7
    %v3050 = vsub.s32 %v3047, %v3049
    %v3051 = vrot.slane %v3043, %v3050
    %v3053 = vunpack.c.l.s4 1983009808
    %v3054 = vunpack.c.0.s8 %v3053
    %v3055 = vlaneseq
    %v3056 = vshrl.u32 %v3055, 7
    %v3057 = vsub.s32 %v3054, %v3056
    %v3058 = vrot.slane %v3044, %v3057
    %v3059 = vcombine.low %v2923, %v3005
    %v3060 = vcombine.high %v2923, %v3005
    %v3062 = vunpack.c.l.s4 1983009808
    %v3063 = vunpack.c.0.s8 %v3062
    %v3064 = vlaneseq
    %v3065 = vshrl.u32 %v3064, 7
    %v3066 = vsub.s32 %v3063, %v3065
    %v3067 = vrot.slane %v3059, %v3066
    %v3069 = vunpack.c.l.s4 1983009808
    %v3070 = vunpack.c.0.s8 %v3069
    %v3071 = vlaneseq
    %v3072 = vshrl.u32 %v3071, 7
    %v3073 = vsub.s32 %v3070, %v3072
    %v3074 = vrot.slane %v3060, %v3073
    %v3075 = vcombine.low %v3019, %v3035
    %v3076 = vcombine.high %v3019, %v3035
    %v3078 = vunpack.c.l.s4 1934713408
    %v3079 = vunpack.c.0.s8 %v3078
    %v3080 = vlaneseq
    %v3081 = vshrl.u32 %v3080, 7
    %v3082 = vsub.s32 %v3079, %v3081
    %v3083 = vrot.slane %v3075, %v3082
    %v3085 = vunpack.c.l.s4 1934713408
    %v3086 = vunpack.c.0.s8 %v3085
    %v3087 = vlaneseq
    %v3088 = vshrl.u32 %v3087, 7
    %v3089 = vsub.s32 %v3086, %v3088
    %v3090 = vrot.slane %v3076, %v3089
    %v3091 = vcombine.low %v3026, %v3042
    %v3092 = vcombine.high %v3026, %v3042
    %v3094 = vunpack.c.l.s4 1934713408
    %v3095 = vunpack.c.0.s8 %v3094
    %v3096 = vlaneseq
    %v3097 = vshrl.u32 %v3096, 7
    %v3098 = vsub.s32 %v3095, %v3097
    %v3099 = vrot.slane %v3091, %v3098
    %v3101 = vunpack.c.l.s4 1934713408
    %v3102 = vunpack.c.0.s8 %v3101
    %v3103 = vlaneseq
    %v3104 = vshrl.u32 %v3103, 7
    %v3105 = vsub.s32 %v3102, %v3104
    %v3106 = vrot.slane %v3092, %v3105
    %v3107 = vcombine.low %v3051, %v3067
    %v3108 = vcombine.high %v3051, %v3067
    %v3110 = vunpack.c.l.s4 1934713408
    %v3111 = vunpack.c.0.s8 %v3110
    %v3112 = vlaneseq
    %v3113 = vshrl.u32 %v3112, 7
    %v3114 = vsub.s32 %v3111, %v3113
    %v3115 = vrot.slane %v3107, %v3114
    %v3117 = vunpack.c.l.s4 1934713408
    %v3118 = vunpack.c.0.s8 %v3117
    %v3119 = vlaneseq
    %v3120 = vshrl.u32 %v3119, 7
    %v3121 = vsub.s32 %v3118, %v3120
    %v3122 = vrot.slane %v3108, %v3121
    %v3123 = vcombine.low %v3058, %v3074
    %v3124 = vcombine.high %v3058, %v3074
    %v3126 = vunpack.c.l.s4 1934713408
    %v3127 = vunpack.c.0.s8 %v3126
    %v3128 = vlaneseq
    %v3129 = vshrl.u32 %v3128, 7
    %v3130 = vsub.s32 %v3127, %v3129
    %v3131 = vrot.slane %v3123, %v3130
    %v3133 = vunpack.c.l.s4 1934713408
    %v3134 = vunpack.c.0.s8 %v3133
    %v3135 = vlaneseq
    %v3136 = vshrl.u32 %v3135, 7
    %v3137 = vsub.s32 %v3134, %v3136
    %v3138 = vrot.slane %v3124, %v3137
    %v3139 = vcombine.low %v3083, %v3115
    %v3140 = vcombine.high %v3083, %v3115
    %v3141 = vcombine.low %v3090, %v3122
    %v3142 = vcombine.high %v3090, %v3122
    %v3143 = vcombine.low %v3099, %v3131
    %v3144 = vcombine.high %v3099, %v3131
    %v3145 = vcombine.low %v3106, %v3138
    %v3146 = vcombine.high %v3106, %v3138
    %v3147 = vcombine.low %v2712, %v2800
    %v3148 = vcombine.high %v2712, %v2800
    %v3150 = vunpack.c.l.s4 1983009808
    %v3151 = vunpack.c.0.s8 %v3150
    %v3152 = vlaneseq
    %v3153 = vshrl.u32 %v3152, 7
    %v3154 = vsub.s32 %v3151, %v3153
    %v3155 = vrot.slane %v3147, %v3154
    %v3157 = vunpack.c.l.s4 1983009808
    %v3158 = vunpack.c.0.s8 %v3157
    %v3159 = vlaneseq
    %v3160 = vshrl.u32 %v3159, 7
    %v3161 = vsub.s32 %v3158, %v3160
    %v3162 = vrot.slane %v3148, %v3161
    %v3163 = vcombine.low %v2756, %v2844
    %v3164 = vcombine.high %v2756, %v2844
    %v3166 = vunpack.c.l.s4 1983009808
    %v3167 = vunpack.c.0.s8 %v3166
    %v3168 = vlaneseq
    %v3169 = vshrl.u32 %v3168, 7
    %v3170 = vsub.s32 %v3167, %v3169
    %v3171 = vrot.slane %v3163, %v3170
    %v3173 = vunpack.c.l.s4 1983009808
    %v3174 = vunpack.c.0.s8 %v3173
    %v3175 = vlaneseq
    %v3176 = vshrl.u32 %v3175, 7
    %v3177 = vsub.s32 %v3174, %v3176
    %v3178 = vrot.slane %v3164, %v3177
    %v3179 = vcombine.low %v2885, %v2967
    %v3180 = vcombine.high %v2885, %v2967
    %v3182 = vunpack.c.l.s4 1983009808
    %v3183 = vunpack.c.0.s8 %v3182
    %v3184 = vlaneseq
    %v3185 = vshrl.u32 %v3184, 7
    %v3186 = vsub.s32 %v3183, %v3185
    %v3187 = vrot.slane %v3179, %v3186
    %v3189 = vunpack.c.l.s4 1983009808
    %v3190 = vunpack.c.0.s8 %v3189
    %v3191 = vlaneseq
    %v3192 = vshrl.u32 %v3191, 7
    %v3193 = vsub.s32 %v3190, %v3192
    %v3194 = vrot.slane %v3180, %v3193
    %v3195 = vcombine.low %v2926, %v3008
    %v3196 = vcombine.high %v2926, %v3008
    %v3198 = vunpack.c.l.s4 1983009808
    %v3199 = vunpack.c.0.s8 %v3198
    %v3200 = vlaneseq
    %v3201 = vshrl.u32 %v3200, 7
    %v3202 = vsub.s32 %v3199, %v3201
    %v3203 = vrot.slane %v3195, %v3202
    %v3205 = vunpack.c.l.s4 1983009808
    %v3206 = vunpack.c.0.s8 %v3205
    %v3207 = vlaneseq
    %v3208 = vshrl.u32 %v3207, 7
    %v3209 = vsub.s32 %v3206, %v3208
    %v3210 = vrot.slane %v3196, %v3209
    %v3211 = vcombine.low %v3155, %v3171
    %v3212 = vcombine.high %v3155, %v3171
    %v3214 = vunpack.c.l.s4 1934713408
    %v3215 = vunpack.c.0.s8 %v3214
    %v3216 = vlaneseq
    %v3217 = vshrl.u32 %v3216, 7
    %v3218 = vsub.s32 %v3215, %v3217
    %v3219 = vrot.slane %v3211, %v3218
    %v3221 = vunpack.c.l.s4 1934713408
    %v3222 = vunpack.c.0.s8 %v3221
    %v3223 = vlaneseq
    %v3224 = vshrl.u32 %v3223, 7
    %v3225 = vsub.s32 %v3222, %v3224
    %v3226 = vrot.slane %v3212, %v3225
    %v3227 = vcombine.low %v3162, %v3178
    %v3228 = vcombine.high %v3162, %v3178
    %v3230 = vunpack.c.l.s4 1934713408
    %v3231 = vunpack.c.0.s8 %v3230
    %v3232 = vlaneseq
    %v3233 = vshrl.u32 %v3232, 7
    %v3234 = vsub.s32 %v3231, %v3233
    %v3235 = vrot.slane %v3227, %v3234
    %v3237 = vunpack.c.l.s4 1934713408
    %v3238 = vunpack.c.0.s8 %v3237
    %v3239 = vlaneseq
    %v3240 = vshrl.u32 %v3239, 7
    %v3241 = vsub.s32 %v3238, %v3240
    %v3242 = vrot.slane %v3228, %v3241
    %v3243 = vcombine.low %v3187, %v3203
    %v3244 = vcombine.high %v3187, %v3203
    %v3246 = vunpack.c.l.s4 1934713408
    %v3247 = vunpack.c.0.s8 %v3246
    %v3248 = vlaneseq
    %v3249 = vshrl.u32 %v3248, 7
    %v3250 = vsub.s32 %v3247, %v3249
    %v3251 = vrot.slane %v3243, %v3250
    %v3253 = vunpack.c.l.s4 1934713408
    %v3254 = vunpack.c.0.s8 %v3253
    %v3255 = vlaneseq
    %v3256 = vshrl.u32 %v3255, 7
    %v3257 = vsub.s32 %v3254, %v3256
    %v3258 = vrot.slane %v3244, %v3257
    %v3259 = vcombine.low %v3194, %v3210
    %v3260 = vcombine.high %v3194, %v3210
    %v3262 = vunpack.c.l.s4 1934713408
    %v3263 = vunpack.c.0.s8 %v3262
    %v3264 = vlaneseq
    %v3265 = vshrl.u32 %v3264, 7
    %v3266 = vsub.s32 %v3263, %v3265
    %v3267 = vrot.slane %v3259, %v3266
    %v3269 = vunpack.c.l.s4 1934713408
    %v3270 = vunpack.c.0.s8 %v3269
    %v3271 = vlaneseq
    %v3272 = vshrl.u32 %v3271, 7
    %v3273 = vsub.s32 %v3270, %v3272
    %v3274 = vrot.slane %v3260, %v3273
    %v3275 = vcombine.low %v3219, %v3251
    %v3276 = vcombine.high %v3219, %v3251
    %v3277 = vcombine.low %v3226, %v3258
    %v3278 = vcombine.high %v3226, %v3258
    %v3279 = vcombine.low %v3235, %v3267
    %v3280 = vcombine.high %v3235, %v3267
    %v3281 = vcombine.low %v3242, %v3274
    %v3282 = vcombine.high %v3242, %v3274
    %v3283 = vcombine.low %v3139, %v3141
    %v3284 = vcombine.high %v3139, %v3141
    %v3286 = vunpack.c.l.s4 1983009808
    %v3287 = vunpack.c.0.s8 %v3286
    %v3288 = vlaneseq
    %v3289 = vshrl.u32 %v3288, 7
    %v3290 = vsub.s32 %v3287, %v3289
    %v3291 = vrot.slane %v3283, %v3290
    %v3293 = vunpack.c.l.s4 1983009808
    %v3294 = vunpack.c.0.s8 %v3293
    %v3295 = vlaneseq
    %v3296 = vshrl.u32 %v3295, 7
    %v3297 = vsub.s32 %v3294, %v3296
    %v3298 = vrot.slane %v3284, %v3297
    %v3299 = vcombine.low %v3140, %v3142
    %v3300 = vcombine.high %v3140, %v3142
    %v3302 = vunpack.c.l.s4 1983009808
    %v3303 = vunpack.c.0.s8 %v3302
    %v3304 = vlaneseq
    %v3305 = vshrl.u32 %v3304, 7
    %v3306 = vsub.s32 %v3303, %v3305
    %v3307 = vrot.slane %v3299, %v3306
    %v3309 = vunpack.c.l.s4 1983009808
    %v3310 = vunpack.c.0.s8 %v3309
    %v3311 = vlaneseq
    %v3312 = vshrl.u32 %v3311, 7
    %v3313 = vsub.s32 %v3310, %v3312
    %v3314 = vrot.slane %v3300, %v3313
    %v3315 = vcombine.low %v3143, %v3145
    %v3316 = vcombine.high %v3143, %v3145
    %v3318 = vunpack.c.l.s4 1983009808
    %v3319 = vunpack.c.0.s8 %v3318
    %v3320 = vlaneseq
    %v3321 = vshrl.u32 %v3320, 7
    %v3322 = vsub.s32 %v3319, %v3321
    %v3323 = vrot.slane %v3315, %v3322
    %v3325 = vunpack.c.l.s4 1983009808
    %v3326 = vunpack.c.0.s8 %v3325
    %v3327 = vlaneseq
    %v3328 = vshrl.u32 %v3327, 7
    %v3329 = vsub.s32 %v3326, %v3328
    %v3330 = vrot.slane %v3316, %v3329
    %v3331 = vcombine.low %v3144, %v3146
    %v3332 = vcombine.high %v3144, %v3146
    %v3334 = vunpack.c.l.s4 1983009808
    %v3335 = vunpack.c.0.s8 %v3334
    %v3336 = vlaneseq
    %v3337 = vshrl.u32 %v3336, 7
    %v3338 = vsub.s32 %v3335, %v3337
    %v3339 = vrot.slane %v3331, %v3338
    %v3341 = vunpack.c.l.s4 1983009808
    %v3342 = vunpack.c.0.s8 %v3341
    %v3343 = vlaneseq
    %v3344 = vshrl.u32 %v3343, 7
    %v3345 = vsub.s32 %v3342, %v3344
    %v3346 = vrot.slane %v3332, %v3345
    %v3347 = vcombine.low %v3291, %v3307
    %v3348 = vcombine.high %v3291, %v3307
    %v3350 = vunpack.c.l.s4 1934713408
    %v3351 = vunpack.c.0.s8 %v3350
    %v3352 = vlaneseq
    %v3353 = vshrl.u32 %v3352, 7
    %v3354 = vsub.s32 %v3351, %v3353
    %v3355 = vrot.slane %v3347, %v3354
    %v3357 = vunpack.c.l.s4 1934713408
    %v3358 = vunpack.c.0.s8 %v3357
    %v3359 = vlaneseq
    %v3360 = vshrl.u32 %v3359, 7
    %v3361 = vsub.s32 %v3358, %v3360
    %v3362 = vrot.slane %v3348, %v3361
    %v3363 = vcombine.low %v3298, %v3314
    %v3364 = vcombine.high %v3298, %v3314
    %v3366 = vunpack.c.l.s4 1934713408
    %v3367 = vunpack.c.0.s8 %v3366
    %v3368 = vlaneseq
    %v3369 = vshrl.u32 %v3368, 7
    %v3370 = vsub.s32 %v3367, %v3369
    %v3371 = vrot.slane %v3363, %v3370
    %v3373 = vunpack.c.l.s4 1934713408
    %v3374 = vunpack.c.0.s8 %v3373
    %v3375 = vlaneseq
    %v3376 = vshrl.u32 %v3375, 7
    %v3377 = vsub.s32 %v3374, %v3376
    %v3378 = vrot.slane %v3364, %v3377
    %v3379 = vcombine.low %v3323, %v3339
    %v3380 = vcombine.high %v3323, %v3339
    %v3382 = vunpack.c.l.s4 1934713408
    %v3383 = vunpack.c.0.s8 %v3382
    %v3384 = vlaneseq
    %v3385 = vshrl.u32 %v3384, 7
    %v3386 = vsub.s32 %v3383, %v3385
    %v3387 = vrot.slane %v3379, %v3386
    %v3389 = vunpack.c.l.s4 1934713408
    %v3390 = vunpack.c.0.s8 %v3389
    %v3391 = vlaneseq
    %v3392 = vshrl.u32 %v3391, 7
    %v3393 = vsub.s32 %v3390, %v3392
    %v3394 = vrot.slane %v3380, %v3393
    %v3395 = vcombine.low %v3330, %v3346
    %v3396 = vcombine.high %v3330, %v3346
    %v3398 = vunpack.c.l.s4 1934713408
    %v3399 = vunpack.c.0.s8 %v3398
    %v3400 = vlaneseq
    %v3401 = vshrl.u32 %v3400, 7
    %v3402 = vsub.s32 %v3399, %v3401
    %v3403 = vrot.slane %v3395, %v3402
    %v3405 = vunpack.c.l.s4 1934713408
    %v3406 = vunpack.c.0.s8 %v3405
    %v3407 = vlaneseq
    %v3408 = vshrl.u32 %v3407, 7
    %v3409 = vsub.s32 %v3406, %v3408
    %v3410 = vrot.slane %v3396, %v3409
    %v3411 = vcombine.low %v3355, %v3387
    %v3412 = vcombine.high %v3355, %v3387
    %v3413 = vcombine.low %v3362, %v3394
    %v3414 = vcombine.high %v3362, %v3394
    %v3415 = vcombine.low %v3371, %v3403
    %v3416 = vcombine.high %v3371, %v3403
    %v3417 = vcombine.low %v3378, %v3410
    %v3418 = vcombine.high %v3378, %v3410
    %v3419 = vcombine.low %v3275, %v3277
    %v3420 = vcombine.high %v3275, %v3277
    %v3422 = vunpack.c.l.s4 1983009808
    %v3423 = vunpack.c.0.s8 %v3422
    %v3424 = vlaneseq
    %v3425 = vshrl.u32 %v3424, 7
    %v3426 = vsub.s32 %v3423, %v3425
    %v3427 = vrot.slane %v3419, %v3426
    %v3429 = vunpack.c.l.s4 1983009808
    %v3430 = vunpack.c.0.s8 %v3429
    %v3431 = vlaneseq
    %v3432 = vshrl.u32 %v3431, 7
    %v3433 = vsub.s32 %v3430, %v3432
    %v3434 = vrot.slane %v3420, %v3433
    %v3435 = vcombine.low %v3276, %v3278
    %v3436 = vcombine.high %v3276, %v3278
    %v3438 = vunpack.c.l.s4 1983009808
    %v3439 = vunpack.c.0.s8 %v3438
    %v3440 = vlaneseq
    %v3441 = vshrl.u32 %v3440, 7
    %v3442 = vsub.s32 %v3439, %v3441
    %v3443 = vrot.slane %v3435, %v3442
    %v3445 = vunpack.c.l.s4 1983009808
    %v3446 = vunpack.c.0.s8 %v3445
    %v3447 = vlaneseq
    %v3448 = vshrl.u32 %v3447, 7
    %v3449 = vsub.s32 %v3446, %v3448
    %v3450 = vrot.slane %v3436, %v3449
    %v3451 = vcombine.low %v3279, %v3281
    %v3452 = vcombine.high %v3279, %v3281
    %v3454 = vunpack.c.l.s4 1983009808
    %v3455 = vunpack.c.0.s8 %v3454
    %v3456 = vlaneseq
    %v3457 = vshrl.u32 %v3456, 7
    %v3458 = vsub.s32 %v3455, %v3457
    %v3459 = vrot.slane %v3451, %v3458
    %v3461 = vunpack.c.l.s4 1983009808
    %v3462 = vunpack.c.0.s8 %v3461
    %v3463 = vlaneseq
    %v3464 = vshrl.u32 %v3463, 7
    %v3465 = vsub.s32 %v3462, %v3464
    %v3466 = vrot.slane %v3452, %v3465
    %v3467 = vcombine.low %v3280, %v3282
    %v3468 = vcombine.high %v3280, %v3282
    %v3470 = vunpack.c.l.s4 1983009808
    %v3471 = vunpack.c.0.s8 %v3470
    %v3472 = vlaneseq
    %v3473 = vshrl.u32 %v3472, 7
    %v3474 = vsub.s32 %v3471, %v3473
    %v3475 = vrot.slane %v3467, %v3474
    %v3477 = vunpack.c.l.s4 1983009808
    %v3478 = vunpack.c.0.s8 %v3477
    %v3479 = vlaneseq
    %v3480 = vshrl.u32 %v3479, 7
    %v3481 = vsub.s32 %v3478, %v3480
    %v3482 = vrot.slane %v3468, %v3481
    %v3483 = vcombine.low %v3427, %v3443
    %v3484 = vcombine.high %v3427, %v3443
    %v3486 = vunpack.c.l.s4 1934713408
    %v3487 = vunpack.c.0.s8 %v3486
    %v3488 = vlaneseq
    %v3489 = vshrl.u32 %v3488, 7
    %v3490 = vsub.s32 %v3487, %v3489
    %v3491 = vrot.slane %v3483, %v3490
    %v3493 = vunpack.c.l.s4 1934713408
    %v3494 = vunpack.c.0.s8 %v3493
    %v3495 = vlaneseq
    %v3496 = vshrl.u32 %v3495, 7
    %v3497 = vsub.s32 %v3494, %v3496
    %v3498 = vrot.slane %v3484, %v3497
    %v3499 = vcombine.low %v3434, %v3450
    %v3500 = vcombine.high %v3434, %v3450
    %v3502 = vunpack.c.l.s4 1934713408
    %v3503 = vunpack.c.0.s8 %v3502
    %v3504 = vlaneseq
    %v3505 = vshrl.u32 %v3504, 7
    %v3506 = vsub.s32 %v3503, %v3505
    %v3507 = vrot.slane %v3499, %v3506
    %v3509 = vunpack.c.l.s4 1934713408
    %v3510 = vunpack.c.0.s8 %v3509
    %v3511 = vlaneseq
    %v3512 = vshrl.u32 %v3511, 7
    %v3513 = vsub.s32 %v3510, %v3512
    %v3514 = vrot.slane %v3500, %v3513
    %v3515 = vcombine.low %v3459, %v3475
    %v3516 = vcombine.high %v3459, %v3475
    %v3518 = vunpack.c.l.s4 1934713408
    %v3519 = vunpack.c.0.s8 %v3518
    %v3520 = vlaneseq
    %v3521 = vshrl.u32 %v3520, 7
    %v3522 = vsub.s32 %v3519, %v3521
    %v3523 = vrot.slane %v3515, %v3522
    %v3525 = vunpack.c.l.s4 1934713408
    %v3526 = vunpack.c.0.s8 %v3525
    %v3527 = vlaneseq
    %v3528 = vshrl.u32 %v3527, 7
    %v3529 = vsub.s32 %v3526, %v3528
    %v3530 = vrot.slane %v3516, %v3529
    %v3531 = vcombine.low %v3466, %v3482
    %v3532 = vcombine.high %v3466, %v3482
    %v3534 = vunpack.c.l.s4 1934713408
    %v3535 = vunpack.c.0.s8 %v3534
    %v3536 = vlaneseq
    %v3537 = vshrl.u32 %v3536, 7
    %v3538 = vsub.s32 %v3535, %v3537
    %v3539 = vrot.slane %v3531, %v3538
    %v3541 = vunpack.c.l.s4 1934713408
    %v3542 = vunpack.c.0.s8 %v3541
    %v3543 = vlaneseq
    %v3544 = vshrl.u32 %v3543, 7
    %v3545 = vsub.s32 %v3542, %v3544
    %v3546 = vrot.slane %v3532, %v3545
    %v3547 = vcombine.low %v3491, %v3523
    %v3548 = vcombine.high %v3491, %v3523
    %v3549 = vcombine.low %v3498, %v3530
    %v3550 = vcombine.high %v3498, %v3530
    %v3551 = vcombine.low %v3507, %v3539
    %v3552 = vcombine.high %v3507, %v3539
    %v3553 = vcombine.low %v3514, %v3546
    %v3554 = vcombine.high %v3514, %v3546
    %3557 = vrot.lane.b32.xlu0 %v3412, 16
    %v3558 = vpop.permute.xlu0 %3557
    %3559 = vrot.lane.b32.xlu0 %v3548, 16
    %v3560 = vpop.permute.xlu0 %3559
    %3565 = vrot.lane.b32.xlu0 %v3413, 32
    %v3566 = vpop.permute.xlu0 %3565
    %3567 = vrot.lane.b32.xlu0 %v3549, 32
    %v3568 = vpop.permute.xlu0 %3567
    %3573 = vrot.lane.b32.xlu0 %v3414, 48
    %v3574 = vpop.permute.xlu0 %3573
    %3575 = vrot.lane.b32.xlu0 %v3550, 48
    %v3576 = vpop.permute.xlu0 %3575
    %3581 = vrot.lane.b32.xlu0 %v3415, 64
    %v3582 = vpop.permute.xlu0 %3581
    %3583 = vrot.lane.b32.xlu0 %v3551, 64
    %v3584 = vpop.permute.xlu0 %3583
    %3589 = vrot.lane.b32.xlu0 %v3416, 80
    %v3590 = vpop.permute.xlu0 %3589
    %3591 = vrot.lane.b32.xlu0 %v3552, 80
    %v3592 = vpop.permute.xlu0 %3591
    %3597 = vrot.lane.b32.xlu0 %v3417, 96
    %v3598 = vpop.permute.xlu0 %3597
    %3599 = vrot.lane.b32.xlu0 %v3553, 96
    %v3600 = vpop.permute.xlu0 %3599
    %3605 = vrot.lane.b32.xlu0 %v3418, 112
    %v3606 = vpop.permute.xlu0 %3605
    %3607 = vrot.lane.b32.xlu0 %v3554, 112
    %v3608 = vpop.permute.xlu0 %3607
    %v3611 = vsel %vm2149, %v3411, %v3558
    %v3612 = vsel %vm2149, %v3547, %v3560
    %vm3613 = vcmask 261120
    %v3614 = vsel %vm3613, %v3611, %v3566
    %v3615 = vsel %vm3613, %v3612, %v3568
    %vm3616 = vcmask 392192
    %v3617 = vsel %vm3616, %v3614, %v3574
    %v3618 = vsel %vm3616, %v3615, %v3576
    %vm3619 = vcmask 523264
    %v3620 = vsel %vm3619, %v3617, %v3582
    %v3621 = vsel %vm3619, %v3618, %v3584
    %vm3622 = vcmask 654336
    %v3623 = vsel %vm3622, %v3620, %v3590
    %v3624 = vsel %vm3622, %v3621, %v3592
    %vm3625 = vcmask 785408
    %v3626 = vsel %vm3625, %v3623, %v3598
    %v3627 = vsel %vm3625, %v3624, %v3600
    %vm3628 = vcmask 916480
    %v3629 = vsel %vm3628, %v3626, %v3606
    %v3630 = vsel %vm3628, %v3627, %v3608
    %v3631 = vpack.c.bf16 %v3630, %v3629
    %v3632 = vld [vmem:[#allocation7] sm:$0xf]
    %v3633 = vld [vmem:[#allocation7 + $0x4] sm:$0xf]
    %v3634 = vld [vmem:[#allocation7 + $0x8] sm:$0xf]
    %v3635 = vld [vmem:[#allocation7 + $0xc] sm:$0xf]
    %v3636 = vld [vmem:[#allocation7 + $0x10] sm:$0xf]
    %v3637 = vld [vmem:[#allocation7 + $0x14] sm:$0xf]
    %v3638 = vld [vmem:[#allocation7 + $0x18] sm:$0xf]
    %v3639 = vld [vmem:[#allocation7 + $0x1c] sm:$0xf]
    %v3640 = vld [vmem:[#allocation7 + $0x20] sm:$0xf]
    %v3641 = vld [vmem:[#allocation7 + $0x24] sm:$0xf]
    %v3642 = vld [vmem:[#allocation7 + $0x28] sm:$0xf]
    %v3643 = vld [vmem:[#allocation7 + $0x2c] sm:$0xf]
    %v3644 = vld [vmem:[#allocation7 + $0x30] sm:$0xf]
    %v3645 = vld [vmem:[#allocation7 + $0x34] sm:$0xf]
    %v3646 = vld [vmem:[#allocation7 + $0x38] sm:$0xf]
    %v3647 = vld [vmem:[#allocation7 + $0x3c] sm:$0xf]
    %v3664 = vunpack.c.l.b16 %v3632
    %v3665 = vunpack.c.l.b16 %v3633
    %v3666 = vunpack.c.l.b16 %v3634
    %v3667 = vunpack.c.l.b16 %v3635
    %v3668 = vunpack.c.l.b16 %v3636
    %v3669 = vunpack.c.l.b16 %v3637
    %v3670 = vunpack.c.l.b16 %v3638
    %v3671 = vunpack.c.l.b16 %v3639
    %v3672 = vunpack.c.l.b16 %v3640
    %v3673 = vunpack.c.l.b16 %v3641
    %v3674 = vunpack.c.l.b16 %v3642
    %v3675 = vunpack.c.l.b16 %v3643
    %v3676 = vunpack.c.l.b16 %v3644
    %v3677 = vunpack.c.l.b16 %v3645
    %v3678 = vunpack.c.l.b16 %v3646
    %v3679 = vunpack.c.l.b16 %v3647
    %v3680 = vpack.c.b16 %v3665, %v3664
    %v3681 = vpack.c.b16 %v3667, %v3666
    %v3682 = vpack.c.b16 %v3669, %v3668
    %v3683 = vpack.c.b16 %v3671, %v3670
    %v3684 = vpack.c.b16 %v3673, %v3672
    %v3685 = vpack.c.b16 %v3675, %v3674
    %v3686 = vpack.c.b16 %v3677, %v3676
    %v3687 = vpack.c.b16 %v3679, %v3678
    %3696 = vmatprep.subr.bf16.mxu0 0
    %3697 = vmatpush1.bf16.msra.mxu0 %v3680
    %3698 = vmatprep.subr.bf16.mxu0 0
    %3699 = vmatpush1.bf16.msra.mxu0 %v3681
    %3700 = vmatprep.subr.bf16.mxu0 0
    %3701 = vmatpush1.bf16.msra.mxu0 %v3682
    %3702 = vmatprep.subr.bf16.mxu0 0
    %3703 = vmatpush1.bf16.msra.mxu0 %v3683
    %3704 = vmatprep.subr.bf16.mxu0 0
    %3705 = vmatpush1.bf16.msra.mxu0 %v3684
    %3706 = vmatprep.subr.bf16.mxu0 0
    %3707 = vmatpush1.bf16.msra.mxu0 %v3685
    %3708 = vmatprep.subr.bf16.mxu0 0
    %3709 = vmatpush1.bf16.msra.mxu0 %v3686
    %3710 = vmatprep.subr.bf16.mxu0 0
    %3711 = vmatpush1.bf16.msra.mxu0 %v3687
    %3712 = vmatprep.subr.bf16.mxu0 0
    %3713 = vmatpush1.bf16.msra.mxu0 0
    %3714 = vmatprep.subr.bf16.mxu0 0
    %3715 = vmatpush1.bf16.msra.mxu0 0
    %3716 = vmatprep.subr.bf16.mxu0 0
    %3717 = vmatpush1.bf16.msra.mxu0 0
    %3718 = vmatprep.subr.bf16.mxu0 0
    %3719 = vmatpush1.bf16.msra.mxu0 0
    %3720 = vmatprep.subr.bf16.mxu0 0
    %3721 = vmatpush1.bf16.msra.mxu0 0
    %3722 = vmatprep.subr.bf16.mxu0 0
    %3723 = vmatpush1.bf16.msra.mxu0 0
    %3724 = vmatprep.subr.bf16.mxu0 0
    %3725 = vmatpush1.bf16.msra.mxu0 0
    %3726 = vmatprep.subr.bf16.mxu0 0
    %3727 = vmatpush1.bf16.msra.mxu0 0
    %3728 = vmatprep.mubr.bf16.mxu0 0
    %3729 = vmatmul.mubr.bf16.gmra.mrb[0].mxu0 %v3631
    %v3730 = vpop.f32.mrb[0].mxu0
    %v3731 = vadd.f32 0.0, %v3730
    %v3732 = vpop.f32.mrb[0].mxu0
    %v3733 = vpop.f32.mrb[0].mxu0
    %v3734 = vadd.f32 0.0, %v3733
    %v3735 = vpop.f32.mrb[0].mxu0
    %3736 = vdwg.mxu0
    %3737 = vst [vmem:[#allocation11] sm:$0xff] %v3731
    %3738 = vst [vmem:[#allocation11 + $0x8] sm:$0xff] %v3734
    // Predicated region
    $region42: #{tpu_custom_call.1} parent=1 // pred_check
      _
    $region43: #{tpu_custom_call.1} parent=1 // pred_check_branch
      %3740 = sbr.rel (0) target = $region45
    $region44: #{tpu_custom_call.1} parent=1 // pred_region
      %s3742 = ssub.s32 256, 256
      %3743 = vsyncadd [#allocation4], %s3742
      %s3744 = sshll.u32 [#allocation11], 4
      %s3745 = int_to_ptr.vmem [resolvable:$true] %s3744
      %3750 = dma.vmem_to_hbm [thread:$0]  %s3745, 256, %s5, [#allocation4], 128, 128, 8
    $region45: #{tpu_custom_call.1} parent=1 // pred_fallthru
      _
    // Predicated region
    $region46: #{tpu_custom_call.1} parent=1 // pred_check
      _
    $region47: #{tpu_custom_call.1} parent=1 // pred_check_branch
      %3752 = sbr.rel (0) target = $region49
    $region48: #{tpu_custom_call.1} parent=1 // pred_region
      %3753 = dma.done [#allocation4], 256
    $region49: #{tpu_custom_call.1} parent=1 // pred_fallthru
      _
    %3754 = vsyncpa [#allocation3], 1
    %3755 = vsyncpa [#allocation6], 1
    %3756 = vsyncpa [#allocation9], 1
    %3757 = vsyncpa [#allocation4], 1

</llo_original>
